<compile_context>
chip_gen: v6e
topology: v6e:2x2x1
jax: 0.10.0
libtpu: 0.0.40
codegen_flags: <defaults>
</compile_context>

<pallas_src>
import jax
import jax.numpy as jnp
from jax import lax
import numpy as np
from jax.experimental import pallas as pl
from jax.experimental.pallas import tpu as pltpu


def _round_up(x, m):
  return ((x + m - 1) // m) * m


# --------------------------- kernel A: msg_fnc MLP ---------------------------
def _edge_mlp_kernel(edge_in_ref, w1, b1, w2, b2, w3, b3, w4, b4, msgs_ref):
  relu = lambda t: jnp.maximum(t, 0.0)
  f32, bf16 = jnp.float32, jnp.bfloat16
  x = edge_in_ref[...].astype(bf16)
  h = relu(jnp.dot(x, w1[...], preferred_element_type=f32) + b1[...])
  h = relu(jnp.dot(h.astype(bf16), w2[...], preferred_element_type=f32) + b2[...])
  h = relu(jnp.dot(h.astype(bf16), w3[...], preferred_element_type=f32) + b3[...])
  m = jnp.dot(h.astype(bf16), w4[...], preferred_element_type=f32) + b4[...]
  msgs_ref[...] = m.astype(msgs_ref.dtype)


# ------------------ kernel B: CSR blocked scatter + node_fnc -----------------
def _scatter_node_kernel(et_start_ref, et_count_ref, dst_ref, msgs_ref,
                         v1, c1, v2, c2, v3, c3, v4, c4, nodes_ref, acc_ref):
  i = pl.program_id(0)          # node-tile index
  j = pl.program_id(1)          # local (data-dependent) edge-tile step
  tile_n = nodes_ref.shape[0]
  tile_e = msgs_ref.shape[0]

  @pl.when(j == 0)
  def _():
    acc_ref[...] = jnp.zeros_like(acc_ref)

  # Only edge tiles that actually contain edges for this node tile do work;
  # skipped steps re-use a clamped (already resident) block and are ignored.
  @pl.when(j < et_count_ref[i])
  def _():
    node_ids = i * tile_n + lax.broadcasted_iota(jnp.int32, (tile_n, tile_e), 0)
    onehot = (node_ids == dst_ref[...]).astype(jnp.bfloat16)
    acc_ref[...] += jnp.dot(onehot, msgs_ref[...],
                            preferred_element_type=jnp.float32)

  @pl.when(j == pl.num_programs(1) - 1)
  def _():
    relu = lambda t: jnp.maximum(t, 0.0)
    f32, bf16 = jnp.float32, jnp.bfloat16
    a = acc_ref[...].astype(bf16)
    g = relu(jnp.dot(a, v1[...], preferred_element_type=f32) + c1[...])
    g = relu(jnp.dot(g.astype(bf16), v2[...], preferred_element_type=f32) + c2[...])
    g = relu(jnp.dot(g.astype(bf16), v3[...], preferred_element_type=f32) + c3[...])
    n = jnp.dot(g.astype(bf16), v4[...], preferred_element_type=f32) + c4[...]
    # Fold per-graph node counts into kernel C's pooling matmul: the last
    # (zero-padded, unused-by-wl) feature column carries a constant 1.0.
    col = lax.broadcasted_iota(jnp.int32, n.shape, 1)
    n = jnp.where(col == n.shape[1] - 1, 1.0, n)
    nodes_ref[...] = n.astype(nodes_ref.dtype)


# --------------- kernel C: global_mean_pool + dropout + Linear ---------------
def _pool_head_kernel(batch_ref, nodes_ref, wl, bl, out_ref, pooled_ref):
  i = pl.program_id(0)
  g_pad = pooled_ref.shape[0]
  tile_n = nodes_ref.shape[0]

  @pl.when(i == 0)
  def _():
    pooled_ref[...] = jnp.zeros_like(pooled_ref)

  # Blocked pool mask: [G_pad, tile_n]; padded nodes carry batch id -1 -> no match.
  graph_ids = lax.broadcasted_iota(jnp.int32, (g_pad, tile_n), 0)
  mask = (graph_ids == batch_ref[...]).astype(jnp.bfloat16)
  pooled_ref[...] += jnp.dot(mask, nodes_ref[...],
                             preferred_element_type=jnp.float32)

  @pl.when(i == pl.num_programs(0) - 1)
  def _():
    pooled = pooled_ref[...]
    counts = pooled[:, pooled.shape[1] - 1:]       # accumulated ones-column
    denom = jnp.maximum(counts, 1.0)               # guard empty / padded graphs
    mean = pooled * pl.reciprocal(denom, approx=True)
    # TODO(synk): training-mode dropout (pltpu.prng_random_bits mask) not
    # emitted; eval semantics (identity) are implemented here.
    out_ref[...] = jnp.dot(mean, wl[...],
                           preferred_element_type=jnp.float32) + bl[...]


# ------------------------------ wrapper -------------------------------------
def gnpool2_forward(x, edge_index, edge_attr, batch, params, num_graphs,
                    *, tile_e=None, tile_n=256, pool_tile_n=1024,
                    max_edge_tiles_per_node_tile=None):
  """Pallas implementation of GNpool2.forward (eval mode)."""
  N, n_nf = x.shape
  E = edge_index.shape[1]
  n_ef = edge_attr.shape[1]
  din = 2 * n_nf + n_ef
  hidden = params["w1"].shape[1]
  msg_dim = params["w4"].shape[1]
  n_hidden = params["v4"].shape[1]
  n_predict = params["wl"].shape[1]

  # Lane-aligned (multiple-of-128) feature dims.  NHP reserves >= 1 padded
  # column that carries the folded per-graph counts (zero rows of wl keep it
  # out of the final output).
  HP = _round_up(hidden, 128)
  MSGP = _round_up(msg_dim, 128)
  NHP = _round_up(n_hidden + 1, 128)
  NPP = _round_up(n_predict, 128)

  if tile_e is None:
    tile_e = min(1024, _round_up(max(E, 1), 256))
  E_pad = _round_up(max(E, 1), tile_e)
  pool_tile = min(pool_tile_n, _round_up(max(N, 1), tile_n))
  N_pad = _round_up(max(N, 1), pool_tile)        # multiple of tile_n and pool_tile
  G_pad = _round_up(max(num_graphs, 1), 8)

  num_edge_tiles = E_pad // tile_e
  num_node_tiles = N_pad // tile_n
  num_pool_tiles = N_pad // pool_tile

  # ---- CSR: sort edges by destination; gather + concat (XLA side) -----------
  # TODO(synk): fuse the x[dst]/x[src] row gather into kernel A via scalar
  # prefetch + pl.Element row-gather BlockSpecs; kept in XLA for simplicity.
  src = edge_index[0].astype(jnp.int32)
  dst = edge_index[1].astype(jnp.int32)
  order = jnp.argsort(dst)
  dst_s = dst[order]
  src_s = src[order]
  ea_s = edge_attr[order]
  # PyG flow='source_to_target': x_i = target features, x_j = source features.
  edge_in = jnp.concatenate([x[dst_s], x[src_s], ea_s], axis=1).astype(jnp.bfloat16)
  edge_in = jnp.pad(edge_in, ((0, E_pad - E), (0, 0)))
  dst_sorted = jnp.pad(dst_s, (0, E_pad - E), constant_values=N_pad)  # sentinel
  dst_pad = dst_sorted.reshape(1, E_pad)
  batch_pad = jnp.pad(batch.astype(jnp.int32), (0, N_pad - N),
                      constant_values=-1).reshape(1, N_pad)

  # Per-node-tile edge-tile windows (scalar-prefetch tables for kernel B).
  lo = jnp.arange(num_node_tiles, dtype=jnp.int32) * tile_n
  seg_start = jnp.searchsorted(dst_sorted, lo, side="left")
  seg_end = jnp.searchsorted(dst_sorted, lo + tile_n, side="left")
  et_start = (seg_start // tile_e).astype(jnp.int32)
  et_end = jnp.where(seg_end > seg_start, (seg_end - 1) // tile_e + 1, et_start)
  et_count = (et_end - et_start).astype(jnp.int32)
  if max_edge_tiles_per_node_tile is None:
    # NOTE: host sync on a scalar; pass explicitly to keep the wrapper traceable.
    max_edge_tiles_per_node_tile = int(jnp.max(jnp.maximum(et_count, 1)))
  max_span = max(int(max_edge_tiles_per_node_tile), 1)

  # ---- zero-pad params (exact under ReLU + zero bias), cast MXU inputs bf16 --
  bf16 = jnp.bfloat16

  def pad_w(w, r, c):
    return jnp.pad(w, ((0, r - w.shape[0]), (0, c - w.shape[1])))

  def pad_b(b, c):
    return jnp.pad(b, ((0, 0), (0, c - b.shape[1])))

  w1 = pad_w(params["w1"], din, HP).astype(bf16);   b1 = pad_b(params["b1"], HP)
  w2 = pad_w(params["w2"], HP, HP).astype(bf16);    b2 = pad_b(params["b2"], HP)
  w3 = pad_w(params["w3"], HP, HP).astype(bf16);    b3 = pad_b(params["b3"], HP)
  w4 = pad_w(params["w4"], HP, MSGP).astype(bf16);  b4 = pad_b(params["b4"], MSGP)
  v1 = pad_w(params["v1"], MSGP, HP).astype(bf16);  c1 = pad_b(params["c1"], HP)
  v2 = pad_w(params["v2"], HP, HP).astype(bf16);    c2 = pad_b(params["c2"], HP)
  v3 = pad_w(params["v3"], HP, HP).astype(bf16);    c3 = pad_b(params["c3"], HP)
  v4 = pad_w(params["v4"], HP, NHP).astype(bf16);   c4 = pad_b(params["c4"], NHP)
  wl = pad_w(params["wl"], NHP, NPP).astype(jnp.float32)
  bl = pad_b(params["bl"], NPP)

  # ---- A) msg_fnc MLP over (dst-sorted) edge tiles ----------------------------
  msgs = pl.pallas_call(
      _edge_mlp_kernel,
      out_shape=jax.ShapeDtypeStruct((E_pad, MSGP), jnp.bfloat16),
      grid_spec=pltpu.PrefetchScalarGridSpec(
          num_scalar_prefetch=0,
          grid=(num_edge_tiles,),
          in_specs=[
              pl.BlockSpec((tile_e, din), lambda i: (i, 0)),
              pl.BlockSpec((din, HP), lambda i: (0, 0)),
              pl.BlockSpec((1, HP), lambda i: (0, 0)),
              pl.BlockSpec((HP, HP), lambda i: (0, 0)),
              pl.BlockSpec((1, HP), lambda i: (0, 0)),
              pl.BlockSpec((HP, HP), lambda i: (0, 0)),
              pl.BlockSpec((1, HP), lambda i: (0, 0)),
              pl.BlockSpec((HP, MSGP), lambda i: (0, 0)),
              pl.BlockSpec((1, MSGP), lambda i: (0, 0)),
          ],
          out_specs=pl.BlockSpec((tile_e, MSGP), lambda i: (i, 0)),
      ),
      compiler_params=pltpu.CompilerParams(
          dimension_semantics=("parallel",),
          vmem_limit_bytes=32 * 1024 * 1024),
  )(edge_in, w1, b1, w2, b2, w3, b3, w4, b4)

  # ---- B) CSR blocked scatter-add + node_fnc MLP ------------------------------
  last_et = num_edge_tiles - 1

  def _dst_map(i, j, s, c):
    return (0, jnp.minimum(s[i] + j, last_et))

  def _msgs_map(i, j, s, c):
    return (jnp.minimum(s[i] + j, last_et), 0)

  const = lambda i, j, s, c: (0, 0)

  nodes = pl.pallas_call(
      _scatter_node_kernel,
      out_shape=jax.ShapeDtypeStruct((N_pad, NHP), jnp.bfloat16),
      grid_spec=pltpu.PrefetchScalarGridSpec(
          num_scalar_prefetch=2,
          grid=(num_node_tiles, max_span),
          in_specs=[
              pl.BlockSpec((1, tile_e), _dst_map),       # sorted dst ids
              pl.BlockSpec((tile_e, MSGP), _msgs_map),   # msgs tile
              pl.BlockSpec((MSGP, HP), const),
              pl.BlockSpec((1, HP), const),
              pl.BlockSpec((HP, HP), const),
              pl.BlockSpec((1, HP), const),
              pl.BlockSpec((HP, HP), const),
              pl.BlockSpec((1, HP), const),
              pl.BlockSpec((HP, NHP), const),
              pl.BlockSpec((1, NHP), const),
          ],
          out_specs=pl.BlockSpec((tile_n, NHP), lambda i, j, s, c: (i, 0)),
          scratch_shapes=[pltpu.VMEM((tile_n, MSGP), jnp.float32)],
      ),
      compiler_params=pltpu.CompilerParams(
          dimension_semantics=("parallel", "arbitrary"),
          vmem_limit_bytes=32 * 1024 * 1024),
  )(et_start, et_count, dst_pad, msgs, v1, c1, v2, c2, v3, c3, v4, c4)

  # ---- C) global_mean_pool + final Linear -------------------------------------
  # Single "arbitrary" axis (one TC on v7x); with the large node tile this pass
  # is tiny, so the idle second core is acceptable.
  out_padded = pl.pallas_call(
      _pool_head_kernel,
      out_shape=jax.ShapeDtypeStruct((G_pad, NPP), jnp.float32),
      grid_spec=pltpu.PrefetchScalarGridSpec(
          num_scalar_prefetch=0,
          grid=(num_pool_tiles,),
          in_specs=[
              pl.BlockSpec((1, pool_tile), lambda i: (0, i)),      # batch ids
              pl.BlockSpec((pool_tile, NHP), lambda i: (i, 0)),    # nodes tile
              pl.BlockSpec((NHP, NPP), lambda i: (0, 0)),
              pl.BlockSpec((1, NPP), lambda i: (0, 0)),
          ],
          out_specs=pl.BlockSpec((G_pad, NPP), lambda i: (0, 0)),
          scratch_shapes=[pltpu.VMEM((G_pad, NHP), jnp.float32)],
      ),
      compiler_params=pltpu.CompilerParams(
          dimension_semantics=("arbitrary",)),
  )(batch_pad, nodes, wl, bl)

  return out_padded[:num_graphs, :n_predict]


# --------------------------- pure-JAX reference ------------------------------
def gnpool2_reference(x, edge_index, edge_attr, batch, params, num_graphs):
  relu = lambda t: jnp.maximum(t, 0.0)
  src, dst = edge_index[0], edge_index[1]
  edge_in = jnp.concatenate([x[dst], x[src], edge_attr], axis=1)

  h = relu(edge_in @ params["w1"] + params["b1"])
  h = relu(h @ params["w2"] + params["b2"])
  h = relu(h @ params["w3"] + params["b3"])
  msgs = h @ params["w4"] + params["b4"]

  aggr = jnp.zeros((x.shape[0], msgs.shape[1]), jnp.float32).at[dst].add(msgs)

  g = relu(aggr @ params["v1"] + params["c1"])
  g = relu(g @ params["v2"] + params["c2"])
  g = relu(g @ params["v3"] + params["c3"])
  nodes = g @ params["v4"] + params["c4"]

  counts = jnp.zeros((num_graphs,), jnp.float32).at[batch].add(1.0)
  counts = jnp.maximum(counts, 1.0)
  pooled = jnp.zeros((num_graphs, nodes.shape[1]), jnp.float32).at[batch].add(nodes)
  pooled = pooled / counts[:, None]
  return pooled @ params["wl"] + params["bl"]


# ------------------------- deterministic parameters --------------------------
def init_params(key, n_nf, n_ef, msg_dim, n_hidden, n_predict, hidden=300):
  dims_msg = [(2 * n_nf + n_ef, hidden), (hidden, hidden), (hidden, hidden),
              (hidden, msg_dim)]
  dims_node = [(msg_dim, hidden), (hidden, hidden), (hidden, hidden),
               (hidden, n_hidden)]
  params = {}
  keys = jax.random.split(key, 18)
  k = 0

  def lin(fan_in, fan_out, kw, kb):
    bound = 1.0 / np.sqrt(fan_in)
    w = jax.random.uniform(kw, (fan_in, fan_out), jnp.float32, -bound, bound)
    b = jax.random.uniform(kb, (1, fan_out), jnp.float32, -bound, bound)
    return w, b

  for i, (fi, fo) in enumerate(dims_msg, start=1):
    params[f"w{i}"], params[f"b{i}"] = lin(fi, fo, keys[k], keys[k + 1]); k += 2
  for i, (fi, fo) in enumerate(dims_node, start=1):
    params[f"v{i}"], params[f"c{i}"] = lin(fi, fo, keys[k], keys[k + 1]); k += 2
  params["wl"], params["bl"] = lin(n_hidden, n_predict, keys[k], keys[k + 1])
  return params


# ---------------------------------- main -------------------------------------
if __name__ == "__main__":
  # Small synthetic graph problem (module default hidden=300 exercises padding).
  n_nf, n_ef = 4, 3          # node / edge feature dims
  msg_dim = 8
  n_hidden = 16
  n_predict = 3
  N, E, G = 8, 16, 2         # nodes, edges, graphs

  key = jax.random.PRNGKey(0)
  kx, ke, kei, kp = jax.random.split(key, 4)

  x = jax.random.normal(kx, (N, n_nf), jnp.float32)
  edge_attr = jax.random.normal(ke, (E, n_ef), jnp.float32)
  edge_index = jax.random.randint(kei, (2, E), 0, N, jnp.int32)
  batch = jnp.array([0, 0, 0, 0, 1, 1, 1, 1], jnp.int32)   # node -> graph id

  params = init_params(kp, n_nf, n_ef, msg_dim, n_hidden, n_predict, hidden=300)

  out = gnpool2_forward(x, edge_index, edge_attr, batch, params, G)
  out = jax.block_until_ready(out)

  ref = gnpool2_reference(x, edge_index, edge_attr, batch, params, G)
  # Loose tolerance: kernel runs MXU matmuls with bf16 inputs (f32 accumulate)
  # and stores msgs/nodes as bf16; the reference is pure f32.
  np.testing.assert_allclose(np.asarray(out), np.asarray(ref),
                             rtol=5e-2, atol=5e-2)

  print("KERNEL_OK")
</pallas_src>

<mosaic_0001>
module attributes {stable_mosaic.version = 11 : i64} {
  func.func @_edge_mlp_kernel(%arg0: i32, %arg1: memref<256x11xbf16, #tpu.memory_space<vmem>>, %arg2: memref<11x384xbf16, #tpu.memory_space<vmem>>, %arg3: memref<1x384xf32, #tpu.memory_space<vmem>>, %arg4: memref<384x384xbf16, #tpu.memory_space<vmem>>, %arg5: memref<1x384xf32, #tpu.memory_space<vmem>>, %arg6: memref<384x384xbf16, #tpu.memory_space<vmem>>, %arg7: memref<1x384xf32, #tpu.memory_space<vmem>>, %arg8: memref<384x128xbf16, #tpu.memory_space<vmem>>, %arg9: memref<1x128xf32, #tpu.memory_space<vmem>>, %arg10: memref<256x128xbf16, #tpu.memory_space<vmem>>) attributes {dimension_semantics = [#tpu.dimension_semantics<parallel>], iteration_bounds = array<i64: 1>, scalar_prefetch = 0 : i64, scratch_operands = 0 : i64, tpu.core_type = #tpu.core_type<tc>, window_params = [{transform_indices = @transform_0, window_bounds = array<i64: 256, 11>}, {pipeline_mode = #tpu.pipeline_mode<synchronous>, transform_indices = @transform_1, window_bounds = array<i64: 11, 384>}, {pipeline_mode = #tpu.pipeline_mode<synchronous>, transform_indices = @transform_2, window_bounds = array<i64: 1, 384>}, {pipeline_mode = #tpu.pipeline_mode<synchronous>, transform_indices = @transform_3, window_bounds = array<i64: 384, 384>}, {pipeline_mode = #tpu.pipeline_mode<synchronous>, transform_indices = @transform_4, window_bounds = array<i64: 1, 384>}, {pipeline_mode = #tpu.pipeline_mode<synchronous>, transform_indices = @transform_5, window_bounds = array<i64: 384, 384>}, {pipeline_mode = #tpu.pipeline_mode<synchronous>, transform_indices = @transform_6, window_bounds = array<i64: 1, 384>}, {pipeline_mode = #tpu.pipeline_mode<synchronous>, transform_indices = @transform_7, window_bounds = array<i64: 384, 128>}, {pipeline_mode = #tpu.pipeline_mode<synchronous>, transform_indices = @transform_8, window_bounds = array<i64: 1, 128>}, {transform_indices = @transform_9, window_bounds = array<i64: 256, 128>}]} {
    %c0 = arith.constant 0 : index
    %c0_0 = arith.constant 0 : index
    %0 = vector.load %arg1[%c0, %c0_0] : memref<256x11xbf16, #tpu.memory_space<vmem>>, vector<256x11xbf16>
    %c0_1 = arith.constant 0 : index
    %c0_2 = arith.constant 0 : index
    %1 = vector.load %arg2[%c0_1, %c0_2] : memref<11x384xbf16, #tpu.memory_space<vmem>>, vector<11x384xbf16>
    %cst = arith.constant dense<0.000000e+00> : vector<256x384xf32>
    %2 = tpu.matmul %0, %1, %cst {dimension_numbers = #tpu.dot_dimension_numbers<[1], [0], [0], [1], [0, 0, 1, 1], [], []>} : vector<256x11xbf16>, vector<11x384xbf16>, vector<256x384xf32> -> vector<256x384xf32>
    %c0_3 = arith.constant 0 : index
    %c0_4 = arith.constant 0 : index
    %3 = vector.load %arg3[%c0_3, %c0_4] : memref<1x384xf32, #tpu.memory_space<vmem>>, vector<1x384xf32>
    %4 = vector.broadcast %3 : vector<1x384xf32> to vector<256x384xf32>
    %5 = arith.addf %2, %4 : vector<256x384xf32>
    %cst_5 = arith.constant 0.000000e+00 : f32
    %6 = vector.broadcast %cst_5 : f32 to vector<256x384xf32>
    %7 = arith.maximumf %5, %6 : vector<256x384xf32>
    %8 = arith.truncf %7 : vector<256x384xf32> to vector<256x384xbf16>
    %c0_6 = arith.constant 0 : index
    %c0_7 = arith.constant 0 : index
    %9 = vector.load %arg4[%c0_6, %c0_7] : memref<384x384xbf16, #tpu.memory_space<vmem>>, vector<384x384xbf16>
    %cst_8 = arith.constant dense<0.000000e+00> : vector<256x384xf32>
    %10 = tpu.matmul %8, %9, %cst_8 {dimension_numbers = #tpu.dot_dimension_numbers<[1], [0], [0], [1], [0, 0, 1, 1], [], []>} : vector<256x384xbf16>, vector<384x384xbf16>, vector<256x384xf32> -> vector<256x384xf32>
    %c0_9 = arith.constant 0 : index
    %c0_10 = arith.constant 0 : index
    %11 = vector.load %arg5[%c0_9, %c0_10] : memref<1x384xf32, #tpu.memory_space<vmem>>, vector<1x384xf32>
    %12 = vector.broadcast %11 : vector<1x384xf32> to vector<256x384xf32>
    %13 = arith.addf %10, %12 : vector<256x384xf32>
    %cst_11 = arith.constant 0.000000e+00 : f32
    %14 = vector.broadcast %cst_11 : f32 to vector<256x384xf32>
    %15 = arith.maximumf %13, %14 : vector<256x384xf32>
    %16 = arith.truncf %15 : vector<256x384xf32> to vector<256x384xbf16>
    %c0_12 = arith.constant 0 : index
    %c0_13 = arith.constant 0 : index
    %17 = vector.load %arg6[%c0_12, %c0_13] : memref<384x384xbf16, #tpu.memory_space<vmem>>, vector<384x384xbf16>
    %cst_14 = arith.constant dense<0.000000e+00> : vector<256x384xf32>
    %18 = tpu.matmul %16, %17, %cst_14 {dimension_numbers = #tpu.dot_dimension_numbers<[1], [0], [0], [1], [0, 0, 1, 1], [], []>} : vector<256x384xbf16>, vector<384x384xbf16>, vector<256x384xf32> -> vector<256x384xf32>
    %c0_15 = arith.constant 0 : index
    %c0_16 = arith.constant 0 : index
    %19 = vector.load %arg7[%c0_15, %c0_16] : memref<1x384xf32, #tpu.memory_space<vmem>>, vector<1x384xf32>
    %20 = vector.broadcast %19 : vector<1x384xf32> to vector<256x384xf32>
    %21 = arith.addf %18, %20 : vector<256x384xf32>
    %cst_17 = arith.constant 0.000000e+00 : f32
    %22 = vector.broadcast %cst_17 : f32 to vector<256x384xf32>
    %23 = arith.maximumf %21, %22 : vector<256x384xf32>
    %24 = arith.truncf %23 : vector<256x384xf32> to vector<256x384xbf16>
    %c0_18 = arith.constant 0 : index
    %c0_19 = arith.constant 0 : index
    %25 = vector.load %arg8[%c0_18, %c0_19] : memref<384x128xbf16, #tpu.memory_space<vmem>>, vector<384x128xbf16>
    %cst_20 = arith.constant dense<0.000000e+00> : vector<256x128xf32>
    %26 = tpu.matmul %24, %25, %cst_20 {dimension_numbers = #tpu.dot_dimension_numbers<[1], [0], [0], [1], [0, 0, 1, 1], [], []>} : vector<256x384xbf16>, vector<384x128xbf16>, vector<256x128xf32> -> vector<256x128xf32>
    %c0_21 = arith.constant 0 : index
    %c0_22 = arith.constant 0 : index
    %27 = vector.load %arg9[%c0_21, %c0_22] : memref<1x128xf32, #tpu.memory_space<vmem>>, vector<1x128xf32>
    %28 = vector.broadcast %27 : vector<1x128xf32> to vector<256x128xf32>
    %29 = arith.addf %26, %28 : vector<256x128xf32>
    %30 = arith.truncf %29 : vector<256x128xf32> to vector<256x128xbf16>
    %c0_23 = arith.constant 0 : index
    %c0_24 = arith.constant 0 : index
    %31 = vector.load %arg10[%c0_23, %c0_24] : memref<256x128xbf16, #tpu.memory_space<vmem>>, vector<256x128xbf16>
    tpu.vector_store %arg10[%c0_23, %c0_24], %30 {strides = array<i32>} : memref<256x128xbf16, #tpu.memory_space<vmem>>, vector<256x128xbf16>,
    return
  }
  func.func @transform_0(%arg0: i32) -> (i32, i32) {
    %c0_i32 = arith.constant 0 : i32
    %c0_i32_0 = arith.constant 0 : i32
    return %arg0, %c0_i32 : i32, i32
  }
  func.func @transform_1(%arg0: i32) -> (i32, i32) {
    %c0_i32 = arith.constant 0 : i32
    %c0_i32_0 = arith.constant 0 : i32
    %c0_i32_1 = arith.constant 0 : i32
    return %c0_i32, %c0_i32_0 : i32, i32
  }
  func.func @transform_2(%arg0: i32) -> (i32, i32) {
    %c0_i32 = arith.constant 0 : i32
    %c0_i32_0 = arith.constant 0 : i32
    %c0_i32_1 = arith.constant 0 : i32
    return %c0_i32, %c0_i32_0 : i32, i32
  }
  func.func @transform_3(%arg0: i32) -> (i32, i32) {
    %c0_i32 = arith.constant 0 : i32
    %c0_i32_0 = arith.constant 0 : i32
    %c0_i32_1 = arith.constant 0 : i32
    return %c0_i32, %c0_i32_0 : i32, i32
  }
  func.func @transform_4(%arg0: i32) -> (i32, i32) {
    %c0_i32 = arith.constant 0 : i32
    %c0_i32_0 = arith.constant 0 : i32
    %c0_i32_1 = arith.constant 0 : i32
    return %c0_i32, %c0_i32_0 : i32, i32
  }
  func.func @transform_5(%arg0: i32) -> (i32, i32) {
    %c0_i32 = arith.constant 0 : i32
    %c0_i32_0 = arith.constant 0 : i32
    %c0_i32_1 = arith.constant 0 : i32
    return %c0_i32, %c0_i32_0 : i32, i32
  }
  func.func @transform_6(%arg0: i32) -> (i32, i32) {
    %c0_i32 = arith.constant 0 : i32
    %c0_i32_0 = arith.constant 0 : i32
    %c0_i32_1 = arith.constant 0 : i32
    return %c0_i32, %c0_i32_0 : i32, i32
  }
  func.func @transform_7(%arg0: i32) -> (i32, i32) {
    %c0_i32 = arith.constant 0 : i32
    %c0_i32_0 = arith.constant 0 : i32
    %c0_i32_1 = arith.constant 0 : i32
    return %c0_i32, %c0_i32_0 : i32, i32
  }
  func.func @transform_8(%arg0: i32) -> (i32, i32) {
    %c0_i32 = arith.constant 0 : i32
    %c0_i32_0 = arith.constant 0 : i32
    %c0_i32_1 = arith.constant 0 : i32
    return %c0_i32, %c0_i32_0 : i32, i32
  }
  func.func @transform_9(%arg0: i32) -> (i32, i32) {
    %c0_i32 = arith.constant 0 : i32
    %c0_i32_0 = arith.constant 0 : i32
    return %arg0, %c0_i32 : i32, i32
  }
}

</mosaic_0001>

<llo_original>
// kernel: tpu_custom_call.1
$region0: #{tpu_custom_call.1}
  #allocation0 [shape = 'u32[]', space=smem, size = 0x4, offset = 0x4, fixed_abs, tag = 'smem constant byte address 0x4 - core index']
  #allocation1 [shape = 'u32[144,128]{1,0:T(1,128)}', space=vmem, size = 0x12000, scoped, tag = 'internal scratch']
  %s0 = inlined_call_operand.vmem [shape: bf16[256,11], index: 0, kind: input, shape index: {}]
  %s1 = inlined_call_operand.vmem [shape: bf16[11,384], index: 1, kind: input, shape index: {}]
  %s2 = inlined_call_operand.vmem [shape: f32[1,384], index: 2, kind: input, shape index: {}]
  %s3 = inlined_call_operand.hbm [shape: bf16[384,384], index: 3, kind: input, shape index: {}]
  %s4 = inlined_call_operand.vmem [shape: f32[1,384], index: 4, kind: input, shape index: {}]
  %s5 = inlined_call_operand.hbm [shape: bf16[384,384], index: 5, kind: input, shape index: {}]
  %s6 = inlined_call_operand.vmem [shape: f32[1,384], index: 6, kind: input, shape index: {}]
  %s7 = inlined_call_operand.hbm [shape: bf16[384,128], index: 7, kind: input, shape index: {}]
  %s8 = inlined_call_operand.vmem [shape: f32[1,128], index: 8, kind: input, shape index: {}]
  %s9 = inlined_call_operand.hbm [shape: bf16[256,128], index: 9, kind: output, shape index: {}]
  %s10 = sld [smem:[#allocation0]]
  $region58: #{tpu_custom_call.1} parent=0
    _
  %s12 = ssub.s32 1, %s10
  %s13 = scalar_select 0, %s12, %s10
  $region1: #{tpu_custom_call.1} parent=0
    #allocation2 [shape = 'u8[294912]{0}', space=vmem, size = 0x48000, scoped, tag = 'input window, operand 3, single buffered']
    #allocation3 [shape = 's32[1]{0}', space=sflag, size = 0x4, scoped, tag = 'scoped memory for tpu_custom_call.1']
    #allocation4 [shape = 's32[1]{0}', space=sflag, size = 0x4, scoped, tag = 'scoped memory for tpu_custom_call.1']
    #allocation5 [shape = 'u8[294912]{0}', space=vmem, size = 0x48000, scoped, tag = 'input window, operand 5, single buffered']
    #allocation6 [shape = 's32[1]{0}', space=sflag, size = 0x4, scoped, tag = 'scoped memory for tpu_custom_call.1']
    #allocation7 [shape = 'u8[98304]{0}', space=vmem, size = 0x18000, scoped, tag = 'input window, operand 7, single buffered']
    #allocation8 [shape = 'u8[65536]{0}', space=vmem, size = 0x10000, scoped, tag = 'output window, operand 0, single buffered']
    %14 = vsyncpa [#allocation3], 0
    %15 = vsyncpa [#allocation6], 0
    %16 = vsyncpa [#allocation4], 0
    // Predicated region
    $region2: #{tpu_custom_call.1} parent=1 // pred_check
      _
    $region3: #{tpu_custom_call.1} parent=1 // pred_check_branch
      %18 = sbr.rel (0) target = $region5
    $region4: #{tpu_custom_call.1} parent=1 // pred_region
      _
    $region5: #{tpu_custom_call.1} parent=1 // pred_fallthru
      _
    // Predicated region
    $region6: #{tpu_custom_call.1} parent=1 // pred_check
      _
    $region7: #{tpu_custom_call.1} parent=1 // pred_check_branch
      %20 = sbr.rel (0) target = $region9
    $region8: #{tpu_custom_call.1} parent=1 // pred_region
      _
    $region9: #{tpu_custom_call.1} parent=1 // pred_fallthru
      _
    // Predicated region
    $region10: #{tpu_custom_call.1} parent=1 // pred_check
      _
    $region11: #{tpu_custom_call.1} parent=1 // pred_check_branch
      %22 = sbr.rel (0) target = $region13
    $region12: #{tpu_custom_call.1} parent=1 // pred_region
      _
    $region13: #{tpu_custom_call.1} parent=1 // pred_fallthru
      _
    // Predicated region
    $region14: #{tpu_custom_call.1} parent=1 // pred_check
      _
    $region15: #{tpu_custom_call.1} parent=1 // pred_check_branch
      %24 = sbr.rel (0) target = $region17
    $region16: #{tpu_custom_call.1} parent=1 // pred_region
      %s26 = ssub.s32 9216, 9216
      %27 = vsyncadd [#allocation3], %s26
      %s28 = sshll.u32 [#allocation2], 4
      %s29 = int_to_ptr.vmem [resolvable:$true] %s28
      %34 = dma.hbm_to_vmem [thread:$0]  %s3, 9216, %s29, [#allocation3], 192, 192, 12
    $region17: #{tpu_custom_call.1} parent=1 // pred_fallthru
      _
    // Predicated region
    $region18: #{tpu_custom_call.1} parent=1 // pred_check
      _
    $region19: #{tpu_custom_call.1} parent=1 // pred_check_branch
      %36 = sbr.rel (0) target = $region21
    $region20: #{tpu_custom_call.1} parent=1 // pred_region
      _
    $region21: #{tpu_custom_call.1} parent=1 // pred_fallthru
      _
    // Predicated region
    $region22: #{tpu_custom_call.1} parent=1 // pred_check
      _
    $region23: #{tpu_custom_call.1} parent=1 // pred_check_branch
      %38 = sbr.rel (0) target = $region25
    $region24: #{tpu_custom_call.1} parent=1 // pred_region
      %s40 = ssub.s32 9216, 9216
      %41 = vsyncadd [#allocation6], %s40
      %s42 = sshll.u32 [#allocation5], 4
      %s43 = int_to_ptr.vmem [resolvable:$true] %s42
      %48 = dma.hbm_to_vmem [thread:$0]  %s5, 9216, %s43, [#allocation6], 192, 192, 12
    $region25: #{tpu_custom_call.1} parent=1 // pred_fallthru
      _
    // Predicated region
    $region26: #{tpu_custom_call.1} parent=1 // pred_check
      _
    $region27: #{tpu_custom_call.1} parent=1 // pred_check_branch
      %50 = sbr.rel (0) target = $region29
    $region28: #{tpu_custom_call.1} parent=1 // pred_region
      _
    $region29: #{tpu_custom_call.1} parent=1 // pred_fallthru
      _
    // Predicated region
    $region30: #{tpu_custom_call.1} parent=1 // pred_check
      _
    $region31: #{tpu_custom_call.1} parent=1 // pred_check_branch
      %52 = sbr.rel (0) target = $region33
    $region32: #{tpu_custom_call.1} parent=1 // pred_region
      %s54 = ssub.s32 3072, 3072
      %55 = vsyncadd [#allocation6], %s54
      %s56 = sshll.u32 [#allocation7], 4
      %s57 = int_to_ptr.vmem [resolvable:$true] %s56
      %62 = dma.hbm_to_vmem [thread:$0]  %s7, 3072, %s57, [#allocation6], 64, 64, 4
    $region33: #{tpu_custom_call.1} parent=1 // pred_fallthru
      _
    // Predicated region
    $region34: #{tpu_custom_call.1} parent=1 // pred_check
      _
    $region35: #{tpu_custom_call.1} parent=1 // pred_check_branch
      %64 = sbr.rel (0) target = $region37
    $region36: #{tpu_custom_call.1} parent=1 // pred_region
      _
    $region37: #{tpu_custom_call.1} parent=1 // pred_fallthru
      _
    // Predicated region
    $region38: #{tpu_custom_call.1} parent=1 // pred_check
      _
    $region39: #{tpu_custom_call.1} parent=1 // pred_check_branch
      %66 = sbr.rel (0) target = $region41
    $region40: #{tpu_custom_call.1} parent=1 // pred_region
      %67 = dma.done [#allocation3], 9216
    $region41: #{tpu_custom_call.1} parent=1 // pred_fallthru
      _
    // Predicated region
    $region42: #{tpu_custom_call.1} parent=1 // pred_check
      _
    $region43: #{tpu_custom_call.1} parent=1 // pred_check_branch
      %69 = sbr.rel (0) target = $region45
    $region44: #{tpu_custom_call.1} parent=1 // pred_region
      %70 = dma.done [#allocation6], 9216
    $region45: #{tpu_custom_call.1} parent=1 // pred_fallthru
      _
    // Predicated region
    $region46: #{tpu_custom_call.1} parent=1 // pred_check
      _
    $region47: #{tpu_custom_call.1} parent=1 // pred_check_branch
      %72 = sbr.rel (0) target = $region49
    $region48: #{tpu_custom_call.1} parent=1 // pred_region
      %73 = dma.done [#allocation6], 3072
    $region49: #{tpu_custom_call.1} parent=1 // pred_fallthru
      _
    %v75 = vld [vmem:[%s0] sm:$0xf]
    %v76 = vld [vmem:[%s0 + $0x4] sm:$0xf]
    %v77 = vld [vmem:[%s0 + $0x8] sm:$0xf]
    %v78 = vld [vmem:[%s0 + $0xc] sm:$0xf]
    %v79 = vld [vmem:[%s0 + $0x10] sm:$0xf]
    %v80 = vld [vmem:[%s0 + $0x14] sm:$0xf]
    %v81 = vld [vmem:[%s0 + $0x18] sm:$0xf]
    %v82 = vld [vmem:[%s0 + $0x1c] sm:$0xf]
    %v83 = vld [vmem:[%s0 + $0x20] sm:$0xf]
    %v84 = vld [vmem:[%s0 + $0x24] sm:$0xf]
    %v85 = vld [vmem:[%s0 + $0x28] sm:$0xf]
    %v86 = vld [vmem:[%s0 + $0x2c] sm:$0xf]
    %v87 = vld [vmem:[%s0 + $0x30] sm:$0xf]
    %v88 = vld [vmem:[%s0 + $0x34] sm:$0xf]
    %v89 = vld [vmem:[%s0 + $0x38] sm:$0xf]
    %v90 = vld [vmem:[%s0 + $0x3c] sm:$0xf]
    %v91 = vld [vmem:[%s0 + $0x40] sm:$0xf]
    %v92 = vld [vmem:[%s0 + $0x44] sm:$0xf]
    %v93 = vld [vmem:[%s0 + $0x48] sm:$0xf]
    %v94 = vld [vmem:[%s0 + $0x4c] sm:$0xf]
    %v95 = vld [vmem:[%s0 + $0x50] sm:$0xf]
    %v96 = vld [vmem:[%s0 + $0x54] sm:$0xf]
    %v97 = vld [vmem:[%s0 + $0x58] sm:$0xf]
    %v98 = vld [vmem:[%s0 + $0x5c] sm:$0xf]
    %v99 = vld [vmem:[%s0 + $0x60] sm:$0xf]
    %v100 = vld [vmem:[%s0 + $0x64] sm:$0xf]
    %v101 = vld [vmem:[%s0 + $0x68] sm:$0xf]
    %v102 = vld [vmem:[%s0 + $0x6c] sm:$0xf]
    %v103 = vld [vmem:[%s0 + $0x70] sm:$0xf]
    %v104 = vld [vmem:[%s0 + $0x74] sm:$0xf]
    %v105 = vld [vmem:[%s0 + $0x78] sm:$0xf]
    %v106 = vld [vmem:[%s0 + $0x7c] sm:$0xf]
    %v107 = vld [vmem:[%s1] sm:$0xff]
    %v108 = vld [vmem:[%s1 + $0x8] sm:$0xf]
    %v109 = vld [vmem:[%s1 + $0xc] sm:$0x33]
    %v110 = vld [vmem:[%s1 + $0x14] sm:$0x3]
    %v111 = vld [vmem:[%s2] sm:$0x7]
    %v113 = vlaneseq
    %v114 = vshrl.u32 %v113, 7
    %v115 = vsub.s32 0, %v114
    %v116 = vrot.slane %v111, %v115
    %v117 = vlaneseq
    %v118 = vshrl.u32 %v117, 7
    %v119 = vsub.s32 1, %v118
    %v120 = vrot.slane %v111, %v119
    %v121 = vlaneseq
    %v122 = vshrl.u32 %v121, 7
    %v123 = vsub.s32 2, %v122
    %v124 = vrot.slane %v111, %v123
    %v160 = vunpack.c.l.b16 %v75
    %v161 = vunpack.c.l.b16 %v76
    %v162 = vunpack.c.l.b16 %v77
    %v163 = vunpack.c.l.b16 %v78
    %v164 = vunpack.c.l.b16 %v79
    %v165 = vunpack.c.l.b16 %v80
    %v166 = vunpack.c.l.b16 %v81
    %v167 = vunpack.c.l.b16 %v82
    %v168 = vunpack.c.l.b16 %v83
    %v169 = vunpack.c.l.b16 %v84
    %v170 = vunpack.c.l.b16 %v85
    %v171 = vunpack.c.l.b16 %v86
    %v172 = vunpack.c.l.b16 %v87
    %v173 = vunpack.c.l.b16 %v88
    %v174 = vunpack.c.l.b16 %v89
    %v175 = vunpack.c.l.b16 %v90
    %v176 = vunpack.c.l.b16 %v91
    %v177 = vunpack.c.l.b16 %v92
    %v178 = vunpack.c.l.b16 %v93
    %v179 = vunpack.c.l.b16 %v94
    %v180 = vunpack.c.l.b16 %v95
    %v181 = vunpack.c.l.b16 %v96
    %v182 = vunpack.c.l.b16 %v97
    %v183 = vunpack.c.l.b16 %v98
    %v184 = vunpack.c.l.b16 %v99
    %v185 = vunpack.c.l.b16 %v100
    %v186 = vunpack.c.l.b16 %v101
    %v187 = vunpack.c.l.b16 %v102
    %v188 = vunpack.c.l.b16 %v103
    %v189 = vunpack.c.l.b16 %v104
    %v190 = vunpack.c.l.b16 %v105
    %v191 = vunpack.c.l.b16 %v106
    %v192 = vpack.c.b16 %v161, %v160
    %v193 = vpack.c.b16 %v163, %v162
    %v194 = vpack.c.b16 %v165, %v164
    %v195 = vpack.c.b16 %v167, %v166
    %v196 = vpack.c.b16 %v169, %v168
    %v197 = vpack.c.b16 %v171, %v170
    %v198 = vpack.c.b16 %v173, %v172
    %v199 = vpack.c.b16 %v175, %v174
    %v200 = vpack.c.b16 %v177, %v176
    %v201 = vpack.c.b16 %v179, %v178
    %v202 = vpack.c.b16 %v181, %v180
    %v203 = vpack.c.b16 %v183, %v182
    %v204 = vpack.c.b16 %v185, %v184
    %v205 = vpack.c.b16 %v187, %v186
    %v206 = vpack.c.b16 %v189, %v188
    %v207 = vpack.c.b16 %v191, %v190
    %v212 = vunpack.c.l.b16 %v107
    %v213 = vunpack.c.h.b16 %v107
    %v214 = vunpack.c.l.b16 %v108
    %v215 = vunpack.c.l.b16 %v109
    %v216 = vunpack.c.h.b16 %v109
    %v217 = vunpack.c.l.b16 %v110
    %v218 = vpack.c.b16 %v215, %v212
    %v219 = vpack.c.b16 %v216, %v213
    %v220 = vpack.c.b16 %v217, %v214
    %vm221 = vcmask 89088
    %v223 = vsel %vm221, %v192, 0
    %v226 = vsel %vm221, %v193, 0
    %v229 = vsel %vm221, %v194, 0
    %v232 = vsel %vm221, %v195, 0
    %v235 = vsel %vm221, %v196, 0
    %v238 = vsel %vm221, %v197, 0
    %v241 = vsel %vm221, %v198, 0
    %v244 = vsel %vm221, %v199, 0
    %v247 = vsel %vm221, %v200, 0
    %v250 = vsel %vm221, %v201, 0
    %v253 = vsel %vm221, %v202, 0
    %v256 = vsel %vm221, %v203, 0
    %v259 = vsel %vm221, %v204, 0
    %v262 = vsel %vm221, %v205, 0
    %v265 = vsel %vm221, %v206, 0
    %v268 = vsel %vm221, %v207, 0
    %vm270 = vcmask 1044480
    %vm271 = vcmask 1045504
    %v272 = vsel %vm270, 4294967295, 65535
    %v273 = vsel %vm271, %v272, 0
    %v275 = vand.u32 %v218, %v273
    %v278 = vand.u32 %v219, %v273
    %v281 = vand.u32 %v220, %v273
    %283 = vmatprep.subr.bf16.mxu0 0
    %284 = vmatpush1.bf16.msra.mxu0 0
    %285 = vmatprep.subr.bf16.mxu0 0
    %286 = vmatpush1.bf16.msra.mxu0 0
    %287 = vmatprep.subr.bf16.mxu0 0
    %288 = vmatpush1.bf16.msra.mxu0 0
    %289 = vmatprep.subr.bf16.mxu0 0
    %290 = vmatpush1.bf16.msra.mxu0 0
    %291 = vmatprep.subr.bf16.mxu0 0
    %292 = vmatpush1.bf16.msra.mxu0 0
    %293 = vmatprep.subr.bf16.mxu0 0
    %294 = vmatpush1.bf16.msra.mxu0 0
    %295 = vmatprep.subr.bf16.mxu0 0
    %296 = vmatpush1.bf16.msra.mxu0 0
    %297 = vmatprep.subr.bf16.mxu0 %v278
    %298 = vmatpush1.bf16.msra.mxu0 %v275
    %299 = vmatprep.subr.bf16.mxu0 0
    %300 = vmatpush2.bf16.msra.mxu0 0
    %301 = vmatprep.subr.bf16.mxu0 0
    %302 = vmatpush2.bf16.msra.mxu0 0
    %303 = vmatprep.subr.bf16.mxu0 0
    %304 = vmatpush2.bf16.msra.mxu0 0
    %305 = vmatprep.subr.bf16.mxu0 0
    %306 = vmatpush2.bf16.msra.mxu0 0
    %307 = vmatprep.subr.bf16.mxu0 0
    %308 = vmatpush2.bf16.msra.mxu0 0
    %309 = vmatprep.subr.bf16.mxu0 0
    %310 = vmatpush2.bf16.msra.mxu0 0
    %311 = vmatprep.subr.bf16.mxu0 0
    %312 = vmatpush2.bf16.msra.mxu0 0
    %313 = vmatprep.subr.bf16.mxu0 0
    %314 = vmatpush2.bf16.msra.mxu0 0
    %315 = vmatprep.mubr.bf16.mxu0 0
    %316 = vmatmul.mubr.bf16.gmra.mxu0 %v223
    %v317 = vpop.f32.mrf.mxu0
    %v318 = vadd.f32 %v116, %v317
    %v319 = vpop.f32.mrf.mxu0
    %v320 = vadd.f32 %v120, %v319
    %v321 = vpop.f32.mrf.mxu0
    %v322 = vadd.f32 %v116, %v321
    %v323 = vpop.f32.mrf.mxu0
    %v324 = vadd.f32 %v120, %v323
    %325 = vmatprep.mubr.bf16.mxu0 0
    %326 = vmatmul.mubr.bf16.gmra.mxu0 %v226
    %v327 = vpop.f32.mrf.mxu0
    %v328 = vadd.f32 %v116, %v327
    %v329 = vpop.f32.mrf.mxu0
    %v330 = vadd.f32 %v120, %v329
    %v331 = vpop.f32.mrf.mxu0
    %v332 = vadd.f32 %v116, %v331
    %v333 = vpop.f32.mrf.mxu0
    %v334 = vadd.f32 %v120, %v333
    %335 = vmatprep.mubr.bf16.mxu0 0
    %336 = vmatmul.mubr.bf16.gmra.mxu0 %v229
    %v337 = vpop.f32.mrf.mxu0
    %v338 = vadd.f32 %v116, %v337
    %v339 = vpop.f32.mrf.mxu0
    %v340 = vadd.f32 %v120, %v339
    %v341 = vpop.f32.mrf.mxu0
    %v342 = vadd.f32 %v116, %v341
    %v343 = vpop.f32.mrf.mxu0
    %v344 = vadd.f32 %v120, %v343
    %345 = vmatprep.mubr.bf16.mxu0 0
    %346 = vmatmul.mubr.bf16.gmra.mxu0 %v232
    %v347 = vpop.f32.mrf.mxu0
    %v348 = vadd.f32 %v116, %v347
    %v349 = vpop.f32.mrf.mxu0
    %v350 = vadd.f32 %v120, %v349
    %v351 = vpop.f32.mrf.mxu0
    %v352 = vadd.f32 %v116, %v351
    %v353 = vpop.f32.mrf.mxu0
    %v354 = vadd.f32 %v120, %v353
    %355 = vmatprep.mubr.bf16.mxu0 0
    %356 = vmatmul.mubr.bf16.gmra.mxu0 %v235
    %v357 = vpop.f32.mrf.mxu0
    %v358 = vadd.f32 %v116, %v357
    %v359 = vpop.f32.mrf.mxu0
    %v360 = vadd.f32 %v120, %v359
    %v361 = vpop.f32.mrf.mxu0
    %v362 = vadd.f32 %v116, %v361
    %v363 = vpop.f32.mrf.mxu0
    %v364 = vadd.f32 %v120, %v363
    %365 = vmatprep.mubr.bf16.mxu0 0
    %366 = vmatmul.mubr.bf16.gmra.mxu0 %v238
    %v367 = vpop.f32.mrf.mxu0
    %v368 = vadd.f32 %v116, %v367
    %v369 = vpop.f32.mrf.mxu0
    %v370 = vadd.f32 %v120, %v369
    %v371 = vpop.f32.mrf.mxu0
    %v372 = vadd.f32 %v116, %v371
    %v373 = vpop.f32.mrf.mxu0
    %v374 = vadd.f32 %v120, %v373
    %375 = vmatprep.mubr.bf16.mxu0 0
    %376 = vmatmul.mubr.bf16.gmra.mxu0 %v241
    %v377 = vpop.f32.mrf.mxu0
    %v378 = vadd.f32 %v116, %v377
    %v379 = vpop.f32.mrf.mxu0
    %v380 = vadd.f32 %v120, %v379
    %v381 = vpop.f32.mrf.mxu0
    %v382 = vadd.f32 %v116, %v381
    %v383 = vpop.f32.mrf.mxu0
    %v384 = vadd.f32 %v120, %v383
    %385 = vmatprep.mubr.bf16.mxu0 0
    %386 = vmatmul.mubr.bf16.gmra.mxu0 %v244
    %v387 = vpop.f32.mrf.mxu0
    %v388 = vadd.f32 %v116, %v387
    %v389 = vpop.f32.mrf.mxu0
    %v390 = vadd.f32 %v120, %v389
    %v391 = vpop.f32.mrf.mxu0
    %v392 = vadd.f32 %v116, %v391
    %v393 = vpop.f32.mrf.mxu0
    %v394 = vadd.f32 %v120, %v393
    %395 = vmatprep.mubr.bf16.mxu0 0
    %396 = vmatmul.mubr.bf16.gmra.mxu0 %v247
    %v397 = vpop.f32.mrf.mxu0
    %v398 = vadd.f32 %v116, %v397
    %v399 = vpop.f32.mrf.mxu0
    %v400 = vadd.f32 %v120, %v399
    %v401 = vpop.f32.mrf.mxu0
    %v402 = vadd.f32 %v116, %v401
    %v403 = vpop.f32.mrf.mxu0
    %v404 = vadd.f32 %v120, %v403
    %405 = vmatprep.mubr.bf16.mxu0 0
    %406 = vmatmul.mubr.bf16.gmra.mxu0 %v250
    %v407 = vpop.f32.mrf.mxu0
    %v408 = vadd.f32 %v116, %v407
    %v409 = vpop.f32.mrf.mxu0
    %v410 = vadd.f32 %v120, %v409
    %v411 = vpop.f32.mrf.mxu0
    %v412 = vadd.f32 %v116, %v411
    %v413 = vpop.f32.mrf.mxu0
    %v414 = vadd.f32 %v120, %v413
    %415 = vmatprep.mubr.bf16.mxu0 0
    %416 = vmatmul.mubr.bf16.gmra.mxu0 %v253
    %v417 = vpop.f32.mrf.mxu0
    %v418 = vadd.f32 %v116, %v417
    %v419 = vpop.f32.mrf.mxu0
    %v420 = vadd.f32 %v120, %v419
    %v421 = vpop.f32.mrf.mxu0
    %v422 = vadd.f32 %v116, %v421
    %v423 = vpop.f32.mrf.mxu0
    %v424 = vadd.f32 %v120, %v423
    %425 = vmatprep.mubr.bf16.mxu0 0
    %426 = vmatmul.mubr.bf16.gmra.mxu0 %v256
    %v427 = vpop.f32.mrf.mxu0
    %v428 = vadd.f32 %v116, %v427
    %v429 = vpop.f32.mrf.mxu0
    %v430 = vadd.f32 %v120, %v429
    %v431 = vpop.f32.mrf.mxu0
    %v432 = vadd.f32 %v116, %v431
    %v433 = vpop.f32.mrf.mxu0
    %v434 = vadd.f32 %v120, %v433
    %435 = vmatprep.mubr.bf16.mxu0 0
    %436 = vmatmul.mubr.bf16.gmra.mxu0 %v259
    %v437 = vpop.f32.mrf.mxu0
    %v438 = vadd.f32 %v116, %v437
    %v439 = vpop.f32.mrf.mxu0
    %v440 = vadd.f32 %v120, %v439
    %v441 = vpop.f32.mrf.mxu0
    %v442 = vadd.f32 %v116, %v441
    %v443 = vpop.f32.mrf.mxu0
    %v444 = vadd.f32 %v120, %v443
    %445 = vmatprep.mubr.bf16.mxu0 0
    %446 = vmatmul.mubr.bf16.gmra.mxu0 %v262
    %v447 = vpop.f32.mrf.mxu0
    %v448 = vadd.f32 %v116, %v447
    %v449 = vpop.f32.mrf.mxu0
    %v450 = vadd.f32 %v120, %v449
    %v451 = vpop.f32.mrf.mxu0
    %v452 = vadd.f32 %v116, %v451
    %v453 = vpop.f32.mrf.mxu0
    %v454 = vadd.f32 %v120, %v453
    %455 = vmatprep.mubr.bf16.mxu0 0
    %456 = vmatmul.mubr.bf16.gmra.mxu0 %v265
    %v457 = vpop.f32.mrf.mxu0
    %v458 = vadd.f32 %v116, %v457
    %v459 = vpop.f32.mrf.mxu0
    %v460 = vadd.f32 %v120, %v459
    %v461 = vpop.f32.mrf.mxu0
    %v462 = vadd.f32 %v116, %v461
    %v463 = vpop.f32.mrf.mxu0
    %v464 = vadd.f32 %v120, %v463
    %465 = vmatprep.mubr.bf16.mxu0 0
    %466 = vmatmul.mubr.bf16.gmra.mxu0 %v268
    %v467 = vpop.f32.mrf.mxu0
    %v468 = vadd.f32 %v116, %v467
    %v469 = vpop.f32.mrf.mxu0
    %v470 = vadd.f32 %v120, %v469
    %v471 = vpop.f32.mrf.mxu0
    %v472 = vadd.f32 %v116, %v471
    %v473 = vpop.f32.mrf.mxu0
    %v474 = vadd.f32 %v120, %v473
    %475 = vdwg.mxu0
    %476 = vmatprep.subr.bf16.mxu0 0
    %477 = vmatpush1.bf16.msra.mxu0 0
    %478 = vmatprep.subr.bf16.mxu0 0
    %479 = vmatpush1.bf16.msra.mxu0 0
    %480 = vmatprep.subr.bf16.mxu0 0
    %481 = vmatpush1.bf16.msra.mxu0 0
    %482 = vmatprep.subr.bf16.mxu0 0
    %483 = vmatpush1.bf16.msra.mxu0 0
    %484 = vmatprep.subr.bf16.mxu0 0
    %485 = vmatpush1.bf16.msra.mxu0 0
    %486 = vmatprep.subr.bf16.mxu0 0
    %487 = vmatpush1.bf16.msra.mxu0 0
    %488 = vmatprep.subr.bf16.mxu0 0
    %489 = vmatpush1.bf16.msra.mxu0 0
    %490 = vmatprep.subr.bf16.mxu0 0
    %491 = vmatpush1.bf16.msra.mxu0 %v281
    %492 = vmatprep.subr.bf16.mxu0 0
    %493 = vmatpush2.bf16.msra.mxu0 0
    %494 = vmatprep.subr.bf16.mxu0 0
    %495 = vmatpush2.bf16.msra.mxu0 0
    %496 = vmatprep.subr.bf16.mxu0 0
    %497 = vmatpush2.bf16.msra.mxu0 0
    %498 = vmatprep.subr.bf16.mxu0 0
    %499 = vmatpush2.bf16.msra.mxu0 0
    %500 = vmatprep.subr.bf16.mxu0 0
    %501 = vmatpush2.bf16.msra.mxu0 0
    %502 = vmatprep.subr.bf16.mxu0 0
    %503 = vmatpush2.bf16.msra.mxu0 0
    %504 = vmatprep.subr.bf16.mxu0 0
    %505 = vmatpush2.bf16.msra.mxu0 0
    %506 = vmatprep.subr.bf16.mxu0 0
    %507 = vmatpush2.bf16.msra.mxu0 0
    %508 = vmatprep.mubr.bf16.mxu0 0
    %509 = vmatmul.mubr.bf16.gmra.mxu0 %v223
    %v510 = vpop.f32.mrf.mxu0
    %v511 = vadd.f32 %v124, %v510
    %v512 = vpop.f32.mrf.mxu0
    %v513 = vpop.f32.mrf.mxu0
    %v514 = vadd.f32 %v124, %v513
    %v515 = vpop.f32.mrf.mxu0
    %516 = vmatprep.mubr.bf16.mxu0 0
    %517 = vmatmul.mubr.bf16.gmra.mxu0 %v226
    %v518 = vpop.f32.mrf.mxu0
    %v519 = vadd.f32 %v124, %v518
    %v520 = vpop.f32.mrf.mxu0
    %v521 = vpop.f32.mrf.mxu0
    %v522 = vadd.f32 %v124, %v521
    %v523 = vpop.f32.mrf.mxu0
    %524 = vmatprep.mubr.bf16.mxu0 0
    %525 = vmatmul.mubr.bf16.gmra.mxu0 %v229
    %v526 = vpop.f32.mrf.mxu0
    %v527 = vadd.f32 %v124, %v526
    %v528 = vpop.f32.mrf.mxu0
    %v529 = vpop.f32.mrf.mxu0
    %v530 = vadd.f32 %v124, %v529
    %v531 = vpop.f32.mrf.mxu0
    %532 = vmatprep.mubr.bf16.mxu0 0
    %533 = vmatmul.mubr.bf16.gmra.mxu0 %v232
    %v534 = vpop.f32.mrf.mxu0
    %v535 = vadd.f32 %v124, %v534
    %v536 = vpop.f32.mrf.mxu0
    %v537 = vpop.f32.mrf.mxu0
    %v538 = vadd.f32 %v124, %v537
    %v539 = vpop.f32.mrf.mxu0
    %540 = vmatprep.mubr.bf16.mxu0 0
    %541 = vmatmul.mubr.bf16.gmra.mxu0 %v235
    %v542 = vpop.f32.mrf.mxu0
    %v543 = vadd.f32 %v124, %v542
    %v544 = vpop.f32.mrf.mxu0
    %v545 = vpop.f32.mrf.mxu0
    %v546 = vadd.f32 %v124, %v545
    %v547 = vpop.f32.mrf.mxu0
    %548 = vmatprep.mubr.bf16.mxu0 0
    %549 = vmatmul.mubr.bf16.gmra.mxu0 %v238
    %v550 = vpop.f32.mrf.mxu0
    %v551 = vadd.f32 %v124, %v550
    %v552 = vpop.f32.mrf.mxu0
    %v553 = vpop.f32.mrf.mxu0
    %v554 = vadd.f32 %v124, %v553
    %v555 = vpop.f32.mrf.mxu0
    %556 = vmatprep.mubr.bf16.mxu0 0
    %557 = vmatmul.mubr.bf16.gmra.mxu0 %v241
    %v558 = vpop.f32.mrf.mxu0
    %v559 = vadd.f32 %v124, %v558
    %v560 = vpop.f32.mrf.mxu0
    %v561 = vpop.f32.mrf.mxu0
    %v562 = vadd.f32 %v124, %v561
    %v563 = vpop.f32.mrf.mxu0
    %564 = vmatprep.mubr.bf16.mxu0 0
    %565 = vmatmul.mubr.bf16.gmra.mxu0 %v244
    %v566 = vpop.f32.mrf.mxu0
    %v567 = vadd.f32 %v124, %v566
    %v568 = vpop.f32.mrf.mxu0
    %v569 = vpop.f32.mrf.mxu0
    %v570 = vadd.f32 %v124, %v569
    %v571 = vpop.f32.mrf.mxu0
    %572 = vmatprep.mubr.bf16.mxu0 0
    %573 = vmatmul.mubr.bf16.gmra.mxu0 %v247
    %v574 = vpop.f32.mrf.mxu0
    %v575 = vadd.f32 %v124, %v574
    %v576 = vpop.f32.mrf.mxu0
    %v577 = vpop.f32.mrf.mxu0
    %v578 = vadd.f32 %v124, %v577
    %v579 = vpop.f32.mrf.mxu0
    %580 = vmatprep.mubr.bf16.mxu0 0
    %581 = vmatmul.mubr.bf16.gmra.mxu0 %v250
    %v582 = vpop.f32.mrf.mxu0
    %v583 = vadd.f32 %v124, %v582
    %v584 = vpop.f32.mrf.mxu0
    %v585 = vpop.f32.mrf.mxu0
    %v586 = vadd.f32 %v124, %v585
    %v587 = vpop.f32.mrf.mxu0
    %588 = vmatprep.mubr.bf16.mxu0 0
    %589 = vmatmul.mubr.bf16.gmra.mxu0 %v253
    %v590 = vpop.f32.mrf.mxu0
    %v591 = vadd.f32 %v124, %v590
    %v592 = vpop.f32.mrf.mxu0
    %v593 = vpop.f32.mrf.mxu0
    %v594 = vadd.f32 %v124, %v593
    %v595 = vpop.f32.mrf.mxu0
    %596 = vmatprep.mubr.bf16.mxu0 0
    %597 = vmatmul.mubr.bf16.gmra.mxu0 %v256
    %v598 = vpop.f32.mrf.mxu0
    %v599 = vadd.f32 %v124, %v598
    %v600 = vpop.f32.mrf.mxu0
    %v601 = vpop.f32.mrf.mxu0
    %v602 = vadd.f32 %v124, %v601
    %v603 = vpop.f32.mrf.mxu0
    %604 = vmatprep.mubr.bf16.mxu0 0
    %605 = vmatmul.mubr.bf16.gmra.mxu0 %v259
    %v606 = vpop.f32.mrf.mxu0
    %v607 = vadd.f32 %v124, %v606
    %v608 = vpop.f32.mrf.mxu0
    %v609 = vpop.f32.mrf.mxu0
    %v610 = vadd.f32 %v124, %v609
    %v611 = vpop.f32.mrf.mxu0
    %612 = vmatprep.mubr.bf16.mxu0 0
    %613 = vmatmul.mubr.bf16.gmra.mxu0 %v262
    %v614 = vpop.f32.mrf.mxu0
    %v615 = vadd.f32 %v124, %v614
    %v616 = vpop.f32.mrf.mxu0
    %v617 = vpop.f32.mrf.mxu0
    %v618 = vadd.f32 %v124, %v617
    %v619 = vpop.f32.mrf.mxu0
    %620 = vmatprep.mubr.bf16.mxu0 0
    %621 = vmatmul.mubr.bf16.gmra.mxu0 %v265
    %v622 = vpop.f32.mrf.mxu0
    %v623 = vadd.f32 %v124, %v622
    %v624 = vpop.f32.mrf.mxu0
    %v625 = vpop.f32.mrf.mxu0
    %v626 = vadd.f32 %v124, %v625
    %v627 = vpop.f32.mrf.mxu0
    %628 = vmatprep.mubr.bf16.mxu0 0
    %629 = vmatmul.mubr.bf16.gmra.mxu0 %v268
    %v630 = vpop.f32.mrf.mxu0
    %v631 = vadd.f32 %v124, %v630
    %v632 = vpop.f32.mrf.mxu0
    %v633 = vpop.f32.mrf.mxu0
    %v634 = vadd.f32 %v124, %v633
    %v635 = vpop.f32.mrf.mxu0
    %636 = vdwg.mxu0
    %v637 = vmax.f32 %v318, 0.0
    %v638 = vmax.f32 %v320, 0.0
    %v639 = vmax.f32 %v511, 0.0
    %v640 = vmax.f32 %v322, 0.0
    %v641 = vmax.f32 %v324, 0.0
    %v642 = vmax.f32 %v514, 0.0
    %v643 = vmax.f32 %v328, 0.0
    %v644 = vmax.f32 %v330, 0.0
    %v645 = vmax.f32 %v519, 0.0
    %v646 = vmax.f32 %v332, 0.0
    %v647 = vmax.f32 %v334, 0.0
    %v648 = vmax.f32 %v522, 0.0
    %v649 = vmax.f32 %v338, 0.0
    %v650 = vmax.f32 %v340, 0.0
    %v651 = vmax.f32 %v527, 0.0
    %v652 = vmax.f32 %v342, 0.0
    %v653 = vmax.f32 %v344, 0.0
    %v654 = vmax.f32 %v530, 0.0
    %v655 = vmax.f32 %v348, 0.0
    %v656 = vmax.f32 %v350, 0.0
    %v657 = vmax.f32 %v535, 0.0
    %v658 = vmax.f32 %v352, 0.0
    %v659 = vmax.f32 %v354, 0.0
    %v660 = vmax.f32 %v538, 0.0
    %v661 = vmax.f32 %v358, 0.0
    %v662 = vmax.f32 %v360, 0.0
    %v663 = vmax.f32 %v543, 0.0
    %v664 = vmax.f32 %v362, 0.0
    %v665 = vmax.f32 %v364, 0.0
    %v666 = vmax.f32 %v546, 0.0
    %v667 = vmax.f32 %v368, 0.0
    %v668 = vmax.f32 %v370, 0.0
    %v669 = vmax.f32 %v551, 0.0
    %v670 = vmax.f32 %v372, 0.0
    %v671 = vmax.f32 %v374, 0.0
    %v672 = vmax.f32 %v554, 0.0
    %v673 = vmax.f32 %v378, 0.0
    %v674 = vmax.f32 %v380, 0.0
    %v675 = vmax.f32 %v559, 0.0
    %v676 = vmax.f32 %v382, 0.0
    %v677 = vmax.f32 %v384, 0.0
    %v678 = vmax.f32 %v562, 0.0
    %v679 = vmax.f32 %v388, 0.0
    %v680 = vmax.f32 %v390, 0.0
    %v681 = vmax.f32 %v567, 0.0
    %v682 = vmax.f32 %v392, 0.0
    %v683 = vmax.f32 %v394, 0.0
    %v684 = vmax.f32 %v570, 0.0
    %v685 = vmax.f32 %v398, 0.0
    %v686 = vmax.f32 %v400, 0.0
    %v687 = vmax.f32 %v575, 0.0
    %v688 = vmax.f32 %v402, 0.0
    %v689 = vmax.f32 %v404, 0.0
    %v690 = vmax.f32 %v578, 0.0
    %v691 = vmax.f32 %v408, 0.0
    %v692 = vmax.f32 %v410, 0.0
    %v693 = vmax.f32 %v583, 0.0
    %v694 = vmax.f32 %v412, 0.0
    %v695 = vmax.f32 %v414, 0.0
    %v696 = vmax.f32 %v586, 0.0
    %v697 = vmax.f32 %v418, 0.0
    %v698 = vmax.f32 %v420, 0.0
    %v699 = vmax.f32 %v591, 0.0
    %v700 = vmax.f32 %v422, 0.0
    %v701 = vmax.f32 %v424, 0.0
    %v702 = vmax.f32 %v594, 0.0
    %v703 = vmax.f32 %v428, 0.0
    %v704 = vmax.f32 %v430, 0.0
    %v705 = vmax.f32 %v599, 0.0
    %v706 = vmax.f32 %v432, 0.0
    %v707 = vmax.f32 %v434, 0.0
    %v708 = vmax.f32 %v602, 0.0
    %v709 = vmax.f32 %v438, 0.0
    %v710 = vmax.f32 %v440, 0.0
    %v711 = vmax.f32 %v607, 0.0
    %v712 = vmax.f32 %v442, 0.0
    %v713 = vmax.f32 %v444, 0.0
    %v714 = vmax.f32 %v610, 0.0
    %v715 = vmax.f32 %v448, 0.0
    %v716 = vmax.f32 %v450, 0.0
    %v717 = vmax.f32 %v615, 0.0
    %v718 = vmax.f32 %v452, 0.0
    %v719 = vmax.f32 %v454, 0.0
    %v720 = vmax.f32 %v618, 0.0
    %v721 = vmax.f32 %v458, 0.0
    %v722 = vmax.f32 %v460, 0.0
    %v723 = vmax.f32 %v623, 0.0
    %v724 = vmax.f32 %v462, 0.0
    %v725 = vmax.f32 %v464, 0.0
    %v726 = vmax.f32 %v626, 0.0
    %v727 = vmax.f32 %v468, 0.0
    %v728 = vmax.f32 %v470, 0.0
    %v729 = vmax.f32 %v631, 0.0
    %v730 = vmax.f32 %v472, 0.0
    %v731 = vmax.f32 %v474, 0.0
    %v732 = vmax.f32 %v634, 0.0
    %v733 = vpack.c.bf16 %v640, %v637
    %v734 = vpack.c.bf16 %v641, %v638
    %v735 = vpack.c.bf16 %v642, %v639
    %v736 = vpack.c.bf16 %v646, %v643
    %v737 = vpack.c.bf16 %v647, %v644
    %v738 = vpack.c.bf16 %v648, %v645
    %v739 = vpack.c.bf16 %v652, %v649
    %v740 = vpack.c.bf16 %v653, %v650
    %v741 = vpack.c.bf16 %v654, %v651
    %v742 = vpack.c.bf16 %v658, %v655
    %v743 = vpack.c.bf16 %v659, %v656
    %v744 = vpack.c.bf16 %v660, %v657
    %v745 = vpack.c.bf16 %v664, %v661
    %v746 = vpack.c.bf16 %v665, %v662
    %v747 = vpack.c.bf16 %v666, %v663
    %v748 = vpack.c.bf16 %v670, %v667
    %v749 = vpack.c.bf16 %v671, %v668
    %v750 = vpack.c.bf16 %v672, %v669
    %v751 = vpack.c.bf16 %v676, %v673
    %v752 = vpack.c.bf16 %v677, %v674
    %v753 = vpack.c.bf16 %v678, %v675
    %v754 = vpack.c.bf16 %v682, %v679
    %v755 = vpack.c.bf16 %v683, %v680
    %v756 = vpack.c.bf16 %v684, %v681
    %v757 = vpack.c.bf16 %v688, %v685
    %v758 = vpack.c.bf16 %v689, %v686
    %v759 = vpack.c.bf16 %v690, %v687
    %v760 = vpack.c.bf16 %v694, %v691
    %v761 = vpack.c.bf16 %v695, %v692
    %v762 = vpack.c.bf16 %v696, %v693
    %v763 = vpack.c.bf16 %v700, %v697
    %v764 = vpack.c.bf16 %v701, %v698
    %v765 = vpack.c.bf16 %v702, %v699
    %v766 = vpack.c.bf16 %v706, %v703
    %v767 = vpack.c.bf16 %v707, %v704
    %v768 = vpack.c.bf16 %v708, %v705
    %v769 = vpack.c.bf16 %v712, %v709
    %v770 = vpack.c.bf16 %v713, %v710
    %v771 = vpack.c.bf16 %v714, %v711
    %v772 = vpack.c.bf16 %v718, %v715
    %v773 = vpack.c.bf16 %v719, %v716
    %v774 = vpack.c.bf16 %v720, %v717
    %v775 = vpack.c.bf16 %v724, %v721
    %v776 = vpack.c.bf16 %v725, %v722
    %v777 = vpack.c.bf16 %v726, %v723
    %v778 = vpack.c.bf16 %v730, %v727
    %v779 = vpack.c.bf16 %v731, %v728
    %v780 = vpack.c.bf16 %v732, %v729
    %v781 = vld [vmem:[#allocation2] sm:$0xff]
    %v782 = vld [vmem:[#allocation2 + $0x8] sm:$0xf]
    %v783 = vld [vmem:[#allocation2 + $0xc] sm:$0xff]
    %v784 = vld [vmem:[#allocation2 + $0x14] sm:$0xf]
    %v785 = vld [vmem:[#allocation2 + $0x18] sm:$0xff]
    %v786 = vld [vmem:[#allocation2 + $0x20] sm:$0xf]
    %v787 = vld [vmem:[#allocation2 + $0x24] sm:$0xff]
    %v788 = vld [vmem:[#allocation2 + $0x2c] sm:$0xf]
    %v789 = vld [vmem:[#allocation2 + $0x30] sm:$0xff]
    %v790 = vld [vmem:[#allocation2 + $0x38] sm:$0xf]
    %v791 = vld [vmem:[#allocation2 + $0x3c] sm:$0xff]
    %v792 = vld [vmem:[#allocation2 + $0x44] sm:$0xf]
    %v793 = vld [vmem:[#allocation2 + $0x48] sm:$0xff]
    %v794 = vld [vmem:[#allocation2 + $0x50] sm:$0xf]
    %v795 = vld [vmem:[#allocation2 + $0x54] sm:$0xff]
    %v796 = vld [vmem:[#allocation2 + $0x5c] sm:$0xf]
    %v797 = vld [vmem:[#allocation2 + $0x60] sm:$0xff]
    %v798 = vld [vmem:[#allocation2 + $0x68] sm:$0xf]
    %v799 = vld [vmem:[#allocation2 + $0x6c] sm:$0xff]
    %v800 = vld [vmem:[#allocation2 + $0x74] sm:$0xf]
    %v801 = vld [vmem:[#allocation2 + $0x78] sm:$0xff]
    %v802 = vld [vmem:[#allocation2 + $0x80] sm:$0xf]
    %v803 = vld [vmem:[#allocation2 + $0x84] sm:$0xff]
    %v804 = vld [vmem:[#allocation2 + $0x8c] sm:$0xf]
    %v805 = vld [vmem:[#allocation2 + $0x90] sm:$0xff]
    %v806 = vld [vmem:[#allocation2 + $0x98] sm:$0xf]
    %v807 = vld [vmem:[#allocation2 + $0x9c] sm:$0xff]
    %v808 = vld [vmem:[#allocation2 + $0xa4] sm:$0xf]
    %v809 = vld [vmem:[#allocation2 + $0xa8] sm:$0xff]
    %v810 = vld [vmem:[#allocation2 + $0xb0] sm:$0xf]
    %v811 = vld [vmem:[#allocation2 + $0xb4] sm:$0xff]
    %v812 = vld [vmem:[#allocation2 + $0xbc] sm:$0xf]
    %v813 = vld [vmem:[#allocation2 + $0xc0] sm:$0xff]
    %v814 = vld [vmem:[#allocation2 + $0xc8] sm:$0xf]
    %v815 = vld [vmem:[#allocation2 + $0xcc] sm:$0xff]
    %v816 = vld [vmem:[#allocation2 + $0xd4] sm:$0xf]
    %v817 = vld [vmem:[#allocation2 + $0xd8] sm:$0xff]
    %v818 = vld [vmem:[#allocation2 + $0xe0] sm:$0xf]
    %v819 = vld [vmem:[#allocation2 + $0xe4] sm:$0xff]
    %v820 = vld [vmem:[#allocation2 + $0xec] sm:$0xf]
    %v821 = vld [vmem:[#allocation2 + $0xf0] sm:$0xff]
    %v822 = vld [vmem:[#allocation2 + $0xf8] sm:$0xf]
    %v823 = vld [vmem:[#allocation2 + $0xfc] sm:$0xff]
    %v824 = vld [vmem:[#allocation2 + $0x104] sm:$0xf]
    %v825 = vld [vmem:[#allocation2 + $0x108] sm:$0xff]
    %v826 = vld [vmem:[#allocation2 + $0x110] sm:$0xf]
    %v827 = vld [vmem:[#allocation2 + $0x114] sm:$0xff]
    %v828 = vld [vmem:[#allocation2 + $0x11c] sm:$0xf]
    %v829 = vld [vmem:[#allocation2 + $0x120] sm:$0xff]
    %v830 = vld [vmem:[#allocation2 + $0x128] sm:$0xf]
    %v831 = vld [vmem:[#allocation2 + $0x12c] sm:$0xff]
    %v832 = vld [vmem:[#allocation2 + $0x134] sm:$0xf]
    %v833 = vld [vmem:[#allocation2 + $0x138] sm:$0xff]
    %v834 = vld [vmem:[#allocation2 + $0x140] sm:$0xf]
    %v835 = vld [vmem:[#allocation2 + $0x144] sm:$0xff]
    %v836 = vld [vmem:[#allocation2 + $0x14c] sm:$0xf]
    %v837 = vld [vmem:[#allocation2 + $0x150] sm:$0xff]
    %v838 = vld [vmem:[#allocation2 + $0x158] sm:$0xf]
    %v839 = vld [vmem:[#allocation2 + $0x15c] sm:$0xff]
    %v840 = vld [vmem:[#allocation2 + $0x164] sm:$0xf]
    %v841 = vld [vmem:[#allocation2 + $0x168] sm:$0xff]
    %v842 = vld [vmem:[#allocation2 + $0x170] sm:$0xf]
    %v843 = vld [vmem:[#allocation2 + $0x174] sm:$0xff]
    %v844 = vld [vmem:[#allocation2 + $0x17c] sm:$0xf]
    %v845 = vld [vmem:[#allocation2 + $0x180] sm:$0xff]
    %v846 = vld [vmem:[#allocation2 + $0x188] sm:$0xf]
    %v847 = vld [vmem:[#allocation2 + $0x18c] sm:$0xff]
    %v848 = vld [vmem:[#allocation2 + $0x194] sm:$0xf]
    %v849 = vld [vmem:[#allocation2 + $0x198] sm:$0xff]
    %v850 = vld [vmem:[#allocation2 + $0x1a0] sm:$0xf]
    %v851 = vld [vmem:[#allocation2 + $0x1a4] sm:$0xff]
    %v852 = vld [vmem:[#allocation2 + $0x1ac] sm:$0xf]
    %v853 = vld [vmem:[#allocation2 + $0x1b0] sm:$0xff]
    %v854 = vld [vmem:[#allocation2 + $0x1b8] sm:$0xf]
    %v855 = vld [vmem:[#allocation2 + $0x1bc] sm:$0xff]
    %v856 = vld [vmem:[#allocation2 + $0x1c4] sm:$0xf]
    %v857 = vld [vmem:[#allocation2 + $0x1c8] sm:$0xff]
    %v858 = vld [vmem:[#allocation2 + $0x1d0] sm:$0xf]
    %v859 = vld [vmem:[#allocation2 + $0x1d4] sm:$0xff]
    %v860 = vld [vmem:[#allocation2 + $0x1dc] sm:$0xf]
    %v861 = vld [vmem:[#allocation2 + $0x1e0] sm:$0xff]
    %v862 = vld [vmem:[#allocation2 + $0x1e8] sm:$0xf]
    %v863 = vld [vmem:[#allocation2 + $0x1ec] sm:$0xff]
    %v864 = vld [vmem:[#allocation2 + $0x1f4] sm:$0xf]
    %v865 = vld [vmem:[#allocation2 + $0x1f8] sm:$0xff]
    %v866 = vld [vmem:[#allocation2 + $0x200] sm:$0xf]
    %v867 = vld [vmem:[#allocation2 + $0x204] sm:$0xff]
    %v868 = vld [vmem:[#allocation2 + $0x20c] sm:$0xf]
    %v869 = vld [vmem:[#allocation2 + $0x210] sm:$0xff]
    %v870 = vld [vmem:[#allocation2 + $0x218] sm:$0xf]
    %v871 = vld [vmem:[#allocation2 + $0x21c] sm:$0xff]
    %v872 = vld [vmem:[#allocation2 + $0x224] sm:$0xf]
    %v873 = vld [vmem:[#allocation2 + $0x228] sm:$0xff]
    %v874 = vld [vmem:[#allocation2 + $0x230] sm:$0xf]
    %v875 = vld [vmem:[#allocation2 + $0x234] sm:$0xff]
    %v876 = vld [vmem:[#allocation2 + $0x23c] sm:$0xf]
    %v877 = vld [vmem:[%s4] sm:$0x7]
    %v879 = vlaneseq
    %v880 = vshrl.u32 %v879, 7
    %v881 = vsub.s32 0, %v880
    %v882 = vrot.slane %v877, %v881
    %v883 = vlaneseq
    %v884 = vshrl.u32 %v883, 7
    %v885 = vsub.s32 1, %v884
    %v886 = vrot.slane %v877, %v885
    %v887 = vlaneseq
    %v888 = vshrl.u32 %v887, 7
    %v889 = vsub.s32 2, %v888
    %v890 = vrot.slane %v877, %v889
    %v990 = vunpack.c.l.b16 %v781
    %v991 = vunpack.c.h.b16 %v781
    %v992 = vunpack.c.l.b16 %v782
    %v993 = vunpack.c.l.b16 %v783
    %v994 = vunpack.c.h.b16 %v783
    %v995 = vunpack.c.l.b16 %v784
    %v996 = vunpack.c.l.b16 %v785
    %v997 = vunpack.c.h.b16 %v785
    %v998 = vunpack.c.l.b16 %v786
    %v999 = vunpack.c.l.b16 %v787
    %v1000 = vunpack.c.h.b16 %v787
    %v1001 = vunpack.c.l.b16 %v788
    %v1002 = vunpack.c.l.b16 %v789
    %v1003 = vunpack.c.h.b16 %v789
    %v1004 = vunpack.c.l.b16 %v790
    %v1005 = vunpack.c.l.b16 %v791
    %v1006 = vunpack.c.h.b16 %v791
    %v1007 = vunpack.c.l.b16 %v792
    %v1008 = vunpack.c.l.b16 %v793
    %v1009 = vunpack.c.h.b16 %v793
    %v1010 = vunpack.c.l.b16 %v794
    %v1011 = vunpack.c.l.b16 %v795
    %v1012 = vunpack.c.h.b16 %v795
    %v1013 = vunpack.c.l.b16 %v796
    %v1014 = vunpack.c.l.b16 %v797
    %v1015 = vunpack.c.h.b16 %v797
    %v1016 = vunpack.c.l.b16 %v798
    %v1017 = vunpack.c.l.b16 %v799
    %v1018 = vunpack.c.h.b16 %v799
    %v1019 = vunpack.c.l.b16 %v800
    %v1020 = vunpack.c.l.b16 %v801
    %v1021 = vunpack.c.h.b16 %v801
    %v1022 = vunpack.c.l.b16 %v802
    %v1023 = vunpack.c.l.b16 %v803
    %v1024 = vunpack.c.h.b16 %v803
    %v1025 = vunpack.c.l.b16 %v804
    %v1026 = vunpack.c.l.b16 %v805
    %v1027 = vunpack.c.h.b16 %v805
    %v1028 = vunpack.c.l.b16 %v806
    %v1029 = vunpack.c.l.b16 %v807
    %v1030 = vunpack.c.h.b16 %v807
    %v1031 = vunpack.c.l.b16 %v808
    %v1032 = vunpack.c.l.b16 %v809
    %v1033 = vunpack.c.h.b16 %v809
    %v1034 = vunpack.c.l.b16 %v810
    %v1035 = vunpack.c.l.b16 %v811
    %v1036 = vunpack.c.h.b16 %v811
    %v1037 = vunpack.c.l.b16 %v812
    %v1038 = vunpack.c.l.b16 %v813
    %v1039 = vunpack.c.h.b16 %v813
    %v1040 = vunpack.c.l.b16 %v814
    %v1041 = vunpack.c.l.b16 %v815
    %v1042 = vunpack.c.h.b16 %v815
    %v1043 = vunpack.c.l.b16 %v816
    %v1044 = vunpack.c.l.b16 %v817
    %v1045 = vunpack.c.h.b16 %v817
    %v1046 = vunpack.c.l.b16 %v818
    %v1047 = vunpack.c.l.b16 %v819
    %v1048 = vunpack.c.h.b16 %v819
    %v1049 = vunpack.c.l.b16 %v820
    %v1050 = vunpack.c.l.b16 %v821
    %v1051 = vunpack.c.h.b16 %v821
    %v1052 = vunpack.c.l.b16 %v822
    %v1053 = vunpack.c.l.b16 %v823
    %v1054 = vunpack.c.h.b16 %v823
    %v1055 = vunpack.c.l.b16 %v824
    %v1056 = vunpack.c.l.b16 %v825
    %v1057 = vunpack.c.h.b16 %v825
    %v1058 = vunpack.c.l.b16 %v826
    %v1059 = vunpack.c.l.b16 %v827
    %v1060 = vunpack.c.h.b16 %v827
    %v1061 = vunpack.c.l.b16 %v828
    %v1062 = vunpack.c.l.b16 %v829
    %v1063 = vunpack.c.h.b16 %v829
    %v1064 = vunpack.c.l.b16 %v830
    %v1065 = vunpack.c.l.b16 %v831
    %v1066 = vunpack.c.h.b16 %v831
    %v1067 = vunpack.c.l.b16 %v832
    %v1068 = vunpack.c.l.b16 %v833
    %v1069 = vunpack.c.h.b16 %v833
    %v1070 = vunpack.c.l.b16 %v834
    %v1071 = vunpack.c.l.b16 %v835
    %v1072 = vunpack.c.h.b16 %v835
    %v1073 = vunpack.c.l.b16 %v836
    %v1074 = vunpack.c.l.b16 %v837
    %v1075 = vunpack.c.h.b16 %v837
    %v1076 = vunpack.c.l.b16 %v838
    %v1077 = vunpack.c.l.b16 %v839
    %v1078 = vunpack.c.h.b16 %v839
    %v1079 = vunpack.c.l.b16 %v840
    %v1080 = vunpack.c.l.b16 %v841
    %v1081 = vunpack.c.h.b16 %v841
    %v1082 = vunpack.c.l.b16 %v842
    %v1083 = vunpack.c.l.b16 %v843
    %v1084 = vunpack.c.h.b16 %v843
    %v1085 = vunpack.c.l.b16 %v844
    %v1086 = vunpack.c.l.b16 %v845
    %v1087 = vunpack.c.h.b16 %v845
    %v1088 = vunpack.c.l.b16 %v846
    %v1089 = vunpack.c.l.b16 %v847
    %v1090 = vunpack.c.h.b16 %v847
    %v1091 = vunpack.c.l.b16 %v848
    %v1092 = vunpack.c.l.b16 %v849
    %v1093 = vunpack.c.h.b16 %v849
    %v1094 = vunpack.c.l.b16 %v850
    %v1095 = vunpack.c.l.b16 %v851
    %v1096 = vunpack.c.h.b16 %v851
    %v1097 = vunpack.c.l.b16 %v852
    %v1098 = vunpack.c.l.b16 %v853
    %v1099 = vunpack.c.h.b16 %v853
    %v1100 = vunpack.c.l.b16 %v854
    %v1101 = vunpack.c.l.b16 %v855
    %v1102 = vunpack.c.h.b16 %v855
    %v1103 = vunpack.c.l.b16 %v856
    %v1104 = vunpack.c.l.b16 %v857
    %v1105 = vunpack.c.h.b16 %v857
    %v1106 = vunpack.c.l.b16 %v858
    %v1107 = vunpack.c.l.b16 %v859
    %v1108 = vunpack.c.h.b16 %v859
    %v1109 = vunpack.c.l.b16 %v860
    %v1110 = vunpack.c.l.b16 %v861
    %v1111 = vunpack.c.h.b16 %v861
    %v1112 = vunpack.c.l.b16 %v862
    %v1113 = vunpack.c.l.b16 %v863
    %v1114 = vunpack.c.h.b16 %v863
    %v1115 = vunpack.c.l.b16 %v864
    %v1116 = vunpack.c.l.b16 %v865
    %v1117 = vunpack.c.h.b16 %v865
    %v1118 = vunpack.c.l.b16 %v866
    %v1119 = vunpack.c.l.b16 %v867
    %v1120 = vunpack.c.h.b16 %v867
    %v1121 = vunpack.c.l.b16 %v868
    %v1122 = vunpack.c.l.b16 %v869
    %v1123 = vunpack.c.h.b16 %v869
    %v1124 = vunpack.c.l.b16 %v870
    %v1125 = vunpack.c.l.b16 %v871
    %v1126 = vunpack.c.h.b16 %v871
    %v1127 = vunpack.c.l.b16 %v872
    %v1128 = vunpack.c.l.b16 %v873
    %v1129 = vunpack.c.h.b16 %v873
    %v1130 = vunpack.c.l.b16 %v874
    %v1131 = vunpack.c.l.b16 %v875
    %v1132 = vunpack.c.h.b16 %v875
    %v1133 = vunpack.c.l.b16 %v876
    %v1134 = vpack.c.b16 %v993, %v990
    %v1135 = vpack.c.b16 %v994, %v991
    %v1136 = vpack.c.b16 %v995, %v992
    %v1137 = vpack.c.b16 %v999, %v996
    %v1138 = vpack.c.b16 %v1000, %v997
    %v1139 = vpack.c.b16 %v1001, %v998
    %v1140 = vpack.c.b16 %v1005, %v1002
    %v1141 = vpack.c.b16 %v1006, %v1003
    %v1142 = vpack.c.b16 %v1007, %v1004
    %v1143 = vpack.c.b16 %v1011, %v1008
    %v1144 = vpack.c.b16 %v1012, %v1009
    %v1145 = vpack.c.b16 %v1013, %v1010
    %v1146 = vpack.c.b16 %v1017, %v1014
    %v1147 = vpack.c.b16 %v1018, %v1015
    %v1148 = vpack.c.b16 %v1019, %v1016
    %v1149 = vpack.c.b16 %v1023, %v1020
    %v1150 = vpack.c.b16 %v1024, %v1021
    %v1151 = vpack.c.b16 %v1025, %v1022
    %v1152 = vpack.c.b16 %v1029, %v1026
    %v1153 = vpack.c.b16 %v1030, %v1027
    %v1154 = vpack.c.b16 %v1031, %v1028
    %v1155 = vpack.c.b16 %v1035, %v1032
    %v1156 = vpack.c.b16 %v1036, %v1033
    %v1157 = vpack.c.b16 %v1037, %v1034
    %v1158 = vpack.c.b16 %v1041, %v1038
    %v1159 = vpack.c.b16 %v1042, %v1039
    %v1160 = vpack.c.b16 %v1043, %v1040
    %v1161 = vpack.c.b16 %v1047, %v1044
    %v1162 = vpack.c.b16 %v1048, %v1045
    %v1163 = vpack.c.b16 %v1049, %v1046
    %v1164 = vpack.c.b16 %v1053, %v1050
    %v1165 = vpack.c.b16 %v1054, %v1051
    %v1166 = vpack.c.b16 %v1055, %v1052
    %v1167 = vpack.c.b16 %v1059, %v1056
    %v1168 = vpack.c.b16 %v1060, %v1057
    %v1169 = vpack.c.b16 %v1061, %v1058
    %v1170 = vpack.c.b16 %v1065, %v1062
    %v1171 = vpack.c.b16 %v1066, %v1063
    %v1172 = vpack.c.b16 %v1067, %v1064
    %v1173 = vpack.c.b16 %v1071, %v1068
    %v1174 = vpack.c.b16 %v1072, %v1069
    %v1175 = vpack.c.b16 %v1073, %v1070
    %v1176 = vpack.c.b16 %v1077, %v1074
    %v1177 = vpack.c.b16 %v1078, %v1075
    %v1178 = vpack.c.b16 %v1079, %v1076
    %v1179 = vpack.c.b16 %v1083, %v1080
    %v1180 = vpack.c.b16 %v1084, %v1081
    %v1181 = vpack.c.b16 %v1085, %v1082
    %v1182 = vpack.c.b16 %v1089, %v1086
    %v1183 = vpack.c.b16 %v1090, %v1087
    %v1184 = vpack.c.b16 %v1091, %v1088
    %v1185 = vpack.c.b16 %v1095, %v1092
    %v1186 = vpack.c.b16 %v1096, %v1093
    %v1187 = vpack.c.b16 %v1097, %v1094
    %v1188 = vpack.c.b16 %v1101, %v1098
    %v1189 = vpack.c.b16 %v1102, %v1099
    %v1190 = vpack.c.b16 %v1103, %v1100
    %v1191 = vpack.c.b16 %v1107, %v1104
    %v1192 = vpack.c.b16 %v1108, %v1105
    %v1193 = vpack.c.b16 %v1109, %v1106
    %v1194 = vpack.c.b16 %v1113, %v1110
    %v1195 = vpack.c.b16 %v1114, %v1111
    %v1196 = vpack.c.b16 %v1115, %v1112
    %v1197 = vpack.c.b16 %v1119, %v1116
    %v1198 = vpack.c.b16 %v1120, %v1117
    %v1199 = vpack.c.b16 %v1121, %v1118
    %v1200 = vpack.c.b16 %v1125, %v1122
    %v1201 = vpack.c.b16 %v1126, %v1123
    %v1202 = vpack.c.b16 %v1127, %v1124
    %v1203 = vpack.c.b16 %v1131, %v1128
    %v1204 = vpack.c.b16 %v1132, %v1129
    %v1205 = vpack.c.b16 %v1133, %v1130
    %1278 = vmatprep.subr.bf16.mxu0 %v1156
    %1279 = vmatpush1.bf16.msra.mxu0 %v1155
    %1280 = vmatprep.subr.bf16.mxu0 %v1153
    %1281 = vmatpush1.bf16.msra.mxu0 %v1152
    %1282 = vmatprep.subr.bf16.mxu0 %v1150
    %1283 = vmatpush1.bf16.msra.mxu0 %v1149
    %1284 = vmatprep.subr.bf16.mxu0 %v1147
    %1285 = vmatpush1.bf16.msra.mxu0 %v1146
    %1286 = vmatprep.subr.bf16.mxu0 %v1144
    %1287 = vmatpush1.bf16.msra.mxu0 %v1143
    %1288 = vmatprep.subr.bf16.mxu0 %v1141
    %1289 = vmatpush1.bf16.msra.mxu0 %v1140
    %1290 = vmatprep.subr.bf16.mxu0 %v1138
    %1291 = vmatpush1.bf16.msra.mxu0 %v1137
    %1292 = vmatprep.subr.bf16.mxu0 %v1135
    %1293 = vmatpush1.bf16.msra.mxu0 %v1134
    %1294 = vmatprep.subr.bf16.mxu0 %v1180
    %1295 = vmatpush2.bf16.msra.mxu0 %v1179
    %1296 = vmatprep.subr.bf16.mxu0 %v1177
    %1297 = vmatpush2.bf16.msra.mxu0 %v1176
    %1298 = vmatprep.subr.bf16.mxu0 %v1174
    %1299 = vmatpush2.bf16.msra.mxu0 %v1173
    %1300 = vmatprep.subr.bf16.mxu0 %v1171
    %1301 = vmatpush2.bf16.msra.mxu0 %v1170
    %1302 = vmatprep.subr.bf16.mxu0 %v1168
    %1303 = vmatpush2.bf16.msra.mxu0 %v1167
    %1304 = vmatprep.subr.bf16.mxu0 %v1165
    %1305 = vmatpush2.bf16.msra.mxu0 %v1164
    %1306 = vmatprep.subr.bf16.mxu0 %v1162
    %1307 = vmatpush2.bf16.msra.mxu0 %v1161
    %1308 = vmatprep.subr.bf16.mxu0 %v1159
    %1309 = vmatpush2.bf16.msra.mxu0 %v1158
    %1310 = vmatprep.mubr.bf16.mxu0 %v734
    %1311 = vmatmul.mubr.bf16.gmra.mxu0 %v733
    %v1312 = vpop.f32.mrf.mxu0
    %v1313 = vadd.f32 %v882, %v1312
    %v1314 = vpop.f32.mrf.mxu0
    %v1315 = vadd.f32 %v886, %v1314
    %v1316 = vpop.f32.mrf.mxu0
    %v1317 = vadd.f32 %v882, %v1316
    %v1318 = vpop.f32.mrf.mxu0
    %v1319 = vadd.f32 %v886, %v1318
    %1320 = vmatprep.mubr.bf16.mxu0 %v737
    %1321 = vmatmul.mubr.bf16.gmra.mxu0 %v736
    %v1322 = vpop.f32.mrf.mxu0
    %v1323 = vadd.f32 %v882, %v1322
    %v1324 = vpop.f32.mrf.mxu0
    %v1325 = vadd.f32 %v886, %v1324
    %v1326 = vpop.f32.mrf.mxu0
    %v1327 = vadd.f32 %v882, %v1326
    %v1328 = vpop.f32.mrf.mxu0
    %v1329 = vadd.f32 %v886, %v1328
    %1330 = vmatprep.mubr.bf16.mxu0 %v740
    %1331 = vmatmul.mubr.bf16.gmra.mxu0 %v739
    %v1332 = vpop.f32.mrf.mxu0
    %v1333 = vadd.f32 %v882, %v1332
    %v1334 = vpop.f32.mrf.mxu0
    %v1335 = vadd.f32 %v886, %v1334
    %v1336 = vpop.f32.mrf.mxu0
    %v1337 = vadd.f32 %v882, %v1336
    %v1338 = vpop.f32.mrf.mxu0
    %v1339 = vadd.f32 %v886, %v1338
    %1340 = vmatprep.mubr.bf16.mxu0 %v743
    %1341 = vmatmul.mubr.bf16.gmra.mxu0 %v742
    %v1342 = vpop.f32.mrf.mxu0
    %v1343 = vadd.f32 %v882, %v1342
    %v1344 = vpop.f32.mrf.mxu0
    %v1345 = vadd.f32 %v886, %v1344
    %v1346 = vpop.f32.mrf.mxu0
    %v1347 = vadd.f32 %v882, %v1346
    %v1348 = vpop.f32.mrf.mxu0
    %v1349 = vadd.f32 %v886, %v1348
    %1350 = vmatprep.mubr.bf16.mxu0 %v746
    %1351 = vmatmul.mubr.bf16.gmra.mxu0 %v745
    %v1352 = vpop.f32.mrf.mxu0
    %v1353 = vadd.f32 %v882, %v1352
    %v1354 = vpop.f32.mrf.mxu0
    %v1355 = vadd.f32 %v886, %v1354
    %v1356 = vpop.f32.mrf.mxu0
    %v1357 = vadd.f32 %v882, %v1356
    %v1358 = vpop.f32.mrf.mxu0
    %v1359 = vadd.f32 %v886, %v1358
    %1360 = vmatprep.mubr.bf16.mxu0 %v749
    %1361 = vmatmul.mubr.bf16.gmra.mxu0 %v748
    %v1362 = vpop.f32.mrf.mxu0
    %v1363 = vadd.f32 %v882, %v1362
    %v1364 = vpop.f32.mrf.mxu0
    %v1365 = vadd.f32 %v886, %v1364
    %v1366 = vpop.f32.mrf.mxu0
    %v1367 = vadd.f32 %v882, %v1366
    %v1368 = vpop.f32.mrf.mxu0
    %v1369 = vadd.f32 %v886, %v1368
    %1370 = vmatprep.mubr.bf16.mxu0 %v752
    %1371 = vmatmul.mubr.bf16.gmra.mxu0 %v751
    %v1372 = vpop.f32.mrf.mxu0
    %v1373 = vadd.f32 %v882, %v1372
    %v1374 = vpop.f32.mrf.mxu0
    %v1375 = vadd.f32 %v886, %v1374
    %v1376 = vpop.f32.mrf.mxu0
    %v1377 = vadd.f32 %v882, %v1376
    %v1378 = vpop.f32.mrf.mxu0
    %v1379 = vadd.f32 %v886, %v1378
    %1380 = vmatprep.mubr.bf16.mxu0 %v755
    %1381 = vmatmul.mubr.bf16.gmra.mxu0 %v754
    %v1382 = vpop.f32.mrf.mxu0
    %v1383 = vadd.f32 %v882, %v1382
    %v1384 = vpop.f32.mrf.mxu0
    %v1385 = vadd.f32 %v886, %v1384
    %v1386 = vpop.f32.mrf.mxu0
    %v1387 = vadd.f32 %v882, %v1386
    %v1388 = vpop.f32.mrf.mxu0
    %v1389 = vadd.f32 %v886, %v1388
    %1390 = vmatprep.mubr.bf16.mxu0 %v758
    %1391 = vmatmul.mubr.bf16.gmra.mxu0 %v757
    %v1392 = vpop.f32.mrf.mxu0
    %v1393 = vadd.f32 %v882, %v1392
    %v1394 = vpop.f32.mrf.mxu0
    %v1395 = vadd.f32 %v886, %v1394
    %v1396 = vpop.f32.mrf.mxu0
    %v1397 = vadd.f32 %v882, %v1396
    %v1398 = vpop.f32.mrf.mxu0
    %v1399 = vadd.f32 %v886, %v1398
    %1400 = vmatprep.mubr.bf16.mxu0 %v761
    %1401 = vmatmul.mubr.bf16.gmra.mxu0 %v760
    %v1402 = vpop.f32.mrf.mxu0
    %v1403 = vadd.f32 %v882, %v1402
    %v1404 = vpop.f32.mrf.mxu0
    %v1405 = vadd.f32 %v886, %v1404
    %v1406 = vpop.f32.mrf.mxu0
    %v1407 = vadd.f32 %v882, %v1406
    %v1408 = vpop.f32.mrf.mxu0
    %v1409 = vadd.f32 %v886, %v1408
    %1410 = vmatprep.mubr.bf16.mxu0 %v764
    %1411 = vmatmul.mubr.bf16.gmra.mxu0 %v763
    %v1412 = vpop.f32.mrf.mxu0
    %v1413 = vadd.f32 %v882, %v1412
    %v1414 = vpop.f32.mrf.mxu0
    %v1415 = vadd.f32 %v886, %v1414
    %v1416 = vpop.f32.mrf.mxu0
    %v1417 = vadd.f32 %v882, %v1416
    %v1418 = vpop.f32.mrf.mxu0
    %v1419 = vadd.f32 %v886, %v1418
    %1420 = vmatprep.mubr.bf16.mxu0 %v767
    %1421 = vmatmul.mubr.bf16.gmra.mxu0 %v766
    %v1422 = vpop.f32.mrf.mxu0
    %v1423 = vadd.f32 %v882, %v1422
    %v1424 = vpop.f32.mrf.mxu0
    %v1425 = vadd.f32 %v886, %v1424
    %v1426 = vpop.f32.mrf.mxu0
    %v1427 = vadd.f32 %v882, %v1426
    %v1428 = vpop.f32.mrf.mxu0
    %v1429 = vadd.f32 %v886, %v1428
    %1430 = vmatprep.mubr.bf16.mxu0 %v770
    %1431 = vmatmul.mubr.bf16.gmra.mxu0 %v769
    %v1432 = vpop.f32.mrf.mxu0
    %v1433 = vadd.f32 %v882, %v1432
    %v1434 = vpop.f32.mrf.mxu0
    %v1435 = vadd.f32 %v886, %v1434
    %v1436 = vpop.f32.mrf.mxu0
    %v1437 = vadd.f32 %v882, %v1436
    %v1438 = vpop.f32.mrf.mxu0
    %v1439 = vadd.f32 %v886, %v1438
    %1440 = vmatprep.mubr.bf16.mxu0 %v773
    %1441 = vmatmul.mubr.bf16.gmra.mxu0 %v772
    %v1442 = vpop.f32.mrf.mxu0
    %v1443 = vadd.f32 %v882, %v1442
    %v1444 = vpop.f32.mrf.mxu0
    %v1445 = vadd.f32 %v886, %v1444
    %v1446 = vpop.f32.mrf.mxu0
    %v1447 = vadd.f32 %v882, %v1446
    %v1448 = vpop.f32.mrf.mxu0
    %v1449 = vadd.f32 %v886, %v1448
    %1450 = vmatprep.mubr.bf16.mxu0 %v776
    %1451 = vmatmul.mubr.bf16.gmra.mxu0 %v775
    %v1452 = vpop.f32.mrf.mxu0
    %v1453 = vadd.f32 %v882, %v1452
    %v1454 = vpop.f32.mrf.mxu0
    %v1455 = vadd.f32 %v886, %v1454
    %v1456 = vpop.f32.mrf.mxu0
    %v1457 = vadd.f32 %v882, %v1456
    %v1458 = vpop.f32.mrf.mxu0
    %v1459 = vadd.f32 %v886, %v1458
    %1460 = vmatprep.mubr.bf16.mxu0 %v779
    %1461 = vmatmul.mubr.bf16.gmra.mxu0 %v778
    %v1462 = vpop.f32.mrf.mxu0
    %v1463 = vadd.f32 %v882, %v1462
    %v1464 = vpop.f32.mrf.mxu0
    %v1465 = vadd.f32 %v886, %v1464
    %v1466 = vpop.f32.mrf.mxu0
    %v1467 = vadd.f32 %v882, %v1466
    %v1468 = vpop.f32.mrf.mxu0
    %v1469 = vadd.f32 %v886, %v1468
    %1470 = vdwg.mxu0
    %1471 = vmatprep.subr.bf16.mxu0 %v1204
    %1472 = vmatpush1.bf16.msra.mxu0 %v1203
    %1473 = vmatprep.subr.bf16.mxu0 %v1201
    %1474 = vmatpush1.bf16.msra.mxu0 %v1200
    %1475 = vmatprep.subr.bf16.mxu0 %v1198
    %1476 = vmatpush1.bf16.msra.mxu0 %v1197
    %1477 = vmatprep.subr.bf16.mxu0 %v1195
    %1478 = vmatpush1.bf16.msra.mxu0 %v1194
    %1479 = vmatprep.subr.bf16.mxu0 %v1192
    %1480 = vmatpush1.bf16.msra.mxu0 %v1191
    %1481 = vmatprep.subr.bf16.mxu0 %v1189
    %1482 = vmatpush1.bf16.msra.mxu0 %v1188
    %1483 = vmatprep.subr.bf16.mxu0 %v1186
    %1484 = vmatpush1.bf16.msra.mxu0 %v1185
    %1485 = vmatprep.subr.bf16.mxu0 %v1183
    %1486 = vmatpush1.bf16.msra.mxu0 %v1182
    %1487 = vmatprep.subr.bf16.mxu0 0
    %1488 = vmatpush2.bf16.msra.mxu0 0
    %1489 = vmatprep.subr.bf16.mxu0 0
    %1490 = vmatpush2.bf16.msra.mxu0 0
    %1491 = vmatprep.subr.bf16.mxu0 0
    %1492 = vmatpush2.bf16.msra.mxu0 0
    %1493 = vmatprep.subr.bf16.mxu0 0
    %1494 = vmatpush2.bf16.msra.mxu0 0
    %1495 = vmatprep.subr.bf16.mxu0 0
    %1496 = vmatpush2.bf16.msra.mxu0 0
    %1497 = vmatprep.subr.bf16.mxu0 0
    %1498 = vmatpush2.bf16.msra.mxu0 0
    %1499 = vmatprep.subr.bf16.mxu0 0
    %1500 = vmatpush2.bf16.msra.mxu0 0
    %1501 = vmatprep.subr.bf16.mxu0 0
    %1502 = vmatpush2.bf16.msra.mxu0 0
    %1503 = vmatprep.mubr.bf16.mxu0 0
    %1504 = vmatmul.mubr.bf16.gmra.mxu0 %v735
    %v1505 = vpop.f32.mrf.mxu0
    %v1506 = vadd.f32 %v1313, %v1505
    %v1507 = vpop.f32.mrf.mxu0
    %v1508 = vadd.f32 %v1315, %v1507
    %v1509 = vpop.f32.mrf.mxu0
    %v1510 = vadd.f32 %v1317, %v1509
    %v1511 = vpop.f32.mrf.mxu0
    %v1512 = vadd.f32 %v1319, %v1511
    %1513 = vmatprep.mubr.bf16.mxu0 0
    %1514 = vmatmul.mubr.bf16.gmra.mxu0 %v738
    %v1515 = vpop.f32.mrf.mxu0
    %v1516 = vadd.f32 %v1323, %v1515
    %v1517 = vpop.f32.mrf.mxu0
    %v1518 = vadd.f32 %v1325, %v1517
    %v1519 = vpop.f32.mrf.mxu0
    %v1520 = vadd.f32 %v1327, %v1519
    %v1521 = vpop.f32.mrf.mxu0
    %v1522 = vadd.f32 %v1329, %v1521
    %1523 = vmatprep.mubr.bf16.mxu0 0
    %1524 = vmatmul.mubr.bf16.gmra.mxu0 %v741
    %v1525 = vpop.f32.mrf.mxu0
    %v1526 = vadd.f32 %v1333, %v1525
    %v1527 = vpop.f32.mrf.mxu0
    %v1528 = vadd.f32 %v1335, %v1527
    %v1529 = vpop.f32.mrf.mxu0
    %v1530 = vadd.f32 %v1337, %v1529
    %v1531 = vpop.f32.mrf.mxu0
    %v1532 = vadd.f32 %v1339, %v1531
    %1533 = vmatprep.mubr.bf16.mxu0 0
    %1534 = vmatmul.mubr.bf16.gmra.mxu0 %v744
    %v1535 = vpop.f32.mrf.mxu0
    %v1536 = vadd.f32 %v1343, %v1535
    %v1537 = vpop.f32.mrf.mxu0
    %v1538 = vadd.f32 %v1345, %v1537
    %v1539 = vpop.f32.mrf.mxu0
    %v1540 = vadd.f32 %v1347, %v1539
    %v1541 = vpop.f32.mrf.mxu0
    %v1542 = vadd.f32 %v1349, %v1541
    %1543 = vmatprep.mubr.bf16.mxu0 0
    %1544 = vmatmul.mubr.bf16.gmra.mxu0 %v747
    %v1545 = vpop.f32.mrf.mxu0
    %v1546 = vadd.f32 %v1353, %v1545
    %v1547 = vpop.f32.mrf.mxu0
    %v1548 = vadd.f32 %v1355, %v1547
    %v1549 = vpop.f32.mrf.mxu0
    %v1550 = vadd.f32 %v1357, %v1549
    %v1551 = vpop.f32.mrf.mxu0
    %v1552 = vadd.f32 %v1359, %v1551
    %1553 = vmatprep.mubr.bf16.mxu0 0
    %1554 = vmatmul.mubr.bf16.gmra.mxu0 %v750
    %v1555 = vpop.f32.mrf.mxu0
    %v1556 = vadd.f32 %v1363, %v1555
    %v1557 = vpop.f32.mrf.mxu0
    %v1558 = vadd.f32 %v1365, %v1557
    %v1559 = vpop.f32.mrf.mxu0
    %v1560 = vadd.f32 %v1367, %v1559
    %v1561 = vpop.f32.mrf.mxu0
    %v1562 = vadd.f32 %v1369, %v1561
    %1563 = vmatprep.mubr.bf16.mxu0 0
    %1564 = vmatmul.mubr.bf16.gmra.mxu0 %v753
    %v1565 = vpop.f32.mrf.mxu0
    %v1566 = vadd.f32 %v1373, %v1565
    %v1567 = vpop.f32.mrf.mxu0
    %v1568 = vadd.f32 %v1375, %v1567
    %v1569 = vpop.f32.mrf.mxu0
    %v1570 = vadd.f32 %v1377, %v1569
    %v1571 = vpop.f32.mrf.mxu0
    %v1572 = vadd.f32 %v1379, %v1571
    %1573 = vmatprep.mubr.bf16.mxu0 0
    %1574 = vmatmul.mubr.bf16.gmra.mxu0 %v756
    %v1575 = vpop.f32.mrf.mxu0
    %v1576 = vadd.f32 %v1383, %v1575
    %v1577 = vpop.f32.mrf.mxu0
    %v1578 = vadd.f32 %v1385, %v1577
    %v1579 = vpop.f32.mrf.mxu0
    %v1580 = vadd.f32 %v1387, %v1579
    %v1581 = vpop.f32.mrf.mxu0
    %v1582 = vadd.f32 %v1389, %v1581
    %1583 = vmatprep.mubr.bf16.mxu0 0
    %1584 = vmatmul.mubr.bf16.gmra.mxu0 %v759
    %v1585 = vpop.f32.mrf.mxu0
    %v1586 = vadd.f32 %v1393, %v1585
    %v1587 = vpop.f32.mrf.mxu0
    %v1588 = vadd.f32 %v1395, %v1587
    %v1589 = vpop.f32.mrf.mxu0
    %v1590 = vadd.f32 %v1397, %v1589
    %v1591 = vpop.f32.mrf.mxu0
    %v1592 = vadd.f32 %v1399, %v1591
    %1593 = vmatprep.mubr.bf16.mxu0 0
    %1594 = vmatmul.mubr.bf16.gmra.mxu0 %v762
    %v1595 = vpop.f32.mrf.mxu0
    %v1596 = vadd.f32 %v1403, %v1595
    %v1597 = vpop.f32.mrf.mxu0
    %v1598 = vadd.f32 %v1405, %v1597
    %v1599 = vpop.f32.mrf.mxu0
    %v1600 = vadd.f32 %v1407, %v1599
    %v1601 = vpop.f32.mrf.mxu0
    %v1602 = vadd.f32 %v1409, %v1601
    %1603 = vmatprep.mubr.bf16.mxu0 0
    %1604 = vmatmul.mubr.bf16.gmra.mxu0 %v765
    %v1605 = vpop.f32.mrf.mxu0
    %v1606 = vadd.f32 %v1413, %v1605
    %v1607 = vpop.f32.mrf.mxu0
    %v1608 = vadd.f32 %v1415, %v1607
    %v1609 = vpop.f32.mrf.mxu0
    %v1610 = vadd.f32 %v1417, %v1609
    %v1611 = vpop.f32.mrf.mxu0
    %v1612 = vadd.f32 %v1419, %v1611
    %1613 = vmatprep.mubr.bf16.mxu0 0
    %1614 = vmatmul.mubr.bf16.gmra.mxu0 %v768
    %v1615 = vpop.f32.mrf.mxu0
    %v1616 = vadd.f32 %v1423, %v1615
    %v1617 = vpop.f32.mrf.mxu0
    %v1618 = vadd.f32 %v1425, %v1617
    %v1619 = vpop.f32.mrf.mxu0
    %v1620 = vadd.f32 %v1427, %v1619
    %v1621 = vpop.f32.mrf.mxu0
    %v1622 = vadd.f32 %v1429, %v1621
    %1623 = vmatprep.mubr.bf16.mxu0 0
    %1624 = vmatmul.mubr.bf16.gmra.mxu0 %v771
    %v1625 = vpop.f32.mrf.mxu0
    %v1626 = vadd.f32 %v1433, %v1625
    %v1627 = vpop.f32.mrf.mxu0
    %v1628 = vadd.f32 %v1435, %v1627
    %v1629 = vpop.f32.mrf.mxu0
    %v1630 = vadd.f32 %v1437, %v1629
    %v1631 = vpop.f32.mrf.mxu0
    %v1632 = vadd.f32 %v1439, %v1631
    %1633 = vmatprep.mubr.bf16.mxu0 0
    %1634 = vmatmul.mubr.bf16.gmra.mxu0 %v774
    %v1635 = vpop.f32.mrf.mxu0
    %v1636 = vadd.f32 %v1443, %v1635
    %v1637 = vpop.f32.mrf.mxu0
    %v1638 = vadd.f32 %v1445, %v1637
    %v1639 = vpop.f32.mrf.mxu0
    %v1640 = vadd.f32 %v1447, %v1639
    %v1641 = vpop.f32.mrf.mxu0
    %v1642 = vadd.f32 %v1449, %v1641
    %1643 = vmatprep.mubr.bf16.mxu0 0
    %1644 = vmatmul.mubr.bf16.gmra.mxu0 %v777
    %v1645 = vpop.f32.mrf.mxu0
    %v1646 = vadd.f32 %v1453, %v1645
    %v1647 = vpop.f32.mrf.mxu0
    %v1648 = vadd.f32 %v1455, %v1647
    %v1649 = vpop.f32.mrf.mxu0
    %v1650 = vadd.f32 %v1457, %v1649
    %v1651 = vpop.f32.mrf.mxu0
    %v1652 = vadd.f32 %v1459, %v1651
    %1653 = vmatprep.mubr.bf16.mxu0 0
    %1654 = vmatmul.mubr.bf16.gmra.mxu0 %v780
    %v1655 = vpop.f32.mrf.mxu0
    %v1656 = vadd.f32 %v1463, %v1655
    %v1657 = vpop.f32.mrf.mxu0
    %v1658 = vadd.f32 %v1465, %v1657
    %v1659 = vpop.f32.mrf.mxu0
    %v1660 = vadd.f32 %v1467, %v1659
    %v1661 = vpop.f32.mrf.mxu0
    %v1662 = vadd.f32 %v1469, %v1661
    %1663 = vdwg.mxu0
    %1664 = vmatprep.subr.bf16.mxu0 0
    %1665 = vmatpush1.bf16.msra.mxu0 %v1157
    %1666 = vmatprep.subr.bf16.mxu0 0
    %1667 = vmatpush1.bf16.msra.mxu0 %v1154
    %1668 = vmatprep.subr.bf16.mxu0 0
    %1669 = vmatpush1.bf16.msra.mxu0 %v1151
    %1670 = vmatprep.subr.bf16.mxu0 0
    %1671 = vmatpush1.bf16.msra.mxu0 %v1148
    %1672 = vmatprep.subr.bf16.mxu0 0
    %1673 = vmatpush1.bf16.msra.mxu0 %v1145
    %1674 = vmatprep.subr.bf16.mxu0 0
    %1675 = vmatpush1.bf16.msra.mxu0 %v1142
    %1676 = vmatprep.subr.bf16.mxu0 0
    %1677 = vmatpush1.bf16.msra.mxu0 %v1139
    %1678 = vmatprep.subr.bf16.mxu0 0
    %1679 = vmatpush1.bf16.msra.mxu0 %v1136
    %1680 = vmatprep.subr.bf16.mxu0 0
    %1681 = vmatpush2.bf16.msra.mxu0 %v1181
    %1682 = vmatprep.subr.bf16.mxu0 0
    %1683 = vmatpush2.bf16.msra.mxu0 %v1178
    %1684 = vmatprep.subr.bf16.mxu0 0
    %1685 = vmatpush2.bf16.msra.mxu0 %v1175
    %1686 = vmatprep.subr.bf16.mxu0 0
    %1687 = vmatpush2.bf16.msra.mxu0 %v1172
    %1688 = vmatprep.subr.bf16.mxu0 0
    %1689 = vmatpush2.bf16.msra.mxu0 %v1169
    %1690 = vmatprep.subr.bf16.mxu0 0
    %1691 = vmatpush2.bf16.msra.mxu0 %v1166
    %1692 = vmatprep.subr.bf16.mxu0 0
    %1693 = vmatpush2.bf16.msra.mxu0 %v1163
    %1694 = vmatprep.subr.bf16.mxu0 0
    %1695 = vmatpush2.bf16.msra.mxu0 %v1160
    %1696 = vmatprep.mubr.bf16.mxu0 %v734
    %1697 = vmatmul.mubr.bf16.gmra.mxu0 %v733
    %v1698 = vpop.f32.mrf.mxu0
    %v1699 = vadd.f32 %v890, %v1698
    %v1700 = vpop.f32.mrf.mxu0
    %v1701 = vpop.f32.mrf.mxu0
    %v1702 = vadd.f32 %v890, %v1701
    %v1703 = vpop.f32.mrf.mxu0
    %1704 = vmatprep.mubr.bf16.mxu0 %v737
    %1705 = vmatmul.mubr.bf16.gmra.mxu0 %v736
    %v1706 = vpop.f32.mrf.mxu0
    %v1707 = vadd.f32 %v890, %v1706
    %v1708 = vpop.f32.mrf.mxu0
    %v1709 = vpop.f32.mrf.mxu0
    %v1710 = vadd.f32 %v890, %v1709
    %v1711 = vpop.f32.mrf.mxu0
    %1712 = vmatprep.mubr.bf16.mxu0 %v740
    %1713 = vmatmul.mubr.bf16.gmra.mxu0 %v739
    %v1714 = vpop.f32.mrf.mxu0
    %v1715 = vadd.f32 %v890, %v1714
    %v1716 = vpop.f32.mrf.mxu0
    %v1717 = vpop.f32.mrf.mxu0
    %v1718 = vadd.f32 %v890, %v1717
    %v1719 = vpop.f32.mrf.mxu0
    %1720 = vmatprep.mubr.bf16.mxu0 %v743
    %1721 = vmatmul.mubr.bf16.gmra.mxu0 %v742
    %v1722 = vpop.f32.mrf.mxu0
    %v1723 = vadd.f32 %v890, %v1722
    %v1724 = vpop.f32.mrf.mxu0
    %v1725 = vpop.f32.mrf.mxu0
    %v1726 = vadd.f32 %v890, %v1725
    %v1727 = vpop.f32.mrf.mxu0
    %1728 = vmatprep.mubr.bf16.mxu0 %v746
    %1729 = vmatmul.mubr.bf16.gmra.mxu0 %v745
    %v1730 = vpop.f32.mrf.mxu0
    %v1731 = vadd.f32 %v890, %v1730
    %v1732 = vpop.f32.mrf.mxu0
    %v1733 = vpop.f32.mrf.mxu0
    %v1734 = vadd.f32 %v890, %v1733
    %v1735 = vpop.f32.mrf.mxu0
    %1736 = vmatprep.mubr.bf16.mxu0 %v749
    %1737 = vmatmul.mubr.bf16.gmra.mxu0 %v748
    %v1738 = vpop.f32.mrf.mxu0
    %v1739 = vadd.f32 %v890, %v1738
    %v1740 = vpop.f32.mrf.mxu0
    %v1741 = vpop.f32.mrf.mxu0
    %v1742 = vadd.f32 %v890, %v1741
    %v1743 = vpop.f32.mrf.mxu0
    %1744 = vmatprep.mubr.bf16.mxu0 %v752
    %1745 = vmatmul.mubr.bf16.gmra.mxu0 %v751
    %v1746 = vpop.f32.mrf.mxu0
    %v1747 = vadd.f32 %v890, %v1746
    %v1748 = vpop.f32.mrf.mxu0
    %v1749 = vpop.f32.mrf.mxu0
    %v1750 = vadd.f32 %v890, %v1749
    %v1751 = vpop.f32.mrf.mxu0
    %1752 = vmatprep.mubr.bf16.mxu0 %v755
    %1753 = vmatmul.mubr.bf16.gmra.mxu0 %v754
    %v1754 = vpop.f32.mrf.mxu0
    %v1755 = vadd.f32 %v890, %v1754
    %v1756 = vpop.f32.mrf.mxu0
    %v1757 = vpop.f32.mrf.mxu0
    %v1758 = vadd.f32 %v890, %v1757
    %v1759 = vpop.f32.mrf.mxu0
    %1760 = vmatprep.mubr.bf16.mxu0 %v758
    %1761 = vmatmul.mubr.bf16.gmra.mxu0 %v757
    %v1762 = vpop.f32.mrf.mxu0
    %v1763 = vadd.f32 %v890, %v1762
    %v1764 = vpop.f32.mrf.mxu0
    %v1765 = vpop.f32.mrf.mxu0
    %v1766 = vadd.f32 %v890, %v1765
    %v1767 = vpop.f32.mrf.mxu0
    %1768 = vmatprep.mubr.bf16.mxu0 %v761
    %1769 = vmatmul.mubr.bf16.gmra.mxu0 %v760
    %v1770 = vpop.f32.mrf.mxu0
    %v1771 = vadd.f32 %v890, %v1770
    %v1772 = vpop.f32.mrf.mxu0
    %v1773 = vpop.f32.mrf.mxu0
    %v1774 = vadd.f32 %v890, %v1773
    %v1775 = vpop.f32.mrf.mxu0
    %1776 = vmatprep.mubr.bf16.mxu0 %v764
    %1777 = vmatmul.mubr.bf16.gmra.mxu0 %v763
    %v1778 = vpop.f32.mrf.mxu0
    %v1779 = vadd.f32 %v890, %v1778
    %v1780 = vpop.f32.mrf.mxu0
    %v1781 = vpop.f32.mrf.mxu0
    %v1782 = vadd.f32 %v890, %v1781
    %v1783 = vpop.f32.mrf.mxu0
    %1784 = vmatprep.mubr.bf16.mxu0 %v767
    %1785 = vmatmul.mubr.bf16.gmra.mxu0 %v766
    %v1786 = vpop.f32.mrf.mxu0
    %v1787 = vadd.f32 %v890, %v1786
    %v1788 = vpop.f32.mrf.mxu0
    %v1789 = vpop.f32.mrf.mxu0
    %v1790 = vadd.f32 %v890, %v1789
    %v1791 = vpop.f32.mrf.mxu0
    %1792 = vmatprep.mubr.bf16.mxu0 %v770
    %1793 = vmatmul.mubr.bf16.gmra.mxu0 %v769
    %v1794 = vpop.f32.mrf.mxu0
    %v1795 = vadd.f32 %v890, %v1794
    %v1796 = vpop.f32.mrf.mxu0
    %v1797 = vpop.f32.mrf.mxu0
    %v1798 = vadd.f32 %v890, %v1797
    %v1799 = vpop.f32.mrf.mxu0
    %1800 = vmatprep.mubr.bf16.mxu0 %v773
    %1801 = vmatmul.mubr.bf16.gmra.mxu0 %v772
    %v1802 = vpop.f32.mrf.mxu0
    %v1803 = vadd.f32 %v890, %v1802
    %v1804 = vpop.f32.mrf.mxu0
    %v1805 = vpop.f32.mrf.mxu0
    %v1806 = vadd.f32 %v890, %v1805
    %v1807 = vpop.f32.mrf.mxu0
    %1808 = vmatprep.mubr.bf16.mxu0 %v776
    %1809 = vmatmul.mubr.bf16.gmra.mxu0 %v775
    %v1810 = vpop.f32.mrf.mxu0
    %v1811 = vadd.f32 %v890, %v1810
    %v1812 = vpop.f32.mrf.mxu0
    %v1813 = vpop.f32.mrf.mxu0
    %v1814 = vadd.f32 %v890, %v1813
    %v1815 = vpop.f32.mrf.mxu0
    %1816 = vmatprep.mubr.bf16.mxu0 %v779
    %1817 = vmatmul.mubr.bf16.gmra.mxu0 %v778
    %v1818 = vpop.f32.mrf.mxu0
    %v1819 = vadd.f32 %v890, %v1818
    %v1820 = vpop.f32.mrf.mxu0
    %v1821 = vpop.f32.mrf.mxu0
    %v1822 = vadd.f32 %v890, %v1821
    %v1823 = vpop.f32.mrf.mxu0
    %1824 = vdwg.mxu0
    %1825 = vmatprep.subr.bf16.mxu0 0
    %1826 = vmatpush1.bf16.msra.mxu0 %v1205
    %1827 = vmatprep.subr.bf16.mxu0 0
    %1828 = vmatpush1.bf16.msra.mxu0 %v1202
    %1829 = vmatprep.subr.bf16.mxu0 0
    %1830 = vmatpush1.bf16.msra.mxu0 %v1199
    %1831 = vmatprep.subr.bf16.mxu0 0
    %1832 = vmatpush1.bf16.msra.mxu0 %v1196
    %1833 = vmatprep.subr.bf16.mxu0 0
    %1834 = vmatpush1.bf16.msra.mxu0 %v1193
    %1835 = vmatprep.subr.bf16.mxu0 0
    %1836 = vmatpush1.bf16.msra.mxu0 %v1190
    %1837 = vmatprep.subr.bf16.mxu0 0
    %1838 = vmatpush1.bf16.msra.mxu0 %v1187
    %1839 = vmatprep.subr.bf16.mxu0 0
    %1840 = vmatpush1.bf16.msra.mxu0 %v1184
    %1841 = vmatprep.subr.bf16.mxu0 0
    %1842 = vmatpush2.bf16.msra.mxu0 0
    %1843 = vmatprep.subr.bf16.mxu0 0
    %1844 = vmatpush2.bf16.msra.mxu0 0
    %1845 = vmatprep.subr.bf16.mxu0 0
    %1846 = vmatpush2.bf16.msra.mxu0 0
    %1847 = vmatprep.subr.bf16.mxu0 0
    %1848 = vmatpush2.bf16.msra.mxu0 0
    %1849 = vmatprep.subr.bf16.mxu0 0
    %1850 = vmatpush2.bf16.msra.mxu0 0
    %1851 = vmatprep.subr.bf16.mxu0 0
    %1852 = vmatpush2.bf16.msra.mxu0 0
    %1853 = vmatprep.subr.bf16.mxu0 0
    %1854 = vmatpush2.bf16.msra.mxu0 0
    %1855 = vmatprep.subr.bf16.mxu0 0
    %1856 = vmatpush2.bf16.msra.mxu0 0
    %1857 = vmatprep.mubr.bf16.mxu0 0
    %1858 = vmatmul.mubr.bf16.gmra.mxu0 %v735
    %v1859 = vpop.f32.mrf.mxu0
    %v1860 = vadd.f32 %v1699, %v1859
    %v1861 = vpop.f32.mrf.mxu0
    %v1862 = vpop.f32.mrf.mxu0
    %v1863 = vadd.f32 %v1702, %v1862
    %v1864 = vpop.f32.mrf.mxu0
    %1865 = vmatprep.mubr.bf16.mxu0 0
    %1866 = vmatmul.mubr.bf16.gmra.mxu0 %v738
    %v1867 = vpop.f32.mrf.mxu0
    %v1868 = vadd.f32 %v1707, %v1867
    %v1869 = vpop.f32.mrf.mxu0
    %v1870 = vpop.f32.mrf.mxu0
    %v1871 = vadd.f32 %v1710, %v1870
    %v1872 = vpop.f32.mrf.mxu0
    %1873 = vmatprep.mubr.bf16.mxu0 0
    %1874 = vmatmul.mubr.bf16.gmra.mxu0 %v741
    %v1875 = vpop.f32.mrf.mxu0
    %v1876 = vadd.f32 %v1715, %v1875
    %v1877 = vpop.f32.mrf.mxu0
    %v1878 = vpop.f32.mrf.mxu0
    %v1879 = vadd.f32 %v1718, %v1878
    %v1880 = vpop.f32.mrf.mxu0
    %1881 = vmatprep.mubr.bf16.mxu0 0
    %1882 = vmatmul.mubr.bf16.gmra.mxu0 %v744
    %v1883 = vpop.f32.mrf.mxu0
    %v1884 = vadd.f32 %v1723, %v1883
    %v1885 = vpop.f32.mrf.mxu0
    %v1886 = vpop.f32.mrf.mxu0
    %v1887 = vadd.f32 %v1726, %v1886
    %v1888 = vpop.f32.mrf.mxu0
    %1889 = vmatprep.mubr.bf16.mxu0 0
    %1890 = vmatmul.mubr.bf16.gmra.mxu0 %v747
    %v1891 = vpop.f32.mrf.mxu0
    %v1892 = vadd.f32 %v1731, %v1891
    %v1893 = vpop.f32.mrf.mxu0
    %v1894 = vpop.f32.mrf.mxu0
    %v1895 = vadd.f32 %v1734, %v1894
    %v1896 = vpop.f32.mrf.mxu0
    %1897 = vmatprep.mubr.bf16.mxu0 0
    %1898 = vmatmul.mubr.bf16.gmra.mxu0 %v750
    %v1899 = vpop.f32.mrf.mxu0
    %v1900 = vadd.f32 %v1739, %v1899
    %v1901 = vpop.f32.mrf.mxu0
    %v1902 = vpop.f32.mrf.mxu0
    %v1903 = vadd.f32 %v1742, %v1902
    %v1904 = vpop.f32.mrf.mxu0
    %1905 = vmatprep.mubr.bf16.mxu0 0
    %1906 = vmatmul.mubr.bf16.gmra.mxu0 %v753
    %v1907 = vpop.f32.mrf.mxu0
    %v1908 = vadd.f32 %v1747, %v1907
    %v1909 = vpop.f32.mrf.mxu0
    %v1910 = vpop.f32.mrf.mxu0
    %v1911 = vadd.f32 %v1750, %v1910
    %v1912 = vpop.f32.mrf.mxu0
    %1913 = vmatprep.mubr.bf16.mxu0 0
    %1914 = vmatmul.mubr.bf16.gmra.mxu0 %v756
    %v1915 = vpop.f32.mrf.mxu0
    %v1916 = vadd.f32 %v1755, %v1915
    %v1917 = vpop.f32.mrf.mxu0
    %v1918 = vpop.f32.mrf.mxu0
    %v1919 = vadd.f32 %v1758, %v1918
    %v1920 = vpop.f32.mrf.mxu0
    %1921 = vmatprep.mubr.bf16.mxu0 0
    %1922 = vmatmul.mubr.bf16.gmra.mxu0 %v759
    %v1923 = vpop.f32.mrf.mxu0
    %v1924 = vadd.f32 %v1763, %v1923
    %v1925 = vpop.f32.mrf.mxu0
    %v1926 = vpop.f32.mrf.mxu0
    %v1927 = vadd.f32 %v1766, %v1926
    %v1928 = vpop.f32.mrf.mxu0
    %1929 = vmatprep.mubr.bf16.mxu0 0
    %1930 = vmatmul.mubr.bf16.gmra.mxu0 %v762
    %v1931 = vpop.f32.mrf.mxu0
    %v1932 = vadd.f32 %v1771, %v1931
    %v1933 = vpop.f32.mrf.mxu0
    %v1934 = vpop.f32.mrf.mxu0
    %v1935 = vadd.f32 %v1774, %v1934
    %v1936 = vpop.f32.mrf.mxu0
    %1937 = vmatprep.mubr.bf16.mxu0 0
    %1938 = vmatmul.mubr.bf16.gmra.mxu0 %v765
    %v1939 = vpop.f32.mrf.mxu0
    %v1940 = vadd.f32 %v1779, %v1939
    %v1941 = vpop.f32.mrf.mxu0
    %v1942 = vpop.f32.mrf.mxu0
    %v1943 = vadd.f32 %v1782, %v1942
    %v1944 = vpop.f32.mrf.mxu0
    %1945 = vmatprep.mubr.bf16.mxu0 0
    %1946 = vmatmul.mubr.bf16.gmra.mxu0 %v768
    %v1947 = vpop.f32.mrf.mxu0
    %v1948 = vadd.f32 %v1787, %v1947
    %v1949 = vpop.f32.mrf.mxu0
    %v1950 = vpop.f32.mrf.mxu0
    %v1951 = vadd.f32 %v1790, %v1950
    %v1952 = vpop.f32.mrf.mxu0
    %1953 = vmatprep.mubr.bf16.mxu0 0
    %1954 = vmatmul.mubr.bf16.gmra.mxu0 %v771
    %v1955 = vpop.f32.mrf.mxu0
    %v1956 = vadd.f32 %v1795, %v1955
    %v1957 = vpop.f32.mrf.mxu0
    %v1958 = vpop.f32.mrf.mxu0
    %v1959 = vadd.f32 %v1798, %v1958
    %v1960 = vpop.f32.mrf.mxu0
    %1961 = vmatprep.mubr.bf16.mxu0 0
    %1962 = vmatmul.mubr.bf16.gmra.mxu0 %v774
    %v1963 = vpop.f32.mrf.mxu0
    %v1964 = vadd.f32 %v1803, %v1963
    %v1965 = vpop.f32.mrf.mxu0
    %v1966 = vpop.f32.mrf.mxu0
    %v1967 = vadd.f32 %v1806, %v1966
    %v1968 = vpop.f32.mrf.mxu0
    %1969 = vmatprep.mubr.bf16.mxu0 0
    %1970 = vmatmul.mubr.bf16.gmra.mxu0 %v777
    %v1971 = vpop.f32.mrf.mxu0
    %v1972 = vadd.f32 %v1811, %v1971
    %v1973 = vpop.f32.mrf.mxu0
    %v1974 = vpop.f32.mrf.mxu0
    %v1975 = vadd.f32 %v1814, %v1974
    %v1976 = vpop.f32.mrf.mxu0
    %1977 = vmatprep.mubr.bf16.mxu0 0
    %1978 = vmatmul.mubr.bf16.gmra.mxu0 %v780
    %v1979 = vpop.f32.mrf.mxu0
    %v1980 = vadd.f32 %v1819, %v1979
    %v1981 = vpop.f32.mrf.mxu0
    %v1982 = vpop.f32.mrf.mxu0
    %v1983 = vadd.f32 %v1822, %v1982
    %v1984 = vpop.f32.mrf.mxu0
    %1985 = vdwg.mxu0
    %v1986 = vmax.f32 %v1506, 0.0
    %v1987 = vmax.f32 %v1508, 0.0
    %v1988 = vmax.f32 %v1860, 0.0
    %v1989 = vmax.f32 %v1510, 0.0
    %v1990 = vmax.f32 %v1512, 0.0
    %v1991 = vmax.f32 %v1863, 0.0
    %v1992 = vmax.f32 %v1516, 0.0
    %v1993 = vmax.f32 %v1518, 0.0
    %v1994 = vmax.f32 %v1868, 0.0
    %v1995 = vmax.f32 %v1520, 0.0
    %v1996 = vmax.f32 %v1522, 0.0
    %v1997 = vmax.f32 %v1871, 0.0
    %v1998 = vmax.f32 %v1526, 0.0
    %v1999 = vmax.f32 %v1528, 0.0
    %v2000 = vmax.f32 %v1876, 0.0
    %v2001 = vmax.f32 %v1530, 0.0
    %v2002 = vmax.f32 %v1532, 0.0
    %v2003 = vmax.f32 %v1879, 0.0
    %v2004 = vmax.f32 %v1536, 0.0
    %v2005 = vmax.f32 %v1538, 0.0
    %v2006 = vmax.f32 %v1884, 0.0
    %v2007 = vmax.f32 %v1540, 0.0
    %v2008 = vmax.f32 %v1542, 0.0
    %v2009 = vmax.f32 %v1887, 0.0
    %v2010 = vmax.f32 %v1546, 0.0
    %v2011 = vmax.f32 %v1548, 0.0
    %v2012 = vmax.f32 %v1892, 0.0
    %v2013 = vmax.f32 %v1550, 0.0
    %v2014 = vmax.f32 %v1552, 0.0
    %v2015 = vmax.f32 %v1895, 0.0
    %v2016 = vmax.f32 %v1556, 0.0
    %v2017 = vmax.f32 %v1558, 0.0
    %v2018 = vmax.f32 %v1900, 0.0
    %v2019 = vmax.f32 %v1560, 0.0
    %v2020 = vmax.f32 %v1562, 0.0
    %v2021 = vmax.f32 %v1903, 0.0
    %v2022 = vmax.f32 %v1566, 0.0
    %v2023 = vmax.f32 %v1568, 0.0
    %v2024 = vmax.f32 %v1908, 0.0
    %v2025 = vmax.f32 %v1570, 0.0
    %v2026 = vmax.f32 %v1572, 0.0
    %v2027 = vmax.f32 %v1911, 0.0
    %v2028 = vmax.f32 %v1576, 0.0
    %v2029 = vmax.f32 %v1578, 0.0
    %v2030 = vmax.f32 %v1916, 0.0
    %v2031 = vmax.f32 %v1580, 0.0
    %v2032 = vmax.f32 %v1582, 0.0
    %v2033 = vmax.f32 %v1919, 0.0
    %v2034 = vmax.f32 %v1586, 0.0
    %v2035 = vmax.f32 %v1588, 0.0
    %v2036 = vmax.f32 %v1924, 0.0
    %v2037 = vmax.f32 %v1590, 0.0
    %v2038 = vmax.f32 %v1592, 0.0
    %v2039 = vmax.f32 %v1927, 0.0
    %v2040 = vmax.f32 %v1596, 0.0
    %v2041 = vmax.f32 %v1598, 0.0
    %v2042 = vmax.f32 %v1932, 0.0
    %v2043 = vmax.f32 %v1600, 0.0
    %v2044 = vmax.f32 %v1602, 0.0
    %v2045 = vmax.f32 %v1935, 0.0
    %v2046 = vmax.f32 %v1606, 0.0
    %v2047 = vmax.f32 %v1608, 0.0
    %v2048 = vmax.f32 %v1940, 0.0
    %v2049 = vmax.f32 %v1610, 0.0
    %v2050 = vmax.f32 %v1612, 0.0
    %v2051 = vmax.f32 %v1943, 0.0
    %v2052 = vmax.f32 %v1616, 0.0
    %v2053 = vmax.f32 %v1618, 0.0
    %v2054 = vmax.f32 %v1948, 0.0
    %v2055 = vmax.f32 %v1620, 0.0
    %v2056 = vmax.f32 %v1622, 0.0
    %v2057 = vmax.f32 %v1951, 0.0
    %v2058 = vmax.f32 %v1626, 0.0
    %v2059 = vmax.f32 %v1628, 0.0
    %v2060 = vmax.f32 %v1956, 0.0
    %v2061 = vmax.f32 %v1630, 0.0
    %v2062 = vmax.f32 %v1632, 0.0
    %v2063 = vmax.f32 %v1959, 0.0
    %v2064 = vmax.f32 %v1636, 0.0
    %v2065 = vmax.f32 %v1638, 0.0
    %v2066 = vmax.f32 %v1964, 0.0
    %v2067 = vmax.f32 %v1640, 0.0
    %v2068 = vmax.f32 %v1642, 0.0
    %v2069 = vmax.f32 %v1967, 0.0
    %v2070 = vmax.f32 %v1646, 0.0
    %v2071 = vmax.f32 %v1648, 0.0
    %v2072 = vmax.f32 %v1972, 0.0
    %v2073 = vmax.f32 %v1650, 0.0
    %v2074 = vmax.f32 %v1652, 0.0
    %v2075 = vmax.f32 %v1975, 0.0
    %v2076 = vmax.f32 %v1656, 0.0
    %v2077 = vmax.f32 %v1658, 0.0
    %v2078 = vmax.f32 %v1980, 0.0
    %v2079 = vmax.f32 %v1660, 0.0
    %v2080 = vmax.f32 %v1662, 0.0
    %v2081 = vmax.f32 %v1983, 0.0
    %v2082 = vpack.c.bf16 %v1989, %v1986
    %v2083 = vpack.c.bf16 %v1990, %v1987
    %v2084 = vpack.c.bf16 %v1991, %v1988
    %v2085 = vpack.c.bf16 %v1995, %v1992
    %v2086 = vpack.c.bf16 %v1996, %v1993
    %v2087 = vpack.c.bf16 %v1997, %v1994
    %v2088 = vpack.c.bf16 %v2001, %v1998
    %v2089 = vpack.c.bf16 %v2002, %v1999
    %v2090 = vpack.c.bf16 %v2003, %v2000
    %v2091 = vpack.c.bf16 %v2007, %v2004
    %v2092 = vpack.c.bf16 %v2008, %v2005
    %v2093 = vpack.c.bf16 %v2009, %v2006
    %v2094 = vpack.c.bf16 %v2013, %v2010
    %v2095 = vpack.c.bf16 %v2014, %v2011
    %v2096 = vpack.c.bf16 %v2015, %v2012
    %v2097 = vpack.c.bf16 %v2019, %v2016
    %v2098 = vpack.c.bf16 %v2020, %v2017
    %v2099 = vpack.c.bf16 %v2021, %v2018
    %v2100 = vpack.c.bf16 %v2025, %v2022
    %v2101 = vpack.c.bf16 %v2026, %v2023
    %v2102 = vpack.c.bf16 %v2027, %v2024
    %v2103 = vpack.c.bf16 %v2031, %v2028
    %v2104 = vpack.c.bf16 %v2032, %v2029
    %v2105 = vpack.c.bf16 %v2033, %v2030
    %v2106 = vpack.c.bf16 %v2037, %v2034
    %v2107 = vpack.c.bf16 %v2038, %v2035
    %v2108 = vpack.c.bf16 %v2039, %v2036
    %v2109 = vpack.c.bf16 %v2043, %v2040
    %v2110 = vpack.c.bf16 %v2044, %v2041
    %v2111 = vpack.c.bf16 %v2045, %v2042
    %v2112 = vpack.c.bf16 %v2049, %v2046
    %v2113 = vpack.c.bf16 %v2050, %v2047
    %v2114 = vpack.c.bf16 %v2051, %v2048
    %v2115 = vpack.c.bf16 %v2055, %v2052
    %v2116 = vpack.c.bf16 %v2056, %v2053
    %v2117 = vpack.c.bf16 %v2057, %v2054
    %v2118 = vpack.c.bf16 %v2061, %v2058
    %v2119 = vpack.c.bf16 %v2062, %v2059
    %v2120 = vpack.c.bf16 %v2063, %v2060
    %v2121 = vpack.c.bf16 %v2067, %v2064
    %v2122 = vpack.c.bf16 %v2068, %v2065
    %v2123 = vpack.c.bf16 %v2069, %v2066
    %v2124 = vpack.c.bf16 %v2073, %v2070
    %v2125 = vpack.c.bf16 %v2074, %v2071
    %v2126 = vpack.c.bf16 %v2075, %v2072
    %v2127 = vpack.c.bf16 %v2079, %v2076
    %v2128 = vpack.c.bf16 %v2080, %v2077
    %v2129 = vpack.c.bf16 %v2081, %v2078
    %v2130 = vld [vmem:[#allocation5] sm:$0xff]
    %v2131 = vld [vmem:[#allocation5 + $0x8] sm:$0xf]
    %v2132 = vld [vmem:[#allocation5 + $0xc] sm:$0xff]
    %v2133 = vld [vmem:[#allocation5 + $0x14] sm:$0xf]
    %v2134 = vld [vmem:[#allocation5 + $0x18] sm:$0xff]
    %v2135 = vld [vmem:[#allocation5 + $0x20] sm:$0xf]
    %v2136 = vld [vmem:[#allocation5 + $0x24] sm:$0xff]
    %v2137 = vld [vmem:[#allocation5 + $0x2c] sm:$0xf]
    %v2138 = vld [vmem:[#allocation5 + $0x30] sm:$0xff]
    %v2139 = vld [vmem:[#allocation5 + $0x38] sm:$0xf]
    %v2140 = vld [vmem:[#allocation5 + $0x3c] sm:$0xff]
    %v2141 = vld [vmem:[#allocation5 + $0x44] sm:$0xf]
    %v2142 = vld [vmem:[#allocation5 + $0x48] sm:$0xff]
    %v2143 = vld [vmem:[#allocation5 + $0x50] sm:$0xf]
    %v2144 = vld [vmem:[#allocation5 + $0x54] sm:$0xff]
    %v2145 = vld [vmem:[#allocation5 + $0x5c] sm:$0xf]
    %v2146 = vld [vmem:[#allocation5 + $0x60] sm:$0xff]
    %v2147 = vld [vmem:[#allocation5 + $0x68] sm:$0xf]
    %v2148 = vld [vmem:[#allocation5 + $0x6c] sm:$0xff]
    %v2149 = vld [vmem:[#allocation5 + $0x74] sm:$0xf]
    %v2150 = vld [vmem:[#allocation5 + $0x78] sm:$0xff]
    %v2151 = vld [vmem:[#allocation5 + $0x80] sm:$0xf]
    %v2152 = vld [vmem:[#allocation5 + $0x84] sm:$0xff]
    %v2153 = vld [vmem:[#allocation5 + $0x8c] sm:$0xf]
    %v2154 = vld [vmem:[#allocation5 + $0x90] sm:$0xff]
    %v2155 = vld [vmem:[#allocation5 + $0x98] sm:$0xf]
    %v2156 = vld [vmem:[#allocation5 + $0x9c] sm:$0xff]
    %v2157 = vld [vmem:[#allocation5 + $0xa4] sm:$0xf]
    %v2158 = vld [vmem:[#allocation5 + $0xa8] sm:$0xff]
    %v2159 = vld [vmem:[#allocation5 + $0xb0] sm:$0xf]
    %v2160 = vld [vmem:[#allocation5 + $0xb4] sm:$0xff]
    %v2161 = vld [vmem:[#allocation5 + $0xbc] sm:$0xf]
    %v2162 = vld [vmem:[#allocation5 + $0xc0] sm:$0xff]
    %v2163 = vld [vmem:[#allocation5 + $0xc8] sm:$0xf]
    %v2164 = vld [vmem:[#allocation5 + $0xcc] sm:$0xff]
    %v2165 = vld [vmem:[#allocation5 + $0xd4] sm:$0xf]
    %v2166 = vld [vmem:[#allocation5 + $0xd8] sm:$0xff]
    %v2167 = vld [vmem:[#allocation5 + $0xe0] sm:$0xf]
    %v2168 = vld [vmem:[#allocation5 + $0xe4] sm:$0xff]
    %v2169 = vld [vmem:[#allocation5 + $0xec] sm:$0xf]
    %v2170 = vld [vmem:[#allocation5 + $0xf0] sm:$0xff]
    %v2171 = vld [vmem:[#allocation5 + $0xf8] sm:$0xf]
    %v2172 = vld [vmem:[#allocation5 + $0xfc] sm:$0xff]
    %v2173 = vld [vmem:[#allocation5 + $0x104] sm:$0xf]
    %v2174 = vld [vmem:[#allocation5 + $0x108] sm:$0xff]
    %v2175 = vld [vmem:[#allocation5 + $0x110] sm:$0xf]
    %v2176 = vld [vmem:[#allocation5 + $0x114] sm:$0xff]
    %v2177 = vld [vmem:[#allocation5 + $0x11c] sm:$0xf]
    %v2178 = vld [vmem:[#allocation5 + $0x120] sm:$0xff]
    %v2179 = vld [vmem:[#allocation5 + $0x128] sm:$0xf]
    %v2180 = vld [vmem:[#allocation5 + $0x12c] sm:$0xff]
    %v2181 = vld [vmem:[#allocation5 + $0x134] sm:$0xf]
    %v2182 = vld [vmem:[#allocation5 + $0x138] sm:$0xff]
    %v2183 = vld [vmem:[#allocation5 + $0x140] sm:$0xf]
    %v2184 = vld [vmem:[#allocation5 + $0x144] sm:$0xff]
    %v2185 = vld [vmem:[#allocation5 + $0x14c] sm:$0xf]
    %v2186 = vld [vmem:[#allocation5 + $0x150] sm:$0xff]
    %v2187 = vld [vmem:[#allocation5 + $0x158] sm:$0xf]
    %v2188 = vld [vmem:[#allocation5 + $0x15c] sm:$0xff]
    %v2189 = vld [vmem:[#allocation5 + $0x164] sm:$0xf]
    %v2190 = vld [vmem:[#allocation5 + $0x168] sm:$0xff]
    %v2191 = vld [vmem:[#allocation5 + $0x170] sm:$0xf]
    %v2192 = vld [vmem:[#allocation5 + $0x174] sm:$0xff]
    %v2193 = vld [vmem:[#allocation5 + $0x17c] sm:$0xf]
    %v2194 = vld [vmem:[#allocation5 + $0x180] sm:$0xff]
    %v2195 = vld [vmem:[#allocation5 + $0x188] sm:$0xf]
    %v2196 = vld [vmem:[#allocation5 + $0x18c] sm:$0xff]
    %v2197 = vld [vmem:[#allocation5 + $0x194] sm:$0xf]
    %v2198 = vld [vmem:[#allocation5 + $0x198] sm:$0xff]
    %v2199 = vld [vmem:[#allocation5 + $0x1a0] sm:$0xf]
    %v2200 = vld [vmem:[#allocation5 + $0x1a4] sm:$0xff]
    %v2201 = vld [vmem:[#allocation5 + $0x1ac] sm:$0xf]
    %v2202 = vld [vmem:[#allocation5 + $0x1b0] sm:$0xff]
    %v2203 = vld [vmem:[#allocation5 + $0x1b8] sm:$0xf]
    %v2204 = vld [vmem:[#allocation5 + $0x1bc] sm:$0xff]
    %v2205 = vld [vmem:[#allocation5 + $0x1c4] sm:$0xf]
    %v2206 = vld [vmem:[#allocation5 + $0x1c8] sm:$0xff]
    %v2207 = vld [vmem:[#allocation5 + $0x1d0] sm:$0xf]
    %v2208 = vld [vmem:[#allocation5 + $0x1d4] sm:$0xff]
    %v2209 = vld [vmem:[#allocation5 + $0x1dc] sm:$0xf]
    %v2210 = vld [vmem:[#allocation5 + $0x1e0] sm:$0xff]
    %v2211 = vld [vmem:[#allocation5 + $0x1e8] sm:$0xf]
    %v2212 = vld [vmem:[#allocation5 + $0x1ec] sm:$0xff]
    %v2213 = vld [vmem:[#allocation5 + $0x1f4] sm:$0xf]
    %v2214 = vld [vmem:[#allocation5 + $0x1f8] sm:$0xff]
    %v2215 = vld [vmem:[#allocation5 + $0x200] sm:$0xf]
    %v2216 = vld [vmem:[#allocation5 + $0x204] sm:$0xff]
    %v2217 = vld [vmem:[#allocation5 + $0x20c] sm:$0xf]
    %v2218 = vld [vmem:[#allocation5 + $0x210] sm:$0xff]
    %v2219 = vld [vmem:[#allocation5 + $0x218] sm:$0xf]
    %v2220 = vld [vmem:[#allocation5 + $0x21c] sm:$0xff]
    %v2221 = vld [vmem:[#allocation5 + $0x224] sm:$0xf]
    %v2222 = vld [vmem:[#allocation5 + $0x228] sm:$0xff]
    %v2223 = vld [vmem:[#allocation5 + $0x230] sm:$0xf]
    %v2224 = vld [vmem:[#allocation5 + $0x234] sm:$0xff]
    %v2225 = vld [vmem:[#allocation5 + $0x23c] sm:$0xf]
    %v2226 = vld [vmem:[%s6] sm:$0x7]
    %v2228 = vlaneseq
    %v2229 = vshrl.u32 %v2228, 7
    %v2230 = vsub.s32 0, %v2229
    %v2231 = vrot.slane %v2226, %v2230
    %v2232 = vlaneseq
    %v2233 = vshrl.u32 %v2232, 7
    %v2234 = vsub.s32 1, %v2233
    %v2235 = vrot.slane %v2226, %v2234
    %v2236 = vlaneseq
    %v2237 = vshrl.u32 %v2236, 7
    %v2238 = vsub.s32 2, %v2237
    %v2239 = vrot.slane %v2226, %v2238
    %v2339 = vunpack.c.l.b16 %v2130
    %v2340 = vunpack.c.h.b16 %v2130
    %v2341 = vunpack.c.l.b16 %v2131
    %v2342 = vunpack.c.l.b16 %v2132
    %v2343 = vunpack.c.h.b16 %v2132
    %v2344 = vunpack.c.l.b16 %v2133
    %v2345 = vunpack.c.l.b16 %v2134
    %v2346 = vunpack.c.h.b16 %v2134
    %v2347 = vunpack.c.l.b16 %v2135
    %v2348 = vunpack.c.l.b16 %v2136
    %v2349 = vunpack.c.h.b16 %v2136
    %v2350 = vunpack.c.l.b16 %v2137
    %v2351 = vunpack.c.l.b16 %v2138
    %v2352 = vunpack.c.h.b16 %v2138
    %v2353 = vunpack.c.l.b16 %v2139
    %v2354 = vunpack.c.l.b16 %v2140
    %v2355 = vunpack.c.h.b16 %v2140
    %v2356 = vunpack.c.l.b16 %v2141
    %v2357 = vunpack.c.l.b16 %v2142
    %v2358 = vunpack.c.h.b16 %v2142
    %v2359 = vunpack.c.l.b16 %v2143
    %v2360 = vunpack.c.l.b16 %v2144
    %v2361 = vunpack.c.h.b16 %v2144
    %v2362 = vunpack.c.l.b16 %v2145
    %v2363 = vunpack.c.l.b16 %v2146
    %v2364 = vunpack.c.h.b16 %v2146
    %v2365 = vunpack.c.l.b16 %v2147
    %v2366 = vunpack.c.l.b16 %v2148
    %v2367 = vunpack.c.h.b16 %v2148
    %v2368 = vunpack.c.l.b16 %v2149
    %v2369 = vunpack.c.l.b16 %v2150
    %v2370 = vunpack.c.h.b16 %v2150
    %v2371 = vunpack.c.l.b16 %v2151
    %v2372 = vunpack.c.l.b16 %v2152
    %v2373 = vunpack.c.h.b16 %v2152
    %v2374 = vunpack.c.l.b16 %v2153
    %v2375 = vunpack.c.l.b16 %v2154
    %v2376 = vunpack.c.h.b16 %v2154
    %v2377 = vunpack.c.l.b16 %v2155
    %v2378 = vunpack.c.l.b16 %v2156
    %v2379 = vunpack.c.h.b16 %v2156
    %v2380 = vunpack.c.l.b16 %v2157
    %v2381 = vunpack.c.l.b16 %v2158
    %v2382 = vunpack.c.h.b16 %v2158
    %v2383 = vunpack.c.l.b16 %v2159
    %v2384 = vunpack.c.l.b16 %v2160
    %v2385 = vunpack.c.h.b16 %v2160
    %v2386 = vunpack.c.l.b16 %v2161
    %v2387 = vunpack.c.l.b16 %v2162
    %v2388 = vunpack.c.h.b16 %v2162
    %v2389 = vunpack.c.l.b16 %v2163
    %v2390 = vunpack.c.l.b16 %v2164
    %v2391 = vunpack.c.h.b16 %v2164
    %v2392 = vunpack.c.l.b16 %v2165
    %v2393 = vunpack.c.l.b16 %v2166
    %v2394 = vunpack.c.h.b16 %v2166
    %v2395 = vunpack.c.l.b16 %v2167
    %v2396 = vunpack.c.l.b16 %v2168
    %v2397 = vunpack.c.h.b16 %v2168
    %v2398 = vunpack.c.l.b16 %v2169
    %v2399 = vunpack.c.l.b16 %v2170
    %v2400 = vunpack.c.h.b16 %v2170
    %v2401 = vunpack.c.l.b16 %v2171
    %v2402 = vunpack.c.l.b16 %v2172
    %v2403 = vunpack.c.h.b16 %v2172
    %v2404 = vunpack.c.l.b16 %v2173
    %v2405 = vunpack.c.l.b16 %v2174
    %v2406 = vunpack.c.h.b16 %v2174
    %v2407 = vunpack.c.l.b16 %v2175
    %v2408 = vunpack.c.l.b16 %v2176
    %v2409 = vunpack.c.h.b16 %v2176
    %v2410 = vunpack.c.l.b16 %v2177
    %v2411 = vunpack.c.l.b16 %v2178
    %v2412 = vunpack.c.h.b16 %v2178
    %v2413 = vunpack.c.l.b16 %v2179
    %v2414 = vunpack.c.l.b16 %v2180
    %v2415 = vunpack.c.h.b16 %v2180
    %v2416 = vunpack.c.l.b16 %v2181
    %v2417 = vunpack.c.l.b16 %v2182
    %v2418 = vunpack.c.h.b16 %v2182
    %v2419 = vunpack.c.l.b16 %v2183
    %v2420 = vunpack.c.l.b16 %v2184
    %v2421 = vunpack.c.h.b16 %v2184
    %v2422 = vunpack.c.l.b16 %v2185
    %v2423 = vunpack.c.l.b16 %v2186
    %v2424 = vunpack.c.h.b16 %v2186
    %v2425 = vunpack.c.l.b16 %v2187
    %v2426 = vunpack.c.l.b16 %v2188
    %v2427 = vunpack.c.h.b16 %v2188
    %v2428 = vunpack.c.l.b16 %v2189
    %v2429 = vunpack.c.l.b16 %v2190
    %v2430 = vunpack.c.h.b16 %v2190
    %v2431 = vunpack.c.l.b16 %v2191
    %v2432 = vunpack.c.l.b16 %v2192
    %v2433 = vunpack.c.h.b16 %v2192
    %v2434 = vunpack.c.l.b16 %v2193
    %v2435 = vunpack.c.l.b16 %v2194
    %v2436 = vunpack.c.h.b16 %v2194
    %v2437 = vunpack.c.l.b16 %v2195
    %v2438 = vunpack.c.l.b16 %v2196
    %v2439 = vunpack.c.h.b16 %v2196
    %v2440 = vunpack.c.l.b16 %v2197
    %v2441 = vunpack.c.l.b16 %v2198
    %v2442 = vunpack.c.h.b16 %v2198
    %v2443 = vunpack.c.l.b16 %v2199
    %v2444 = vunpack.c.l.b16 %v2200
    %v2445 = vunpack.c.h.b16 %v2200
    %v2446 = vunpack.c.l.b16 %v2201
    %v2447 = vunpack.c.l.b16 %v2202
    %v2448 = vunpack.c.h.b16 %v2202
    %v2449 = vunpack.c.l.b16 %v2203
    %v2450 = vunpack.c.l.b16 %v2204
    %v2451 = vunpack.c.h.b16 %v2204
    %v2452 = vunpack.c.l.b16 %v2205
    %v2453 = vunpack.c.l.b16 %v2206
    %v2454 = vunpack.c.h.b16 %v2206
    %v2455 = vunpack.c.l.b16 %v2207
    %v2456 = vunpack.c.l.b16 %v2208
    %v2457 = vunpack.c.h.b16 %v2208
    %v2458 = vunpack.c.l.b16 %v2209
    %v2459 = vunpack.c.l.b16 %v2210
    %v2460 = vunpack.c.h.b16 %v2210
    %v2461 = vunpack.c.l.b16 %v2211
    %v2462 = vunpack.c.l.b16 %v2212
    %v2463 = vunpack.c.h.b16 %v2212
    %v2464 = vunpack.c.l.b16 %v2213
    %v2465 = vunpack.c.l.b16 %v2214
    %v2466 = vunpack.c.h.b16 %v2214
    %v2467 = vunpack.c.l.b16 %v2215
    %v2468 = vunpack.c.l.b16 %v2216
    %v2469 = vunpack.c.h.b16 %v2216
    %v2470 = vunpack.c.l.b16 %v2217
    %v2471 = vunpack.c.l.b16 %v2218
    %v2472 = vunpack.c.h.b16 %v2218
    %v2473 = vunpack.c.l.b16 %v2219
    %v2474 = vunpack.c.l.b16 %v2220
    %v2475 = vunpack.c.h.b16 %v2220
    %v2476 = vunpack.c.l.b16 %v2221
    %v2477 = vunpack.c.l.b16 %v2222
    %v2478 = vunpack.c.h.b16 %v2222
    %v2479 = vunpack.c.l.b16 %v2223
    %v2480 = vunpack.c.l.b16 %v2224
    %v2481 = vunpack.c.h.b16 %v2224
    %v2482 = vunpack.c.l.b16 %v2225
    %v2483 = vpack.c.b16 %v2342, %v2339
    %v2484 = vpack.c.b16 %v2343, %v2340
    %v2485 = vpack.c.b16 %v2344, %v2341
    %v2486 = vpack.c.b16 %v2348, %v2345
    %v2487 = vpack.c.b16 %v2349, %v2346
    %v2488 = vpack.c.b16 %v2350, %v2347
    %v2489 = vpack.c.b16 %v2354, %v2351
    %v2490 = vpack.c.b16 %v2355, %v2352
    %v2491 = vpack.c.b16 %v2356, %v2353
    %v2492 = vpack.c.b16 %v2360, %v2357
    %v2493 = vpack.c.b16 %v2361, %v2358
    %v2494 = vpack.c.b16 %v2362, %v2359
    %v2495 = vpack.c.b16 %v2366, %v2363
    %v2496 = vpack.c.b16 %v2367, %v2364
    %v2497 = vpack.c.b16 %v2368, %v2365
    %v2498 = vpack.c.b16 %v2372, %v2369
    %v2499 = vpack.c.b16 %v2373, %v2370
    %v2500 = vpack.c.b16 %v2374, %v2371
    %v2501 = vpack.c.b16 %v2378, %v2375
    %v2502 = vpack.c.b16 %v2379, %v2376
    %v2503 = vpack.c.b16 %v2380, %v2377
    %v2504 = vpack.c.b16 %v2384, %v2381
    %v2505 = vpack.c.b16 %v2385, %v2382
    %v2506 = vpack.c.b16 %v2386, %v2383
    %v2507 = vpack.c.b16 %v2390, %v2387
    %v2508 = vpack.c.b16 %v2391, %v2388
    %v2509 = vpack.c.b16 %v2392, %v2389
    %v2510 = vpack.c.b16 %v2396, %v2393
    %v2511 = vpack.c.b16 %v2397, %v2394
    %v2512 = vpack.c.b16 %v2398, %v2395
    %v2513 = vpack.c.b16 %v2402, %v2399
    %v2514 = vpack.c.b16 %v2403, %v2400
    %v2515 = vpack.c.b16 %v2404, %v2401
    %v2516 = vpack.c.b16 %v2408, %v2405
    %v2517 = vpack.c.b16 %v2409, %v2406
    %v2518 = vpack.c.b16 %v2410, %v2407
    %v2519 = vpack.c.b16 %v2414, %v2411
    %v2520 = vpack.c.b16 %v2415, %v2412
    %v2521 = vpack.c.b16 %v2416, %v2413
    %v2522 = vpack.c.b16 %v2420, %v2417
    %v2523 = vpack.c.b16 %v2421, %v2418
    %v2524 = vpack.c.b16 %v2422, %v2419
    %v2525 = vpack.c.b16 %v2426, %v2423
    %v2526 = vpack.c.b16 %v2427, %v2424
    %v2527 = vpack.c.b16 %v2428, %v2425
    %v2528 = vpack.c.b16 %v2432, %v2429
    %v2529 = vpack.c.b16 %v2433, %v2430
    %v2530 = vpack.c.b16 %v2434, %v2431
    %v2531 = vpack.c.b16 %v2438, %v2435
    %v2532 = vpack.c.b16 %v2439, %v2436
    %v2533 = vpack.c.b16 %v2440, %v2437
    %v2534 = vpack.c.b16 %v2444, %v2441
    %v2535 = vpack.c.b16 %v2445, %v2442
    %v2536 = vpack.c.b16 %v2446, %v2443
    %v2537 = vpack.c.b16 %v2450, %v2447
    %v2538 = vpack.c.b16 %v2451, %v2448
    %v2539 = vpack.c.b16 %v2452, %v2449
    %v2540 = vpack.c.b16 %v2456, %v2453
    %v2541 = vpack.c.b16 %v2457, %v2454
    %v2542 = vpack.c.b16 %v2458, %v2455
    %v2543 = vpack.c.b16 %v2462, %v2459
    %v2544 = vpack.c.b16 %v2463, %v2460
    %v2545 = vpack.c.b16 %v2464, %v2461
    %v2546 = vpack.c.b16 %v2468, %v2465
    %v2547 = vpack.c.b16 %v2469, %v2466
    %v2548 = vpack.c.b16 %v2470, %v2467
    %v2549 = vpack.c.b16 %v2474, %v2471
    %v2550 = vpack.c.b16 %v2475, %v2472
    %v2551 = vpack.c.b16 %v2476, %v2473
    %v2552 = vpack.c.b16 %v2480, %v2477
    %v2553 = vpack.c.b16 %v2481, %v2478
    %v2554 = vpack.c.b16 %v2482, %v2479
    %2627 = vmatprep.subr.bf16.mxu0 %v2505
    %2628 = vmatpush1.bf16.msra.mxu0 %v2504
    %2629 = vmatprep.subr.bf16.mxu0 %v2502
    %2630 = vmatpush1.bf16.msra.mxu0 %v2501
    %2631 = vmatprep.subr.bf16.mxu0 %v2499
    %2632 = vmatpush1.bf16.msra.mxu0 %v2498
    %2633 = vmatprep.subr.bf16.mxu0 %v2496
    %2634 = vmatpush1.bf16.msra.mxu0 %v2495
    %2635 = vmatprep.subr.bf16.mxu0 %v2493
    %2636 = vmatpush1.bf16.msra.mxu0 %v2492
    %2637 = vmatprep.subr.bf16.mxu0 %v2490
    %2638 = vmatpush1.bf16.msra.mxu0 %v2489
    %2639 = vmatprep.subr.bf16.mxu0 %v2487
    %2640 = vmatpush1.bf16.msra.mxu0 %v2486
    %2641 = vmatprep.subr.bf16.mxu0 %v2484
    %2642 = vmatpush1.bf16.msra.mxu0 %v2483
    %2643 = vmatprep.subr.bf16.mxu0 %v2529
    %2644 = vmatpush2.bf16.msra.mxu0 %v2528
    %2645 = vmatprep.subr.bf16.mxu0 %v2526
    %2646 = vmatpush2.bf16.msra.mxu0 %v2525
    %2647 = vmatprep.subr.bf16.mxu0 %v2523
    %2648 = vmatpush2.bf16.msra.mxu0 %v2522
    %2649 = vmatprep.subr.bf16.mxu0 %v2520
    %2650 = vmatpush2.bf16.msra.mxu0 %v2519
    %2651 = vmatprep.subr.bf16.mxu0 %v2517
    %2652 = vmatpush2.bf16.msra.mxu0 %v2516
    %2653 = vmatprep.subr.bf16.mxu0 %v2514
    %2654 = vmatpush2.bf16.msra.mxu0 %v2513
    %2655 = vmatprep.subr.bf16.mxu0 %v2511
    %2656 = vmatpush2.bf16.msra.mxu0 %v2510
    %2657 = vmatprep.subr.bf16.mxu0 %v2508
    %2658 = vmatpush2.bf16.msra.mxu0 %v2507
    %2659 = vmatprep.mubr.bf16.mxu0 %v2083
    %2660 = vmatmul.mubr.bf16.gmra.mxu0 %v2082
    %v2661 = vpop.f32.mrf.mxu0
    %v2662 = vadd.f32 %v2231, %v2661
    %v2663 = vpop.f32.mrf.mxu0
    %v2664 = vadd.f32 %v2235, %v2663
    %v2665 = vpop.f32.mrf.mxu0
    %v2666 = vadd.f32 %v2231, %v2665
    %v2667 = vpop.f32.mrf.mxu0
    %v2668 = vadd.f32 %v2235, %v2667
    %2669 = vmatprep.mubr.bf16.mxu0 %v2086
    %2670 = vmatmul.mubr.bf16.gmra.mxu0 %v2085
    %v2671 = vpop.f32.mrf.mxu0
    %v2672 = vadd.f32 %v2231, %v2671
    %v2673 = vpop.f32.mrf.mxu0
    %v2674 = vadd.f32 %v2235, %v2673
    %v2675 = vpop.f32.mrf.mxu0
    %v2676 = vadd.f32 %v2231, %v2675
    %v2677 = vpop.f32.mrf.mxu0
    %v2678 = vadd.f32 %v2235, %v2677
    %2679 = vmatprep.mubr.bf16.mxu0 %v2089
    %2680 = vmatmul.mubr.bf16.gmra.mxu0 %v2088
    %v2681 = vpop.f32.mrf.mxu0
    %v2682 = vadd.f32 %v2231, %v2681
    %v2683 = vpop.f32.mrf.mxu0
    %v2684 = vadd.f32 %v2235, %v2683
    %v2685 = vpop.f32.mrf.mxu0
    %v2686 = vadd.f32 %v2231, %v2685
    %v2687 = vpop.f32.mrf.mxu0
    %v2688 = vadd.f32 %v2235, %v2687
    %2689 = vmatprep.mubr.bf16.mxu0 %v2092
    %2690 = vmatmul.mubr.bf16.gmra.mxu0 %v2091
    %v2691 = vpop.f32.mrf.mxu0
    %v2692 = vadd.f32 %v2231, %v2691
    %v2693 = vpop.f32.mrf.mxu0
    %v2694 = vadd.f32 %v2235, %v2693
    %v2695 = vpop.f32.mrf.mxu0
    %v2696 = vadd.f32 %v2231, %v2695
    %v2697 = vpop.f32.mrf.mxu0
    %v2698 = vadd.f32 %v2235, %v2697
    %2699 = vmatprep.mubr.bf16.mxu0 %v2095
    %2700 = vmatmul.mubr.bf16.gmra.mxu0 %v2094
    %v2701 = vpop.f32.mrf.mxu0
    %v2702 = vadd.f32 %v2231, %v2701
    %v2703 = vpop.f32.mrf.mxu0
    %v2704 = vadd.f32 %v2235, %v2703
    %v2705 = vpop.f32.mrf.mxu0
    %v2706 = vadd.f32 %v2231, %v2705
    %v2707 = vpop.f32.mrf.mxu0
    %v2708 = vadd.f32 %v2235, %v2707
    %2709 = vmatprep.mubr.bf16.mxu0 %v2098
    %2710 = vmatmul.mubr.bf16.gmra.mxu0 %v2097
    %v2711 = vpop.f32.mrf.mxu0
    %v2712 = vadd.f32 %v2231, %v2711
    %v2713 = vpop.f32.mrf.mxu0
    %v2714 = vadd.f32 %v2235, %v2713
    %v2715 = vpop.f32.mrf.mxu0
    %v2716 = vadd.f32 %v2231, %v2715
    %v2717 = vpop.f32.mrf.mxu0
    %v2718 = vadd.f32 %v2235, %v2717
    %2719 = vmatprep.mubr.bf16.mxu0 %v2101
    %2720 = vmatmul.mubr.bf16.gmra.mxu0 %v2100
    %v2721 = vpop.f32.mrf.mxu0
    %v2722 = vadd.f32 %v2231, %v2721
    %v2723 = vpop.f32.mrf.mxu0
    %v2724 = vadd.f32 %v2235, %v2723
    %v2725 = vpop.f32.mrf.mxu0
    %v2726 = vadd.f32 %v2231, %v2725
    %v2727 = vpop.f32.mrf.mxu0
    %v2728 = vadd.f32 %v2235, %v2727
    %2729 = vmatprep.mubr.bf16.mxu0 %v2104
    %2730 = vmatmul.mubr.bf16.gmra.mxu0 %v2103
    %v2731 = vpop.f32.mrf.mxu0
    %v2732 = vadd.f32 %v2231, %v2731
    %v2733 = vpop.f32.mrf.mxu0
    %v2734 = vadd.f32 %v2235, %v2733
    %v2735 = vpop.f32.mrf.mxu0
    %v2736 = vadd.f32 %v2231, %v2735
    %v2737 = vpop.f32.mrf.mxu0
    %v2738 = vadd.f32 %v2235, %v2737
    %2739 = vmatprep.mubr.bf16.mxu0 %v2107
    %2740 = vmatmul.mubr.bf16.gmra.mxu0 %v2106
    %v2741 = vpop.f32.mrf.mxu0
    %v2742 = vadd.f32 %v2231, %v2741
    %v2743 = vpop.f32.mrf.mxu0
    %v2744 = vadd.f32 %v2235, %v2743
    %v2745 = vpop.f32.mrf.mxu0
    %v2746 = vadd.f32 %v2231, %v2745
    %v2747 = vpop.f32.mrf.mxu0
    %v2748 = vadd.f32 %v2235, %v2747
    %2749 = vmatprep.mubr.bf16.mxu0 %v2110
    %2750 = vmatmul.mubr.bf16.gmra.mxu0 %v2109
    %v2751 = vpop.f32.mrf.mxu0
    %v2752 = vadd.f32 %v2231, %v2751
    %v2753 = vpop.f32.mrf.mxu0
    %v2754 = vadd.f32 %v2235, %v2753
    %v2755 = vpop.f32.mrf.mxu0
    %v2756 = vadd.f32 %v2231, %v2755
    %v2757 = vpop.f32.mrf.mxu0
    %v2758 = vadd.f32 %v2235, %v2757
    %2759 = vmatprep.mubr.bf16.mxu0 %v2113
    %2760 = vmatmul.mubr.bf16.gmra.mxu0 %v2112
    %v2761 = vpop.f32.mrf.mxu0
    %v2762 = vadd.f32 %v2231, %v2761
    %v2763 = vpop.f32.mrf.mxu0
    %v2764 = vadd.f32 %v2235, %v2763
    %v2765 = vpop.f32.mrf.mxu0
    %v2766 = vadd.f32 %v2231, %v2765
    %v2767 = vpop.f32.mrf.mxu0
    %v2768 = vadd.f32 %v2235, %v2767
    %2769 = vmatprep.mubr.bf16.mxu0 %v2116
    %2770 = vmatmul.mubr.bf16.gmra.mxu0 %v2115
    %v2771 = vpop.f32.mrf.mxu0
    %v2772 = vadd.f32 %v2231, %v2771
    %v2773 = vpop.f32.mrf.mxu0
    %v2774 = vadd.f32 %v2235, %v2773
    %v2775 = vpop.f32.mrf.mxu0
    %v2776 = vadd.f32 %v2231, %v2775
    %v2777 = vpop.f32.mrf.mxu0
    %v2778 = vadd.f32 %v2235, %v2777
    %2779 = vmatprep.mubr.bf16.mxu0 %v2119
    %2780 = vmatmul.mubr.bf16.gmra.mxu0 %v2118
    %v2781 = vpop.f32.mrf.mxu0
    %v2782 = vadd.f32 %v2231, %v2781
    %v2783 = vpop.f32.mrf.mxu0
    %v2784 = vadd.f32 %v2235, %v2783
    %v2785 = vpop.f32.mrf.mxu0
    %v2786 = vadd.f32 %v2231, %v2785
    %v2787 = vpop.f32.mrf.mxu0
    %v2788 = vadd.f32 %v2235, %v2787
    %2789 = vmatprep.mubr.bf16.mxu0 %v2122
    %2790 = vmatmul.mubr.bf16.gmra.mxu0 %v2121
    %v2791 = vpop.f32.mrf.mxu0
    %v2792 = vadd.f32 %v2231, %v2791
    %v2793 = vpop.f32.mrf.mxu0
    %v2794 = vadd.f32 %v2235, %v2793
    %v2795 = vpop.f32.mrf.mxu0
    %v2796 = vadd.f32 %v2231, %v2795
    %v2797 = vpop.f32.mrf.mxu0
    %v2798 = vadd.f32 %v2235, %v2797
    %2799 = vmatprep.mubr.bf16.mxu0 %v2125
    %2800 = vmatmul.mubr.bf16.gmra.mxu0 %v2124
    %v2801 = vpop.f32.mrf.mxu0
    %v2802 = vadd.f32 %v2231, %v2801
    %v2803 = vpop.f32.mrf.mxu0
    %v2804 = vadd.f32 %v2235, %v2803
    %v2805 = vpop.f32.mrf.mxu0
    %v2806 = vadd.f32 %v2231, %v2805
    %v2807 = vpop.f32.mrf.mxu0
    %v2808 = vadd.f32 %v2235, %v2807
    %2809 = vmatprep.mubr.bf16.mxu0 %v2128
    %2810 = vmatmul.mubr.bf16.gmra.mxu0 %v2127
    %v2811 = vpop.f32.mrf.mxu0
    %v2812 = vadd.f32 %v2231, %v2811
    %v2813 = vpop.f32.mrf.mxu0
    %v2814 = vadd.f32 %v2235, %v2813
    %v2815 = vpop.f32.mrf.mxu0
    %v2816 = vadd.f32 %v2231, %v2815
    %v2817 = vpop.f32.mrf.mxu0
    %v2818 = vadd.f32 %v2235, %v2817
    %2819 = vdwg.mxu0
    %2820 = vmatprep.subr.bf16.mxu0 %v2553
    %2821 = vmatpush1.bf16.msra.mxu0 %v2552
    %2822 = vmatprep.subr.bf16.mxu0 %v2550
    %2823 = vmatpush1.bf16.msra.mxu0 %v2549
    %2824 = vmatprep.subr.bf16.mxu0 %v2547
    %2825 = vmatpush1.bf16.msra.mxu0 %v2546
    %2826 = vmatprep.subr.bf16.mxu0 %v2544
    %2827 = vmatpush1.bf16.msra.mxu0 %v2543
    %2828 = vmatprep.subr.bf16.mxu0 %v2541
    %2829 = vmatpush1.bf16.msra.mxu0 %v2540
    %2830 = vmatprep.subr.bf16.mxu0 %v2538
    %2831 = vmatpush1.bf16.msra.mxu0 %v2537
    %2832 = vmatprep.subr.bf16.mxu0 %v2535
    %2833 = vmatpush1.bf16.msra.mxu0 %v2534
    %2834 = vmatprep.subr.bf16.mxu0 %v2532
    %2835 = vmatpush1.bf16.msra.mxu0 %v2531
    %2836 = vmatprep.subr.bf16.mxu0 0
    %2837 = vmatpush2.bf16.msra.mxu0 0
    %2838 = vmatprep.subr.bf16.mxu0 0
    %2839 = vmatpush2.bf16.msra.mxu0 0
    %2840 = vmatprep.subr.bf16.mxu0 0
    %2841 = vmatpush2.bf16.msra.mxu0 0
    %2842 = vmatprep.subr.bf16.mxu0 0
    %2843 = vmatpush2.bf16.msra.mxu0 0
    %2844 = vmatprep.subr.bf16.mxu0 0
    %2845 = vmatpush2.bf16.msra.mxu0 0
    %2846 = vmatprep.subr.bf16.mxu0 0
    %2847 = vmatpush2.bf16.msra.mxu0 0
    %2848 = vmatprep.subr.bf16.mxu0 0
    %2849 = vmatpush2.bf16.msra.mxu0 0
    %2850 = vmatprep.subr.bf16.mxu0 0
    %2851 = vmatpush2.bf16.msra.mxu0 0
    %2852 = vmatprep.mubr.bf16.mxu0 0
    %2853 = vmatmul.mubr.bf16.gmra.mxu0 %v2084
    %v2854 = vpop.f32.mrf.mxu0
    %v2855 = vadd.f32 %v2662, %v2854
    %v2856 = vpop.f32.mrf.mxu0
    %v2857 = vadd.f32 %v2664, %v2856
    %v2858 = vpop.f32.mrf.mxu0
    %v2859 = vadd.f32 %v2666, %v2858
    %v2860 = vpop.f32.mrf.mxu0
    %v2861 = vadd.f32 %v2668, %v2860
    %2862 = vmatprep.mubr.bf16.mxu0 0
    %2863 = vmatmul.mubr.bf16.gmra.mxu0 %v2087
    %v2864 = vpop.f32.mrf.mxu0
    %v2865 = vadd.f32 %v2672, %v2864
    %v2866 = vpop.f32.mrf.mxu0
    %v2867 = vadd.f32 %v2674, %v2866
    %v2868 = vpop.f32.mrf.mxu0
    %v2869 = vadd.f32 %v2676, %v2868
    %v2870 = vpop.f32.mrf.mxu0
    %v2871 = vadd.f32 %v2678, %v2870
    %2872 = vmatprep.mubr.bf16.mxu0 0
    %2873 = vmatmul.mubr.bf16.gmra.mxu0 %v2090
    %v2874 = vpop.f32.mrf.mxu0
    %v2875 = vadd.f32 %v2682, %v2874
    %v2876 = vpop.f32.mrf.mxu0
    %v2877 = vadd.f32 %v2684, %v2876
    %v2878 = vpop.f32.mrf.mxu0
    %v2879 = vadd.f32 %v2686, %v2878
    %v2880 = vpop.f32.mrf.mxu0
    %v2881 = vadd.f32 %v2688, %v2880
    %2882 = vmatprep.mubr.bf16.mxu0 0
    %2883 = vmatmul.mubr.bf16.gmra.mxu0 %v2093
    %v2884 = vpop.f32.mrf.mxu0
    %v2885 = vadd.f32 %v2692, %v2884
    %v2886 = vpop.f32.mrf.mxu0
    %v2887 = vadd.f32 %v2694, %v2886
    %v2888 = vpop.f32.mrf.mxu0
    %v2889 = vadd.f32 %v2696, %v2888
    %v2890 = vpop.f32.mrf.mxu0
    %v2891 = vadd.f32 %v2698, %v2890
    %2892 = vmatprep.mubr.bf16.mxu0 0
    %2893 = vmatmul.mubr.bf16.gmra.mxu0 %v2096
    %v2894 = vpop.f32.mrf.mxu0
    %v2895 = vadd.f32 %v2702, %v2894
    %v2896 = vpop.f32.mrf.mxu0
    %v2897 = vadd.f32 %v2704, %v2896
    %v2898 = vpop.f32.mrf.mxu0
    %v2899 = vadd.f32 %v2706, %v2898
    %v2900 = vpop.f32.mrf.mxu0
    %v2901 = vadd.f32 %v2708, %v2900
    %2902 = vmatprep.mubr.bf16.mxu0 0
    %2903 = vmatmul.mubr.bf16.gmra.mxu0 %v2099
    %v2904 = vpop.f32.mrf.mxu0
    %v2905 = vadd.f32 %v2712, %v2904
    %v2906 = vpop.f32.mrf.mxu0
    %v2907 = vadd.f32 %v2714, %v2906
    %v2908 = vpop.f32.mrf.mxu0
    %v2909 = vadd.f32 %v2716, %v2908
    %v2910 = vpop.f32.mrf.mxu0
    %v2911 = vadd.f32 %v2718, %v2910
    %2912 = vmatprep.mubr.bf16.mxu0 0
    %2913 = vmatmul.mubr.bf16.gmra.mxu0 %v2102
    %v2914 = vpop.f32.mrf.mxu0
    %v2915 = vadd.f32 %v2722, %v2914
    %v2916 = vpop.f32.mrf.mxu0
    %v2917 = vadd.f32 %v2724, %v2916
    %v2918 = vpop.f32.mrf.mxu0
    %v2919 = vadd.f32 %v2726, %v2918
    %v2920 = vpop.f32.mrf.mxu0
    %v2921 = vadd.f32 %v2728, %v2920
    %2922 = vmatprep.mubr.bf16.mxu0 0
    %2923 = vmatmul.mubr.bf16.gmra.mxu0 %v2105
    %v2924 = vpop.f32.mrf.mxu0
    %v2925 = vadd.f32 %v2732, %v2924
    %v2926 = vpop.f32.mrf.mxu0
    %v2927 = vadd.f32 %v2734, %v2926
    %v2928 = vpop.f32.mrf.mxu0
    %v2929 = vadd.f32 %v2736, %v2928
    %v2930 = vpop.f32.mrf.mxu0
    %v2931 = vadd.f32 %v2738, %v2930
    %2932 = vmatprep.mubr.bf16.mxu0 0
    %2933 = vmatmul.mubr.bf16.gmra.mxu0 %v2108
    %v2934 = vpop.f32.mrf.mxu0
    %v2935 = vadd.f32 %v2742, %v2934
    %v2936 = vpop.f32.mrf.mxu0
    %v2937 = vadd.f32 %v2744, %v2936
    %v2938 = vpop.f32.mrf.mxu0
    %v2939 = vadd.f32 %v2746, %v2938
    %v2940 = vpop.f32.mrf.mxu0
    %v2941 = vadd.f32 %v2748, %v2940
    %2942 = vmatprep.mubr.bf16.mxu0 0
    %2943 = vmatmul.mubr.bf16.gmra.mxu0 %v2111
    %v2944 = vpop.f32.mrf.mxu0
    %v2945 = vadd.f32 %v2752, %v2944
    %v2946 = vpop.f32.mrf.mxu0
    %v2947 = vadd.f32 %v2754, %v2946
    %v2948 = vpop.f32.mrf.mxu0
    %v2949 = vadd.f32 %v2756, %v2948
    %v2950 = vpop.f32.mrf.mxu0
    %v2951 = vadd.f32 %v2758, %v2950
    %2952 = vmatprep.mubr.bf16.mxu0 0
    %2953 = vmatmul.mubr.bf16.gmra.mxu0 %v2114
    %v2954 = vpop.f32.mrf.mxu0
    %v2955 = vadd.f32 %v2762, %v2954
    %v2956 = vpop.f32.mrf.mxu0
    %v2957 = vadd.f32 %v2764, %v2956
    %v2958 = vpop.f32.mrf.mxu0
    %v2959 = vadd.f32 %v2766, %v2958
    %v2960 = vpop.f32.mrf.mxu0
    %v2961 = vadd.f32 %v2768, %v2960
    %2962 = vmatprep.mubr.bf16.mxu0 0
    %2963 = vmatmul.mubr.bf16.gmra.mxu0 %v2117
    %v2964 = vpop.f32.mrf.mxu0
    %v2965 = vadd.f32 %v2772, %v2964
    %v2966 = vpop.f32.mrf.mxu0
    %v2967 = vadd.f32 %v2774, %v2966
    %v2968 = vpop.f32.mrf.mxu0
    %v2969 = vadd.f32 %v2776, %v2968
    %v2970 = vpop.f32.mrf.mxu0
    %v2971 = vadd.f32 %v2778, %v2970
    %2972 = vmatprep.mubr.bf16.mxu0 0
    %2973 = vmatmul.mubr.bf16.gmra.mxu0 %v2120
    %v2974 = vpop.f32.mrf.mxu0
    %v2975 = vadd.f32 %v2782, %v2974
    %v2976 = vpop.f32.mrf.mxu0
    %v2977 = vadd.f32 %v2784, %v2976
    %v2978 = vpop.f32.mrf.mxu0
    %v2979 = vadd.f32 %v2786, %v2978
    %v2980 = vpop.f32.mrf.mxu0
    %v2981 = vadd.f32 %v2788, %v2980
    %2982 = vmatprep.mubr.bf16.mxu0 0
    %2983 = vmatmul.mubr.bf16.gmra.mxu0 %v2123
    %v2984 = vpop.f32.mrf.mxu0
    %v2985 = vadd.f32 %v2792, %v2984
    %v2986 = vpop.f32.mrf.mxu0
    %v2987 = vadd.f32 %v2794, %v2986
    %v2988 = vpop.f32.mrf.mxu0
    %v2989 = vadd.f32 %v2796, %v2988
    %v2990 = vpop.f32.mrf.mxu0
    %v2991 = vadd.f32 %v2798, %v2990
    %2992 = vmatprep.mubr.bf16.mxu0 0
    %2993 = vmatmul.mubr.bf16.gmra.mxu0 %v2126
    %v2994 = vpop.f32.mrf.mxu0
    %v2995 = vadd.f32 %v2802, %v2994
    %v2996 = vpop.f32.mrf.mxu0
    %v2997 = vadd.f32 %v2804, %v2996
    %v2998 = vpop.f32.mrf.mxu0
    %v2999 = vadd.f32 %v2806, %v2998
    %v3000 = vpop.f32.mrf.mxu0
    %v3001 = vadd.f32 %v2808, %v3000
    %3002 = vmatprep.mubr.bf16.mxu0 0
    %3003 = vmatmul.mubr.bf16.gmra.mxu0 %v2129
    %v3004 = vpop.f32.mrf.mxu0
    %v3005 = vadd.f32 %v2812, %v3004
    %v3006 = vpop.f32.mrf.mxu0
    %v3007 = vadd.f32 %v2814, %v3006
    %v3008 = vpop.f32.mrf.mxu0
    %v3009 = vadd.f32 %v2816, %v3008
    %v3010 = vpop.f32.mrf.mxu0
    %v3011 = vadd.f32 %v2818, %v3010
    %3012 = vdwg.mxu0
    %3013 = vmatprep.subr.bf16.mxu0 0
    %3014 = vmatpush1.bf16.msra.mxu0 %v2506
    %3015 = vmatprep.subr.bf16.mxu0 0
    %3016 = vmatpush1.bf16.msra.mxu0 %v2503
    %3017 = vmatprep.subr.bf16.mxu0 0
    %3018 = vmatpush1.bf16.msra.mxu0 %v2500
    %3019 = vmatprep.subr.bf16.mxu0 0
    %3020 = vmatpush1.bf16.msra.mxu0 %v2497
    %3021 = vmatprep.subr.bf16.mxu0 0
    %3022 = vmatpush1.bf16.msra.mxu0 %v2494
    %3023 = vmatprep.subr.bf16.mxu0 0
    %3024 = vmatpush1.bf16.msra.mxu0 %v2491
    %3025 = vmatprep.subr.bf16.mxu0 0
    %3026 = vmatpush1.bf16.msra.mxu0 %v2488
    %3027 = vmatprep.subr.bf16.mxu0 0
    %3028 = vmatpush1.bf16.msra.mxu0 %v2485
    %3029 = vmatprep.subr.bf16.mxu0 0
    %3030 = vmatpush2.bf16.msra.mxu0 %v2530
    %3031 = vmatprep.subr.bf16.mxu0 0
    %3032 = vmatpush2.bf16.msra.mxu0 %v2527
    %3033 = vmatprep.subr.bf16.mxu0 0
    %3034 = vmatpush2.bf16.msra.mxu0 %v2524
    %3035 = vmatprep.subr.bf16.mxu0 0
    %3036 = vmatpush2.bf16.msra.mxu0 %v2521
    %3037 = vmatprep.subr.bf16.mxu0 0
    %3038 = vmatpush2.bf16.msra.mxu0 %v2518
    %3039 = vmatprep.subr.bf16.mxu0 0
    %3040 = vmatpush2.bf16.msra.mxu0 %v2515
    %3041 = vmatprep.subr.bf16.mxu0 0
    %3042 = vmatpush2.bf16.msra.mxu0 %v2512
    %3043 = vmatprep.subr.bf16.mxu0 0
    %3044 = vmatpush2.bf16.msra.mxu0 %v2509
    %3045 = vmatprep.mubr.bf16.mxu0 %v2083
    %3046 = vmatmul.mubr.bf16.gmra.mxu0 %v2082
    %v3047 = vpop.f32.mrf.mxu0
    %v3048 = vadd.f32 %v2239, %v3047
    %v3049 = vpop.f32.mrf.mxu0
    %v3050 = vpop.f32.mrf.mxu0
    %v3051 = vadd.f32 %v2239, %v3050
    %v3052 = vpop.f32.mrf.mxu0
    %3053 = vmatprep.mubr.bf16.mxu0 %v2086
    %3054 = vmatmul.mubr.bf16.gmra.mxu0 %v2085
    %v3055 = vpop.f32.mrf.mxu0
    %v3056 = vadd.f32 %v2239, %v3055
    %v3057 = vpop.f32.mrf.mxu0
    %v3058 = vpop.f32.mrf.mxu0
    %v3059 = vadd.f32 %v2239, %v3058
    %v3060 = vpop.f32.mrf.mxu0
    %3061 = vmatprep.mubr.bf16.mxu0 %v2089
    %3062 = vmatmul.mubr.bf16.gmra.mxu0 %v2088
    %v3063 = vpop.f32.mrf.mxu0
    %v3064 = vadd.f32 %v2239, %v3063
    %v3065 = vpop.f32.mrf.mxu0
    %v3066 = vpop.f32.mrf.mxu0
    %v3067 = vadd.f32 %v2239, %v3066
    %v3068 = vpop.f32.mrf.mxu0
    %3069 = vmatprep.mubr.bf16.mxu0 %v2092
    %3070 = vmatmul.mubr.bf16.gmra.mxu0 %v2091
    %v3071 = vpop.f32.mrf.mxu0
    %v3072 = vadd.f32 %v2239, %v3071
    %v3073 = vpop.f32.mrf.mxu0
    %v3074 = vpop.f32.mrf.mxu0
    %v3075 = vadd.f32 %v2239, %v3074
    %v3076 = vpop.f32.mrf.mxu0
    %3077 = vmatprep.mubr.bf16.mxu0 %v2095
    %3078 = vmatmul.mubr.bf16.gmra.mxu0 %v2094
    %v3079 = vpop.f32.mrf.mxu0
    %v3080 = vadd.f32 %v2239, %v3079
    %v3081 = vpop.f32.mrf.mxu0
    %v3082 = vpop.f32.mrf.mxu0
    %v3083 = vadd.f32 %v2239, %v3082
    %v3084 = vpop.f32.mrf.mxu0
    %3085 = vmatprep.mubr.bf16.mxu0 %v2098
    %3086 = vmatmul.mubr.bf16.gmra.mxu0 %v2097
    %v3087 = vpop.f32.mrf.mxu0
    %v3088 = vadd.f32 %v2239, %v3087
    %v3089 = vpop.f32.mrf.mxu0
    %v3090 = vpop.f32.mrf.mxu0
    %v3091 = vadd.f32 %v2239, %v3090
    %v3092 = vpop.f32.mrf.mxu0
    %3093 = vmatprep.mubr.bf16.mxu0 %v2101
    %3094 = vmatmul.mubr.bf16.gmra.mxu0 %v2100
    %v3095 = vpop.f32.mrf.mxu0
    %v3096 = vadd.f32 %v2239, %v3095
    %v3097 = vpop.f32.mrf.mxu0
    %v3098 = vpop.f32.mrf.mxu0
    %v3099 = vadd.f32 %v2239, %v3098
    %v3100 = vpop.f32.mrf.mxu0
    %3101 = vmatprep.mubr.bf16.mxu0 %v2104
    %3102 = vmatmul.mubr.bf16.gmra.mxu0 %v2103
    %v3103 = vpop.f32.mrf.mxu0
    %v3104 = vadd.f32 %v2239, %v3103
    %v3105 = vpop.f32.mrf.mxu0
    %v3106 = vpop.f32.mrf.mxu0
    %v3107 = vadd.f32 %v2239, %v3106
    %v3108 = vpop.f32.mrf.mxu0
    %3109 = vmatprep.mubr.bf16.mxu0 %v2107
    %3110 = vmatmul.mubr.bf16.gmra.mxu0 %v2106
    %v3111 = vpop.f32.mrf.mxu0
    %v3112 = vadd.f32 %v2239, %v3111
    %v3113 = vpop.f32.mrf.mxu0
    %v3114 = vpop.f32.mrf.mxu0
    %v3115 = vadd.f32 %v2239, %v3114
    %v3116 = vpop.f32.mrf.mxu0
    %3117 = vmatprep.mubr.bf16.mxu0 %v2110
    %3118 = vmatmul.mubr.bf16.gmra.mxu0 %v2109
    %v3119 = vpop.f32.mrf.mxu0
    %v3120 = vadd.f32 %v2239, %v3119
    %v3121 = vpop.f32.mrf.mxu0
    %v3122 = vpop.f32.mrf.mxu0
    %v3123 = vadd.f32 %v2239, %v3122
    %v3124 = vpop.f32.mrf.mxu0
    %3125 = vmatprep.mubr.bf16.mxu0 %v2113
    %3126 = vmatmul.mubr.bf16.gmra.mxu0 %v2112
    %v3127 = vpop.f32.mrf.mxu0
    %v3128 = vadd.f32 %v2239, %v3127
    %v3129 = vpop.f32.mrf.mxu0
    %v3130 = vpop.f32.mrf.mxu0
    %v3131 = vadd.f32 %v2239, %v3130
    %v3132 = vpop.f32.mrf.mxu0
    %3133 = vmatprep.mubr.bf16.mxu0 %v2116
    %3134 = vmatmul.mubr.bf16.gmra.mxu0 %v2115
    %v3135 = vpop.f32.mrf.mxu0
    %v3136 = vadd.f32 %v2239, %v3135
    %v3137 = vpop.f32.mrf.mxu0
    %v3138 = vpop.f32.mrf.mxu0
    %v3139 = vadd.f32 %v2239, %v3138
    %v3140 = vpop.f32.mrf.mxu0
    %3141 = vmatprep.mubr.bf16.mxu0 %v2119
    %3142 = vmatmul.mubr.bf16.gmra.mxu0 %v2118
    %v3143 = vpop.f32.mrf.mxu0
    %v3144 = vadd.f32 %v2239, %v3143
    %v3145 = vpop.f32.mrf.mxu0
    %v3146 = vpop.f32.mrf.mxu0
    %v3147 = vadd.f32 %v2239, %v3146
    %v3148 = vpop.f32.mrf.mxu0
    %3149 = vmatprep.mubr.bf16.mxu0 %v2122
    %3150 = vmatmul.mubr.bf16.gmra.mxu0 %v2121
    %v3151 = vpop.f32.mrf.mxu0
    %v3152 = vadd.f32 %v2239, %v3151
    %v3153 = vpop.f32.mrf.mxu0
    %v3154 = vpop.f32.mrf.mxu0
    %v3155 = vadd.f32 %v2239, %v3154
    %v3156 = vpop.f32.mrf.mxu0
    %3157 = vmatprep.mubr.bf16.mxu0 %v2125
    %3158 = vmatmul.mubr.bf16.gmra.mxu0 %v2124
    %v3159 = vpop.f32.mrf.mxu0
    %v3160 = vadd.f32 %v2239, %v3159
    %v3161 = vpop.f32.mrf.mxu0
    %v3162 = vpop.f32.mrf.mxu0
    %v3163 = vadd.f32 %v2239, %v3162
    %v3164 = vpop.f32.mrf.mxu0
    %3165 = vmatprep.mubr.bf16.mxu0 %v2128
    %3166 = vmatmul.mubr.bf16.gmra.mxu0 %v2127
    %v3167 = vpop.f32.mrf.mxu0
    %v3168 = vadd.f32 %v2239, %v3167
    %v3169 = vpop.f32.mrf.mxu0
    %v3170 = vpop.f32.mrf.mxu0
    %v3171 = vadd.f32 %v2239, %v3170
    %v3172 = vpop.f32.mrf.mxu0
    %3173 = vdwg.mxu0
    %3174 = vmatprep.subr.bf16.mxu0 0
    %3175 = vmatpush1.bf16.msra.mxu0 %v2554
    %3176 = vmatprep.subr.bf16.mxu0 0
    %3177 = vmatpush1.bf16.msra.mxu0 %v2551
    %3178 = vmatprep.subr.bf16.mxu0 0
    %3179 = vmatpush1.bf16.msra.mxu0 %v2548
    %3180 = vmatprep.subr.bf16.mxu0 0
    %3181 = vmatpush1.bf16.msra.mxu0 %v2545
    %3182 = vmatprep.subr.bf16.mxu0 0
    %3183 = vmatpush1.bf16.msra.mxu0 %v2542
    %3184 = vmatprep.subr.bf16.mxu0 0
    %3185 = vmatpush1.bf16.msra.mxu0 %v2539
    %3186 = vmatprep.subr.bf16.mxu0 0
    %3187 = vmatpush1.bf16.msra.mxu0 %v2536
    %3188 = vmatprep.subr.bf16.mxu0 0
    %3189 = vmatpush1.bf16.msra.mxu0 %v2533
    %3190 = vmatprep.subr.bf16.mxu0 0
    %3191 = vmatpush2.bf16.msra.mxu0 0
    %3192 = vmatprep.subr.bf16.mxu0 0
    %3193 = vmatpush2.bf16.msra.mxu0 0
    %3194 = vmatprep.subr.bf16.mxu0 0
    %3195 = vmatpush2.bf16.msra.mxu0 0
    %3196 = vmatprep.subr.bf16.mxu0 0
    %3197 = vmatpush2.bf16.msra.mxu0 0
    %3198 = vmatprep.subr.bf16.mxu0 0
    %3199 = vmatpush2.bf16.msra.mxu0 0
    %3200 = vmatprep.subr.bf16.mxu0 0
    %3201 = vmatpush2.bf16.msra.mxu0 0
    %3202 = vmatprep.subr.bf16.mxu0 0
    %3203 = vmatpush2.bf16.msra.mxu0 0
    %3204 = vmatprep.subr.bf16.mxu0 0
    %3205 = vmatpush2.bf16.msra.mxu0 0
    %3206 = vmatprep.mubr.bf16.mxu0 0
    %3207 = vmatmul.mubr.bf16.gmra.mxu0 %v2084
    %v3208 = vpop.f32.mrf.mxu0
    %v3209 = vadd.f32 %v3048, %v3208
    %v3210 = vpop.f32.mrf.mxu0
    %v3211 = vpop.f32.mrf.mxu0
    %v3212 = vadd.f32 %v3051, %v3211
    %v3213 = vpop.f32.mrf.mxu0
    %3214 = vmatprep.mubr.bf16.mxu0 0
    %3215 = vmatmul.mubr.bf16.gmra.mxu0 %v2087
    %v3216 = vpop.f32.mrf.mxu0
    %v3217 = vadd.f32 %v3056, %v3216
    %v3218 = vpop.f32.mrf.mxu0
    %v3219 = vpop.f32.mrf.mxu0
    %v3220 = vadd.f32 %v3059, %v3219
    %v3221 = vpop.f32.mrf.mxu0
    %3222 = vmatprep.mubr.bf16.mxu0 0
    %3223 = vmatmul.mubr.bf16.gmra.mxu0 %v2090
    %v3224 = vpop.f32.mrf.mxu0
    %v3225 = vadd.f32 %v3064, %v3224
    %v3226 = vpop.f32.mrf.mxu0
    %v3227 = vpop.f32.mrf.mxu0
    %v3228 = vadd.f32 %v3067, %v3227
    %v3229 = vpop.f32.mrf.mxu0
    %3230 = vmatprep.mubr.bf16.mxu0 0
    %3231 = vmatmul.mubr.bf16.gmra.mxu0 %v2093
    %v3232 = vpop.f32.mrf.mxu0
    %v3233 = vadd.f32 %v3072, %v3232
    %v3234 = vpop.f32.mrf.mxu0
    %v3235 = vpop.f32.mrf.mxu0
    %v3236 = vadd.f32 %v3075, %v3235
    %v3237 = vpop.f32.mrf.mxu0
    %3238 = vmatprep.mubr.bf16.mxu0 0
    %3239 = vmatmul.mubr.bf16.gmra.mxu0 %v2096
    %v3240 = vpop.f32.mrf.mxu0
    %v3241 = vadd.f32 %v3080, %v3240
    %v3242 = vpop.f32.mrf.mxu0
    %v3243 = vpop.f32.mrf.mxu0
    %v3244 = vadd.f32 %v3083, %v3243
    %v3245 = vpop.f32.mrf.mxu0
    %3246 = vmatprep.mubr.bf16.mxu0 0
    %3247 = vmatmul.mubr.bf16.gmra.mxu0 %v2099
    %v3248 = vpop.f32.mrf.mxu0
    %v3249 = vadd.f32 %v3088, %v3248
    %v3250 = vpop.f32.mrf.mxu0
    %v3251 = vpop.f32.mrf.mxu0
    %v3252 = vadd.f32 %v3091, %v3251
    %v3253 = vpop.f32.mrf.mxu0
    %3254 = vmatprep.mubr.bf16.mxu0 0
    %3255 = vmatmul.mubr.bf16.gmra.mxu0 %v2102
    %v3256 = vpop.f32.mrf.mxu0
    %v3257 = vadd.f32 %v3096, %v3256
    %v3258 = vpop.f32.mrf.mxu0
    %v3259 = vpop.f32.mrf.mxu0
    %v3260 = vadd.f32 %v3099, %v3259
    %v3261 = vpop.f32.mrf.mxu0
    %3262 = vmatprep.mubr.bf16.mxu0 0
    %3263 = vmatmul.mubr.bf16.gmra.mxu0 %v2105
    %v3264 = vpop.f32.mrf.mxu0
    %v3265 = vadd.f32 %v3104, %v3264
    %v3266 = vpop.f32.mrf.mxu0
    %v3267 = vpop.f32.mrf.mxu0
    %v3268 = vadd.f32 %v3107, %v3267
    %v3269 = vpop.f32.mrf.mxu0
    %3270 = vmatprep.mubr.bf16.mxu0 0
    %3271 = vmatmul.mubr.bf16.gmra.mxu0 %v2108
    %v3272 = vpop.f32.mrf.mxu0
    %v3273 = vadd.f32 %v3112, %v3272
    %v3274 = vpop.f32.mrf.mxu0
    %v3275 = vpop.f32.mrf.mxu0
    %v3276 = vadd.f32 %v3115, %v3275
    %v3277 = vpop.f32.mrf.mxu0
    %3278 = vmatprep.mubr.bf16.mxu0 0
    %3279 = vmatmul.mubr.bf16.gmra.mxu0 %v2111
    %v3280 = vpop.f32.mrf.mxu0
    %v3281 = vadd.f32 %v3120, %v3280
    %v3282 = vpop.f32.mrf.mxu0
    %v3283 = vpop.f32.mrf.mxu0
    %v3284 = vadd.f32 %v3123, %v3283
    %v3285 = vpop.f32.mrf.mxu0
    %3286 = vmatprep.mubr.bf16.mxu0 0
    %3287 = vmatmul.mubr.bf16.gmra.mxu0 %v2114
    %v3288 = vpop.f32.mrf.mxu0
    %v3289 = vadd.f32 %v3128, %v3288
    %v3290 = vpop.f32.mrf.mxu0
    %v3291 = vpop.f32.mrf.mxu0
    %v3292 = vadd.f32 %v3131, %v3291
    %v3293 = vpop.f32.mrf.mxu0
    %3294 = vmatprep.mubr.bf16.mxu0 0
    %3295 = vmatmul.mubr.bf16.gmra.mxu0 %v2117
    %v3296 = vpop.f32.mrf.mxu0
    %v3297 = vadd.f32 %v3136, %v3296
    %v3298 = vpop.f32.mrf.mxu0
    %v3299 = vpop.f32.mrf.mxu0
    %v3300 = vadd.f32 %v3139, %v3299
    %v3301 = vpop.f32.mrf.mxu0
    %3302 = vmatprep.mubr.bf16.mxu0 0
    %3303 = vmatmul.mubr.bf16.gmra.mxu0 %v2120
    %v3304 = vpop.f32.mrf.mxu0
    %v3305 = vadd.f32 %v3144, %v3304
    %v3306 = vpop.f32.mrf.mxu0
    %v3307 = vpop.f32.mrf.mxu0
    %v3308 = vadd.f32 %v3147, %v3307
    %v3309 = vpop.f32.mrf.mxu0
    %3310 = vmatprep.mubr.bf16.mxu0 0
    %3311 = vmatmul.mubr.bf16.gmra.mxu0 %v2123
    %v3312 = vpop.f32.mrf.mxu0
    %v3313 = vadd.f32 %v3152, %v3312
    %v3314 = vpop.f32.mrf.mxu0
    %v3315 = vpop.f32.mrf.mxu0
    %v3316 = vadd.f32 %v3155, %v3315
    %v3317 = vpop.f32.mrf.mxu0
    %3318 = vmatprep.mubr.bf16.mxu0 0
    %3319 = vmatmul.mubr.bf16.gmra.mxu0 %v2126
    %v3320 = vpop.f32.mrf.mxu0
    %v3321 = vadd.f32 %v3160, %v3320
    %v3322 = vpop.f32.mrf.mxu0
    %v3323 = vpop.f32.mrf.mxu0
    %v3324 = vadd.f32 %v3163, %v3323
    %v3325 = vpop.f32.mrf.mxu0
    %3326 = vmatprep.mubr.bf16.mxu0 0
    %3327 = vmatmul.mubr.bf16.gmra.mxu0 %v2129
    %v3328 = vpop.f32.mrf.mxu0
    %v3329 = vadd.f32 %v3168, %v3328
    %v3330 = vpop.f32.mrf.mxu0
    %v3331 = vpop.f32.mrf.mxu0
    %v3332 = vadd.f32 %v3171, %v3331
    %v3333 = vpop.f32.mrf.mxu0
    %3334 = vdwg.mxu0
    %v3335 = vmax.f32 %v2855, 0.0
    %v3336 = vmax.f32 %v2857, 0.0
    %v3337 = vmax.f32 %v3209, 0.0
    %v3338 = vmax.f32 %v2859, 0.0
    %v3339 = vmax.f32 %v2861, 0.0
    %v3340 = vmax.f32 %v3212, 0.0
    %v3341 = vmax.f32 %v2865, 0.0
    %v3342 = vmax.f32 %v2867, 0.0
    %v3343 = vmax.f32 %v3217, 0.0
    %v3344 = vmax.f32 %v2869, 0.0
    %v3345 = vmax.f32 %v2871, 0.0
    %v3346 = vmax.f32 %v3220, 0.0
    %v3347 = vmax.f32 %v2875, 0.0
    %v3348 = vmax.f32 %v2877, 0.0
    %v3349 = vmax.f32 %v3225, 0.0
    %v3350 = vmax.f32 %v2879, 0.0
    %v3351 = vmax.f32 %v2881, 0.0
    %v3352 = vmax.f32 %v3228, 0.0
    %v3353 = vmax.f32 %v2885, 0.0
    %v3354 = vmax.f32 %v2887, 0.0
    %v3355 = vmax.f32 %v3233, 0.0
    %v3356 = vmax.f32 %v2889, 0.0
    %v3357 = vmax.f32 %v2891, 0.0
    %v3358 = vmax.f32 %v3236, 0.0
    %v3359 = vmax.f32 %v2895, 0.0
    %v3360 = vmax.f32 %v2897, 0.0
    %v3361 = vmax.f32 %v3241, 0.0
    %v3362 = vmax.f32 %v2899, 0.0
    %v3363 = vmax.f32 %v2901, 0.0
    %v3364 = vmax.f32 %v3244, 0.0
    %v3365 = vmax.f32 %v2905, 0.0
    %v3366 = vmax.f32 %v2907, 0.0
    %v3367 = vmax.f32 %v3249, 0.0
    %v3368 = vmax.f32 %v2909, 0.0
    %v3369 = vmax.f32 %v2911, 0.0
    %v3370 = vmax.f32 %v3252, 0.0
    %v3371 = vmax.f32 %v2915, 0.0
    %v3372 = vmax.f32 %v2917, 0.0
    %v3373 = vmax.f32 %v3257, 0.0
    %v3374 = vmax.f32 %v2919, 0.0
    %v3375 = vmax.f32 %v2921, 0.0
    %v3376 = vmax.f32 %v3260, 0.0
    %v3377 = vmax.f32 %v2925, 0.0
    %v3378 = vmax.f32 %v2927, 0.0
    %v3379 = vmax.f32 %v3265, 0.0
    %v3380 = vmax.f32 %v2929, 0.0
    %v3381 = vmax.f32 %v2931, 0.0
    %v3382 = vmax.f32 %v3268, 0.0
    %v3383 = vmax.f32 %v2935, 0.0
    %v3384 = vmax.f32 %v2937, 0.0
    %v3385 = vmax.f32 %v3273, 0.0
    %v3386 = vmax.f32 %v2939, 0.0
    %v3387 = vmax.f32 %v2941, 0.0
    %v3388 = vmax.f32 %v3276, 0.0
    %v3389 = vmax.f32 %v2945, 0.0
    %v3390 = vmax.f32 %v2947, 0.0
    %v3391 = vmax.f32 %v3281, 0.0
    %v3392 = vmax.f32 %v2949, 0.0
    %v3393 = vmax.f32 %v2951, 0.0
    %v3394 = vmax.f32 %v3284, 0.0
    %v3395 = vmax.f32 %v2955, 0.0
    %v3396 = vmax.f32 %v2957, 0.0
    %v3397 = vmax.f32 %v3289, 0.0
    %v3398 = vmax.f32 %v2959, 0.0
    %v3399 = vmax.f32 %v2961, 0.0
    %v3400 = vmax.f32 %v3292, 0.0
    %v3401 = vmax.f32 %v2965, 0.0
    %v3402 = vmax.f32 %v2967, 0.0
    %v3403 = vmax.f32 %v3297, 0.0
    %v3404 = vmax.f32 %v2969, 0.0
    %v3405 = vmax.f32 %v2971, 0.0
    %v3406 = vmax.f32 %v3300, 0.0
    %v3407 = vmax.f32 %v2975, 0.0
    %v3408 = vmax.f32 %v2977, 0.0
    %v3409 = vmax.f32 %v3305, 0.0
    %v3410 = vmax.f32 %v2979, 0.0
    %v3411 = vmax.f32 %v2981, 0.0
    %v3412 = vmax.f32 %v3308, 0.0
    %v3413 = vmax.f32 %v2985, 0.0
    %v3414 = vmax.f32 %v2987, 0.0
    %v3415 = vmax.f32 %v3313, 0.0
    %v3416 = vmax.f32 %v2989, 0.0
    %v3417 = vmax.f32 %v2991, 0.0
    %v3418 = vmax.f32 %v3316, 0.0
    %v3419 = vmax.f32 %v2995, 0.0
    %v3420 = vmax.f32 %v2997, 0.0
    %v3421 = vmax.f32 %v3321, 0.0
    %v3422 = vmax.f32 %v2999, 0.0
    %v3423 = vmax.f32 %v3001, 0.0
    %v3424 = vmax.f32 %v3324, 0.0
    %v3425 = vmax.f32 %v3005, 0.0
    %v3426 = vmax.f32 %v3007, 0.0
    %v3427 = vmax.f32 %v3329, 0.0
    %v3428 = vmax.f32 %v3009, 0.0
    %v3429 = vmax.f32 %v3011, 0.0
    %v3430 = vmax.f32 %v3332, 0.0
    %v3431 = vpack.c.bf16 %v3338, %v3335
    %v3432 = vpack.c.bf16 %v3339, %v3336
    %v3433 = vpack.c.bf16 %v3340, %v3337
    %v3434 = vpack.c.bf16 %v3344, %v3341
    %v3435 = vpack.c.bf16 %v3345, %v3342
    %v3436 = vpack.c.bf16 %v3346, %v3343
    %v3437 = vpack.c.bf16 %v3350, %v3347
    %v3438 = vpack.c.bf16 %v3351, %v3348
    %v3439 = vpack.c.bf16 %v3352, %v3349
    %v3440 = vpack.c.bf16 %v3356, %v3353
    %v3441 = vpack.c.bf16 %v3357, %v3354
    %v3442 = vpack.c.bf16 %v3358, %v3355
    %v3443 = vpack.c.bf16 %v3362, %v3359
    %v3444 = vpack.c.bf16 %v3363, %v3360
    %v3445 = vpack.c.bf16 %v3364, %v3361
    %v3446 = vpack.c.bf16 %v3368, %v3365
    %v3447 = vpack.c.bf16 %v3369, %v3366
    %v3448 = vpack.c.bf16 %v3370, %v3367
    %v3449 = vpack.c.bf16 %v3374, %v3371
    %v3450 = vpack.c.bf16 %v3375, %v3372
    %v3451 = vpack.c.bf16 %v3376, %v3373
    %v3452 = vpack.c.bf16 %v3380, %v3377
    %v3453 = vpack.c.bf16 %v3381, %v3378
    %v3454 = vpack.c.bf16 %v3382, %v3379
    %v3455 = vpack.c.bf16 %v3386, %v3383
    %v3456 = vpack.c.bf16 %v3387, %v3384
    %v3457 = vpack.c.bf16 %v3388, %v3385
    %v3458 = vpack.c.bf16 %v3392, %v3389
    %v3459 = vpack.c.bf16 %v3393, %v3390
    %v3460 = vpack.c.bf16 %v3394, %v3391
    %v3461 = vpack.c.bf16 %v3398, %v3395
    %v3462 = vpack.c.bf16 %v3399, %v3396
    %v3463 = vpack.c.bf16 %v3400, %v3397
    %v3464 = vpack.c.bf16 %v3404, %v3401
    %v3465 = vpack.c.bf16 %v3405, %v3402
    %v3466 = vpack.c.bf16 %v3406, %v3403
    %v3467 = vpack.c.bf16 %v3410, %v3407
    %v3468 = vpack.c.bf16 %v3411, %v3408
    %v3469 = vpack.c.bf16 %v3412, %v3409
    %v3470 = vpack.c.bf16 %v3416, %v3413
    %v3471 = vpack.c.bf16 %v3417, %v3414
    %v3472 = vpack.c.bf16 %v3418, %v3415
    %v3473 = vpack.c.bf16 %v3422, %v3419
    %v3474 = vpack.c.bf16 %v3423, %v3420
    %v3475 = vpack.c.bf16 %v3424, %v3421
    %v3476 = vpack.c.bf16 %v3428, %v3425
    %v3477 = vpack.c.bf16 %v3429, %v3426
    %v3478 = vpack.c.bf16 %v3430, %v3427
    %v3479 = vld [vmem:[#allocation7] sm:$0xf]
    %v3480 = vld [vmem:[#allocation7 + $0x4] sm:$0xf]
    %v3481 = vld [vmem:[#allocation7 + $0x8] sm:$0xf]
    %v3482 = vld [vmem:[#allocation7 + $0xc] sm:$0xf]
    %v3483 = vld [vmem:[#allocation7 + $0x10] sm:$0xf]
    %v3484 = vld [vmem:[#allocation7 + $0x14] sm:$0xf]
    %v3485 = vld [vmem:[#allocation7 + $0x18] sm:$0xf]
    %v3486 = vld [vmem:[#allocation7 + $0x1c] sm:$0xf]
    %v3487 = vld [vmem:[#allocation7 + $0x20] sm:$0xf]
    %v3488 = vld [vmem:[#allocation7 + $0x24] sm:$0xf]
    %v3489 = vld [vmem:[#allocation7 + $0x28] sm:$0xf]
    %v3490 = vld [vmem:[#allocation7 + $0x2c] sm:$0xf]
    %v3491 = vld [vmem:[#allocation7 + $0x30] sm:$0xf]
    %v3492 = vld [vmem:[#allocation7 + $0x34] sm:$0xf]
    %v3493 = vld [vmem:[#allocation7 + $0x38] sm:$0xf]
    %v3494 = vld [vmem:[#allocation7 + $0x3c] sm:$0xf]
    %v3495 = vld [vmem:[#allocation7 + $0x40] sm:$0xf]
    %v3496 = vld [vmem:[#allocation7 + $0x44] sm:$0xf]
    %v3497 = vld [vmem:[#allocation7 + $0x48] sm:$0xf]
    %v3498 = vld [vmem:[#allocation7 + $0x4c] sm:$0xf]
    %v3499 = vld [vmem:[#allocation7 + $0x50] sm:$0xf]
    %v3500 = vld [vmem:[#allocation7 + $0x54] sm:$0xf]
    %v3501 = vld [vmem:[#allocation7 + $0x58] sm:$0xf]
    %v3502 = vld [vmem:[#allocation7 + $0x5c] sm:$0xf]
    %v3503 = vld [vmem:[#allocation7 + $0x60] sm:$0xf]
    %v3504 = vld [vmem:[#allocation7 + $0x64] sm:$0xf]
    %v3505 = vld [vmem:[#allocation7 + $0x68] sm:$0xf]
    %v3506 = vld [vmem:[#allocation7 + $0x6c] sm:$0xf]
    %v3507 = vld [vmem:[#allocation7 + $0x70] sm:$0xf]
    %v3508 = vld [vmem:[#allocation7 + $0x74] sm:$0xf]
    %v3509 = vld [vmem:[#allocation7 + $0x78] sm:$0xf]
    %v3510 = vld [vmem:[#allocation7 + $0x7c] sm:$0xf]
    %v3511 = vld [vmem:[#allocation7 + $0x80] sm:$0xf]
    %v3512 = vld [vmem:[#allocation7 + $0x84] sm:$0xf]
    %v3513 = vld [vmem:[#allocation7 + $0x88] sm:$0xf]
    %v3514 = vld [vmem:[#allocation7 + $0x8c] sm:$0xf]
    %v3515 = vld [vmem:[#allocation7 + $0x90] sm:$0xf]
    %v3516 = vld [vmem:[#allocation7 + $0x94] sm:$0xf]
    %v3517 = vld [vmem:[#allocation7 + $0x98] sm:$0xf]
    %v3518 = vld [vmem:[#allocation7 + $0x9c] sm:$0xf]
    %v3519 = vld [vmem:[#allocation7 + $0xa0] sm:$0xf]
    %v3520 = vld [vmem:[#allocation7 + $0xa4] sm:$0xf]
    %v3521 = vld [vmem:[#allocation7 + $0xa8] sm:$0xf]
    %v3522 = vld [vmem:[#allocation7 + $0xac] sm:$0xf]
    %v3523 = vld [vmem:[#allocation7 + $0xb0] sm:$0xf]
    %v3524 = vld [vmem:[#allocation7 + $0xb4] sm:$0xf]
    %v3525 = vld [vmem:[#allocation7 + $0xb8] sm:$0xf]
    %v3526 = vld [vmem:[#allocation7 + $0xbc] sm:$0xf]
    %v3527 = vld [vmem:[%s8] sm:$0x1]
    %v3529 = vlaneseq
    %v3530 = vshrl.u32 %v3529, 7
    %v3531 = vsub.s32 0, %v3530
    %v3532 = vrot.slane %v3527, %v3531
    %v3582 = vunpack.c.l.b16 %v3479
    %v3583 = vunpack.c.l.b16 %v3480
    %v3584 = vunpack.c.l.b16 %v3481
    %v3585 = vunpack.c.l.b16 %v3482
    %v3586 = vunpack.c.l.b16 %v3483
    %v3587 = vunpack.c.l.b16 %v3484
    %v3588 = vunpack.c.l.b16 %v3485
    %v3589 = vunpack.c.l.b16 %v3486
    %v3590 = vunpack.c.l.b16 %v3487
    %v3591 = vunpack.c.l.b16 %v3488
    %v3592 = vunpack.c.l.b16 %v3489
    %v3593 = vunpack.c.l.b16 %v3490
    %v3594 = vunpack.c.l.b16 %v3491
    %v3595 = vunpack.c.l.b16 %v3492
    %v3596 = vunpack.c.l.b16 %v3493
    %v3597 = vunpack.c.l.b16 %v3494
    %v3598 = vunpack.c.l.b16 %v3495
    %v3599 = vunpack.c.l.b16 %v3496
    %v3600 = vunpack.c.l.b16 %v3497
    %v3601 = vunpack.c.l.b16 %v3498
    %v3602 = vunpack.c.l.b16 %v3499
    %v3603 = vunpack.c.l.b16 %v3500
    %v3604 = vunpack.c.l.b16 %v3501
    %v3605 = vunpack.c.l.b16 %v3502
    %v3606 = vunpack.c.l.b16 %v3503
    %v3607 = vunpack.c.l.b16 %v3504
    %v3608 = vunpack.c.l.b16 %v3505
    %v3609 = vunpack.c.l.b16 %v3506
    %v3610 = vunpack.c.l.b16 %v3507
    %v3611 = vunpack.c.l.b16 %v3508
    %v3612 = vunpack.c.l.b16 %v3509
    %v3613 = vunpack.c.l.b16 %v3510
    %v3614 = vunpack.c.l.b16 %v3511
    %v3615 = vunpack.c.l.b16 %v3512
    %v3616 = vunpack.c.l.b16 %v3513
    %v3617 = vunpack.c.l.b16 %v3514
    %v3618 = vunpack.c.l.b16 %v3515
    %v3619 = vunpack.c.l.b16 %v3516
    %v3620 = vunpack.c.l.b16 %v3517
    %v3621 = vunpack.c.l.b16 %v3518
    %v3622 = vunpack.c.l.b16 %v3519
    %v3623 = vunpack.c.l.b16 %v3520
    %v3624 = vunpack.c.l.b16 %v3521
    %v3625 = vunpack.c.l.b16 %v3522
    %v3626 = vunpack.c.l.b16 %v3523
    %v3627 = vunpack.c.l.b16 %v3524
    %v3628 = vunpack.c.l.b16 %v3525
    %v3629 = vunpack.c.l.b16 %v3526
    %v3630 = vpack.c.b16 %v3583, %v3582
    %v3631 = vpack.c.b16 %v3585, %v3584
    %v3632 = vpack.c.b16 %v3587, %v3586
    %v3633 = vpack.c.b16 %v3589, %v3588
    %v3634 = vpack.c.b16 %v3591, %v3590
    %v3635 = vpack.c.b16 %v3593, %v3592
    %v3636 = vpack.c.b16 %v3595, %v3594
    %v3637 = vpack.c.b16 %v3597, %v3596
    %v3638 = vpack.c.b16 %v3599, %v3598
    %v3639 = vpack.c.b16 %v3601, %v3600
    %v3640 = vpack.c.b16 %v3603, %v3602
    %v3641 = vpack.c.b16 %v3605, %v3604
    %v3642 = vpack.c.b16 %v3607, %v3606
    %v3643 = vpack.c.b16 %v3609, %v3608
    %v3644 = vpack.c.b16 %v3611, %v3610
    %v3645 = vpack.c.b16 %v3613, %v3612
    %v3646 = vpack.c.b16 %v3615, %v3614
    %v3647 = vpack.c.b16 %v3617, %v3616
    %v3648 = vpack.c.b16 %v3619, %v3618
    %v3649 = vpack.c.b16 %v3621, %v3620
    %v3650 = vpack.c.b16 %v3623, %v3622
    %v3651 = vpack.c.b16 %v3625, %v3624
    %v3652 = vpack.c.b16 %v3627, %v3626
    %v3653 = vpack.c.b16 %v3629, %v3628
    %3678 = vmatprep.subr.bf16.mxu0 0
    %3679 = vmatpush1.bf16.msra.mxu0 %v3637
    %3680 = vmatprep.subr.bf16.mxu0 0
    %3681 = vmatpush1.bf16.msra.mxu0 %v3636
    %3682 = vmatprep.subr.bf16.mxu0 0
    %3683 = vmatpush1.bf16.msra.mxu0 %v3635
    %3684 = vmatprep.subr.bf16.mxu0 0
    %3685 = vmatpush1.bf16.msra.mxu0 %v3634
    %3686 = vmatprep.subr.bf16.mxu0 0
    %3687 = vmatpush1.bf16.msra.mxu0 %v3633
    %3688 = vmatprep.subr.bf16.mxu0 0
    %3689 = vmatpush1.bf16.msra.mxu0 %v3632
    %3690 = vmatprep.subr.bf16.mxu0 0
    %3691 = vmatpush1.bf16.msra.mxu0 %v3631
    %3692 = vmatprep.subr.bf16.mxu0 0
    %3693 = vmatpush1.bf16.msra.mxu0 %v3630
    %3694 = vmatprep.subr.bf16.mxu0 0
    %3695 = vmatpush2.bf16.msra.mxu0 %v3645
    %3696 = vmatprep.subr.bf16.mxu0 0
    %3697 = vmatpush2.bf16.msra.mxu0 %v3644
    %3698 = vmatprep.subr.bf16.mxu0 0
    %3699 = vmatpush2.bf16.msra.mxu0 %v3643
    %3700 = vmatprep.subr.bf16.mxu0 0
    %3701 = vmatpush2.bf16.msra.mxu0 %v3642
    %3702 = vmatprep.subr.bf16.mxu0 0
    %3703 = vmatpush2.bf16.msra.mxu0 %v3641
    %3704 = vmatprep.subr.bf16.mxu0 0
    %3705 = vmatpush2.bf16.msra.mxu0 %v3640
    %3706 = vmatprep.subr.bf16.mxu0 0
    %3707 = vmatpush2.bf16.msra.mxu0 %v3639
    %3708 = vmatprep.subr.bf16.mxu0 0
    %3709 = vmatpush2.bf16.msra.mxu0 %v3638
    %3710 = vmatprep.mubr.bf16.mxu0 %v3432
    %3711 = vmatmul.mubr.bf16.gmra.mxu0 %v3431
    %v3712 = vpop.f32.mrf.mxu0
    %v3713 = vadd.f32 %v3532, %v3712
    %v3714 = vpop.f32.mrf.mxu0
    %v3715 = vpop.f32.mrf.mxu0
    %v3716 = vadd.f32 %v3532, %v3715
    %v3717 = vpop.f32.mrf.mxu0
    %3718 = vmatprep.mubr.bf16.mxu0 %v3435
    %3719 = vmatmul.mubr.bf16.gmra.mxu0 %v3434
    %v3720 = vpop.f32.mrf.mxu0
    %v3721 = vadd.f32 %v3532, %v3720
    %v3722 = vpop.f32.mrf.mxu0
    %v3723 = vpop.f32.mrf.mxu0
    %v3724 = vadd.f32 %v3532, %v3723
    %v3725 = vpop.f32.mrf.mxu0
    %3726 = vmatprep.mubr.bf16.mxu0 %v3438
    %3727 = vmatmul.mubr.bf16.gmra.mxu0 %v3437
    %v3728 = vpop.f32.mrf.mxu0
    %v3729 = vadd.f32 %v3532, %v3728
    %v3730 = vpop.f32.mrf.mxu0
    %v3731 = vpop.f32.mrf.mxu0
    %v3732 = vadd.f32 %v3532, %v3731
    %v3733 = vpop.f32.mrf.mxu0
    %3734 = vmatprep.mubr.bf16.mxu0 %v3441
    %3735 = vmatmul.mubr.bf16.gmra.mxu0 %v3440
    %v3736 = vpop.f32.mrf.mxu0
    %v3737 = vadd.f32 %v3532, %v3736
    %v3738 = vpop.f32.mrf.mxu0
    %v3739 = vpop.f32.mrf.mxu0
    %v3740 = vadd.f32 %v3532, %v3739
    %v3741 = vpop.f32.mrf.mxu0
    %3742 = vmatprep.mubr.bf16.mxu0 %v3444
    %3743 = vmatmul.mubr.bf16.gmra.mxu0 %v3443
    %v3744 = vpop.f32.mrf.mxu0
    %v3745 = vadd.f32 %v3532, %v3744
    %v3746 = vpop.f32.mrf.mxu0
    %v3747 = vpop.f32.mrf.mxu0
    %v3748 = vadd.f32 %v3532, %v3747
    %v3749 = vpop.f32.mrf.mxu0
    %3750 = vmatprep.mubr.bf16.mxu0 %v3447
    %3751 = vmatmul.mubr.bf16.gmra.mxu0 %v3446
    %v3752 = vpop.f32.mrf.mxu0
    %v3753 = vadd.f32 %v3532, %v3752
    %v3754 = vpop.f32.mrf.mxu0
    %v3755 = vpop.f32.mrf.mxu0
    %v3756 = vadd.f32 %v3532, %v3755
    %v3757 = vpop.f32.mrf.mxu0
    %3758 = vmatprep.mubr.bf16.mxu0 %v3450
    %3759 = vmatmul.mubr.bf16.gmra.mxu0 %v3449
    %v3760 = vpop.f32.mrf.mxu0
    %v3761 = vadd.f32 %v3532, %v3760
    %v3762 = vpop.f32.mrf.mxu0
    %v3763 = vpop.f32.mrf.mxu0
    %v3764 = vadd.f32 %v3532, %v3763
    %v3765 = vpop.f32.mrf.mxu0
    %3766 = vmatprep.mubr.bf16.mxu0 %v3453
    %3767 = vmatmul.mubr.bf16.gmra.mxu0 %v3452
    %v3768 = vpop.f32.mrf.mxu0
    %v3769 = vadd.f32 %v3532, %v3768
    %v3770 = vpop.f32.mrf.mxu0
    %v3771 = vpop.f32.mrf.mxu0
    %v3772 = vadd.f32 %v3532, %v3771
    %v3773 = vpop.f32.mrf.mxu0
    %3774 = vmatprep.mubr.bf16.mxu0 %v3456
    %3775 = vmatmul.mubr.bf16.gmra.mxu0 %v3455
    %v3776 = vpop.f32.mrf.mxu0
    %v3777 = vadd.f32 %v3532, %v3776
    %v3778 = vpop.f32.mrf.mxu0
    %v3779 = vpop.f32.mrf.mxu0
    %v3780 = vadd.f32 %v3532, %v3779
    %v3781 = vpop.f32.mrf.mxu0
    %3782 = vmatprep.mubr.bf16.mxu0 %v3459
    %3783 = vmatmul.mubr.bf16.gmra.mxu0 %v3458
    %v3784 = vpop.f32.mrf.mxu0
    %v3785 = vadd.f32 %v3532, %v3784
    %v3786 = vpop.f32.mrf.mxu0
    %v3787 = vpop.f32.mrf.mxu0
    %v3788 = vadd.f32 %v3532, %v3787
    %v3789 = vpop.f32.mrf.mxu0
    %3790 = vmatprep.mubr.bf16.mxu0 %v3462
    %3791 = vmatmul.mubr.bf16.gmra.mxu0 %v3461
    %v3792 = vpop.f32.mrf.mxu0
    %v3793 = vadd.f32 %v3532, %v3792
    %v3794 = vpop.f32.mrf.mxu0
    %v3795 = vpop.f32.mrf.mxu0
    %v3796 = vadd.f32 %v3532, %v3795
    %v3797 = vpop.f32.mrf.mxu0
    %3798 = vmatprep.mubr.bf16.mxu0 %v3465
    %3799 = vmatmul.mubr.bf16.gmra.mxu0 %v3464
    %v3800 = vpop.f32.mrf.mxu0
    %v3801 = vadd.f32 %v3532, %v3800
    %v3802 = vpop.f32.mrf.mxu0
    %v3803 = vpop.f32.mrf.mxu0
    %v3804 = vadd.f32 %v3532, %v3803
    %v3805 = vpop.f32.mrf.mxu0
    %3806 = vmatprep.mubr.bf16.mxu0 %v3468
    %3807 = vmatmul.mubr.bf16.gmra.mxu0 %v3467
    %v3808 = vpop.f32.mrf.mxu0
    %v3809 = vadd.f32 %v3532, %v3808
    %v3810 = vpop.f32.mrf.mxu0
    %v3811 = vpop.f32.mrf.mxu0
    %v3812 = vadd.f32 %v3532, %v3811
    %v3813 = vpop.f32.mrf.mxu0
    %3814 = vmatprep.mubr.bf16.mxu0 %v3471
    %3815 = vmatmul.mubr.bf16.gmra.mxu0 %v3470
    %v3816 = vpop.f32.mrf.mxu0
    %v3817 = vadd.f32 %v3532, %v3816
    %v3818 = vpop.f32.mrf.mxu0
    %v3819 = vpop.f32.mrf.mxu0
    %v3820 = vadd.f32 %v3532, %v3819
    %v3821 = vpop.f32.mrf.mxu0
    %3822 = vmatprep.mubr.bf16.mxu0 %v3474
    %3823 = vmatmul.mubr.bf16.gmra.mxu0 %v3473
    %v3824 = vpop.f32.mrf.mxu0
    %v3825 = vadd.f32 %v3532, %v3824
    %v3826 = vpop.f32.mrf.mxu0
    %v3827 = vpop.f32.mrf.mxu0
    %v3828 = vadd.f32 %v3532, %v3827
    %v3829 = vpop.f32.mrf.mxu0
    %3830 = vmatprep.mubr.bf16.mxu0 %v3477
    %3831 = vmatmul.mubr.bf16.gmra.mxu0 %v3476
    %v3832 = vpop.f32.mrf.mxu0
    %v3833 = vadd.f32 %v3532, %v3832
    %v3834 = vpop.f32.mrf.mxu0
    %v3835 = vpop.f32.mrf.mxu0
    %v3836 = vadd.f32 %v3532, %v3835
    %v3837 = vpop.f32.mrf.mxu0
    %3838 = vdwg.mxu0
    %3839 = vmatprep.subr.bf16.mxu0 0
    %3840 = vmatpush1.bf16.msra.mxu0 %v3653
    %3841 = vmatprep.subr.bf16.mxu0 0
    %3842 = vmatpush1.bf16.msra.mxu0 %v3652
    %3843 = vmatprep.subr.bf16.mxu0 0
    %3844 = vmatpush1.bf16.msra.mxu0 %v3651
    %3845 = vmatprep.subr.bf16.mxu0 0
    %3846 = vmatpush1.bf16.msra.mxu0 %v3650
    %3847 = vmatprep.subr.bf16.mxu0 0
    %3848 = vmatpush1.bf16.msra.mxu0 %v3649
    %3849 = vmatprep.subr.bf16.mxu0 0
    %3850 = vmatpush1.bf16.msra.mxu0 %v3648
    %3851 = vmatprep.subr.bf16.mxu0 0
    %3852 = vmatpush1.bf16.msra.mxu0 %v3647
    %3853 = vmatprep.subr.bf16.mxu0 0
    %3854 = vmatpush1.bf16.msra.mxu0 %v3646
    %3855 = vmatprep.subr.bf16.mxu0 0
    %3856 = vmatpush2.bf16.msra.mxu0 0
    %3857 = vmatprep.subr.bf16.mxu0 0
    %3858 = vmatpush2.bf16.msra.mxu0 0
    %3859 = vmatprep.subr.bf16.mxu0 0
    %3860 = vmatpush2.bf16.msra.mxu0 0
    %3861 = vmatprep.subr.bf16.mxu0 0
    %3862 = vmatpush2.bf16.msra.mxu0 0
    %3863 = vmatprep.subr.bf16.mxu0 0
    %3864 = vmatpush2.bf16.msra.mxu0 0
    %3865 = vmatprep.subr.bf16.mxu0 0
    %3866 = vmatpush2.bf16.msra.mxu0 0
    %3867 = vmatprep.subr.bf16.mxu0 0
    %3868 = vmatpush2.bf16.msra.mxu0 0
    %3869 = vmatprep.subr.bf16.mxu0 0
    %3870 = vmatpush2.bf16.msra.mxu0 0
    %3871 = vmatprep.mubr.bf16.mxu0 0
    %3872 = vmatmul.mubr.bf16.gmra.mxu0 %v3433
    %v3873 = vpop.f32.mrf.mxu0
    %v3874 = vadd.f32 %v3713, %v3873
    %v3875 = vpop.f32.mrf.mxu0
    %v3876 = vpop.f32.mrf.mxu0
    %v3877 = vadd.f32 %v3716, %v3876
    %v3878 = vpop.f32.mrf.mxu0
    %3879 = vmatprep.mubr.bf16.mxu0 0
    %3880 = vmatmul.mubr.bf16.gmra.mxu0 %v3436
    %v3881 = vpop.f32.mrf.mxu0
    %v3882 = vadd.f32 %v3721, %v3881
    %v3883 = vpop.f32.mrf.mxu0
    %v3884 = vpop.f32.mrf.mxu0
    %v3885 = vadd.f32 %v3724, %v3884
    %v3886 = vpop.f32.mrf.mxu0
    %3887 = vmatprep.mubr.bf16.mxu0 0
    %3888 = vmatmul.mubr.bf16.gmra.mxu0 %v3439
    %v3889 = vpop.f32.mrf.mxu0
    %v3890 = vadd.f32 %v3729, %v3889
    %v3891 = vpop.f32.mrf.mxu0
    %v3892 = vpop.f32.mrf.mxu0
    %v3893 = vadd.f32 %v3732, %v3892
    %v3894 = vpop.f32.mrf.mxu0
    %3895 = vmatprep.mubr.bf16.mxu0 0
    %3896 = vmatmul.mubr.bf16.gmra.mxu0 %v3442
    %v3897 = vpop.f32.mrf.mxu0
    %v3898 = vadd.f32 %v3737, %v3897
    %v3899 = vpop.f32.mrf.mxu0
    %v3900 = vpop.f32.mrf.mxu0
    %v3901 = vadd.f32 %v3740, %v3900
    %v3902 = vpop.f32.mrf.mxu0
    %3903 = vmatprep.mubr.bf16.mxu0 0
    %3904 = vmatmul.mubr.bf16.gmra.mxu0 %v3445
    %v3905 = vpop.f32.mrf.mxu0
    %v3906 = vadd.f32 %v3745, %v3905
    %v3907 = vpop.f32.mrf.mxu0
    %v3908 = vpop.f32.mrf.mxu0
    %v3909 = vadd.f32 %v3748, %v3908
    %v3910 = vpop.f32.mrf.mxu0
    %3911 = vmatprep.mubr.bf16.mxu0 0
    %3912 = vmatmul.mubr.bf16.gmra.mxu0 %v3448
    %v3913 = vpop.f32.mrf.mxu0
    %v3914 = vadd.f32 %v3753, %v3913
    %v3915 = vpop.f32.mrf.mxu0
    %v3916 = vpop.f32.mrf.mxu0
    %v3917 = vadd.f32 %v3756, %v3916
    %v3918 = vpop.f32.mrf.mxu0
    %3919 = vmatprep.mubr.bf16.mxu0 0
    %3920 = vmatmul.mubr.bf16.gmra.mxu0 %v3451
    %v3921 = vpop.f32.mrf.mxu0
    %v3922 = vadd.f32 %v3761, %v3921
    %v3923 = vpop.f32.mrf.mxu0
    %v3924 = vpop.f32.mrf.mxu0
    %v3925 = vadd.f32 %v3764, %v3924
    %v3926 = vpop.f32.mrf.mxu0
    %3927 = vmatprep.mubr.bf16.mxu0 0
    %3928 = vmatmul.mubr.bf16.gmra.mxu0 %v3454
    %v3929 = vpop.f32.mrf.mxu0
    %v3930 = vadd.f32 %v3769, %v3929
    %v3931 = vpop.f32.mrf.mxu0
    %v3932 = vpop.f32.mrf.mxu0
    %v3933 = vadd.f32 %v3772, %v3932
    %v3934 = vpop.f32.mrf.mxu0
    %3935 = vmatprep.mubr.bf16.mxu0 0
    %3936 = vmatmul.mubr.bf16.gmra.mxu0 %v3457
    %v3937 = vpop.f32.mrf.mxu0
    %v3938 = vadd.f32 %v3777, %v3937
    %v3939 = vpop.f32.mrf.mxu0
    %v3940 = vpop.f32.mrf.mxu0
    %v3941 = vadd.f32 %v3780, %v3940
    %v3942 = vpop.f32.mrf.mxu0
    %3943 = vmatprep.mubr.bf16.mxu0 0
    %3944 = vmatmul.mubr.bf16.gmra.mxu0 %v3460
    %v3945 = vpop.f32.mrf.mxu0
    %v3946 = vadd.f32 %v3785, %v3945
    %v3947 = vpop.f32.mrf.mxu0
    %v3948 = vpop.f32.mrf.mxu0
    %v3949 = vadd.f32 %v3788, %v3948
    %v3950 = vpop.f32.mrf.mxu0
    %3951 = vmatprep.mubr.bf16.mxu0 0
    %3952 = vmatmul.mubr.bf16.gmra.mxu0 %v3463
    %v3953 = vpop.f32.mrf.mxu0
    %v3954 = vadd.f32 %v3793, %v3953
    %v3955 = vpop.f32.mrf.mxu0
    %v3956 = vpop.f32.mrf.mxu0
    %v3957 = vadd.f32 %v3796, %v3956
    %v3958 = vpop.f32.mrf.mxu0
    %3959 = vmatprep.mubr.bf16.mxu0 0
    %3960 = vmatmul.mubr.bf16.gmra.mxu0 %v3466
    %v3961 = vpop.f32.mrf.mxu0
    %v3962 = vadd.f32 %v3801, %v3961
    %v3963 = vpop.f32.mrf.mxu0
    %v3964 = vpop.f32.mrf.mxu0
    %v3965 = vadd.f32 %v3804, %v3964
    %v3966 = vpop.f32.mrf.mxu0
    %3967 = vmatprep.mubr.bf16.mxu0 0
    %3968 = vmatmul.mubr.bf16.gmra.mxu0 %v3469
    %v3969 = vpop.f32.mrf.mxu0
    %v3970 = vadd.f32 %v3809, %v3969
    %v3971 = vpop.f32.mrf.mxu0
    %v3972 = vpop.f32.mrf.mxu0
    %v3973 = vadd.f32 %v3812, %v3972
    %v3974 = vpop.f32.mrf.mxu0
    %3975 = vmatprep.mubr.bf16.mxu0 0
    %3976 = vmatmul.mubr.bf16.gmra.mxu0 %v3472
    %v3977 = vpop.f32.mrf.mxu0
    %v3978 = vadd.f32 %v3817, %v3977
    %v3979 = vpop.f32.mrf.mxu0
    %v3980 = vpop.f32.mrf.mxu0
    %v3981 = vadd.f32 %v3820, %v3980
    %v3982 = vpop.f32.mrf.mxu0
    %3983 = vmatprep.mubr.bf16.mxu0 0
    %3984 = vmatmul.mubr.bf16.gmra.mxu0 %v3475
    %v3985 = vpop.f32.mrf.mxu0
    %v3986 = vadd.f32 %v3825, %v3985
    %v3987 = vpop.f32.mrf.mxu0
    %v3988 = vpop.f32.mrf.mxu0
    %v3989 = vadd.f32 %v3828, %v3988
    %v3990 = vpop.f32.mrf.mxu0
    %3991 = vmatprep.mubr.bf16.mxu0 0
    %3992 = vmatmul.mubr.bf16.gmra.mxu0 %v3478
    %v3993 = vpop.f32.mrf.mxu0
    %v3994 = vadd.f32 %v3833, %v3993
    %v3995 = vpop.f32.mrf.mxu0
    %v3996 = vpop.f32.mrf.mxu0
    %v3997 = vadd.f32 %v3836, %v3996
    %v3998 = vpop.f32.mrf.mxu0
    %3999 = vdwg.mxu0
    %v4000 = vpack.c.bf16 %v3877, %v3874
    %v4001 = vpack.c.bf16 %v3885, %v3882
    %v4002 = vpack.c.bf16 %v3893, %v3890
    %v4003 = vpack.c.bf16 %v3901, %v3898
    %v4004 = vpack.c.bf16 %v3909, %v3906
    %v4005 = vpack.c.bf16 %v3917, %v3914
    %v4006 = vpack.c.bf16 %v3925, %v3922
    %v4007 = vpack.c.bf16 %v3933, %v3930
    %v4008 = vpack.c.bf16 %v3941, %v3938
    %v4009 = vpack.c.bf16 %v3949, %v3946
    %v4010 = vpack.c.bf16 %v3957, %v3954
    %v4011 = vpack.c.bf16 %v3965, %v3962
    %v4012 = vpack.c.bf16 %v3973, %v3970
    %v4013 = vpack.c.bf16 %v3981, %v3978
    %v4014 = vpack.c.bf16 %v3989, %v3986
    %v4015 = vpack.c.bf16 %v3997, %v3994
    %v4032 = vunpack.c.l.b16 %v4000
    %v4033 = vunpack.c.h.b16 %v4000
    %v4034 = vunpack.c.l.b16 %v4001
    %v4035 = vunpack.c.h.b16 %v4001
    %v4036 = vunpack.c.l.b16 %v4002
    %v4037 = vunpack.c.h.b16 %v4002
    %v4038 = vunpack.c.l.b16 %v4003
    %v4039 = vunpack.c.h.b16 %v4003
    %v4040 = vunpack.c.l.b16 %v4004
    %v4041 = vunpack.c.h.b16 %v4004
    %v4042 = vunpack.c.l.b16 %v4005
    %v4043 = vunpack.c.h.b16 %v4005
    %v4044 = vunpack.c.l.b16 %v4006
    %v4045 = vunpack.c.h.b16 %v4006
    %v4046 = vunpack.c.l.b16 %v4007
    %v4047 = vunpack.c.h.b16 %v4007
    %v4048 = vunpack.c.l.b16 %v4008
    %v4049 = vunpack.c.h.b16 %v4008
    %v4050 = vunpack.c.l.b16 %v4009
    %v4051 = vunpack.c.h.b16 %v4009
    %v4052 = vunpack.c.l.b16 %v4010
    %v4053 = vunpack.c.h.b16 %v4010
    %v4054 = vunpack.c.l.b16 %v4011
    %v4055 = vunpack.c.h.b16 %v4011
    %v4056 = vunpack.c.l.b16 %v4012
    %v4057 = vunpack.c.h.b16 %v4012
    %v4058 = vunpack.c.l.b16 %v4013
    %v4059 = vunpack.c.h.b16 %v4013
    %v4060 = vunpack.c.l.b16 %v4014
    %v4061 = vunpack.c.h.b16 %v4014
    %v4062 = vunpack.c.l.b16 %v4015
    %v4063 = vunpack.c.h.b16 %v4015
    %v4064 = vpack.c.b16 %v4032, %v4032
    %v4065 = vpack.c.b16 %v4033, %v4033
    %v4066 = vpack.c.b16 %v4034, %v4034
    %v4067 = vpack.c.b16 %v4035, %v4035
    %v4068 = vpack.c.b16 %v4036, %v4036
    %v4069 = vpack.c.b16 %v4037, %v4037
    %v4070 = vpack.c.b16 %v4038, %v4038
    %v4071 = vpack.c.b16 %v4039, %v4039
    %v4072 = vpack.c.b16 %v4040, %v4040
    %v4073 = vpack.c.b16 %v4041, %v4041
    %v4074 = vpack.c.b16 %v4042, %v4042
    %v4075 = vpack.c.b16 %v4043, %v4043
    %v4076 = vpack.c.b16 %v4044, %v4044
    %v4077 = vpack.c.b16 %v4045, %v4045
    %v4078 = vpack.c.b16 %v4046, %v4046
    %v4079 = vpack.c.b16 %v4047, %v4047
    %v4080 = vpack.c.b16 %v4048, %v4048
    %v4081 = vpack.c.b16 %v4049, %v4049
    %v4082 = vpack.c.b16 %v4050, %v4050
    %v4083 = vpack.c.b16 %v4051, %v4051
    %v4084 = vpack.c.b16 %v4052, %v4052
    %v4085 = vpack.c.b16 %v4053, %v4053
    %v4086 = vpack.c.b16 %v4054, %v4054
    %v4087 = vpack.c.b16 %v4055, %v4055
    %v4088 = vpack.c.b16 %v4056, %v4056
    %v4089 = vpack.c.b16 %v4057, %v4057
    %v4090 = vpack.c.b16 %v4058, %v4058
    %v4091 = vpack.c.b16 %v4059, %v4059
    %v4092 = vpack.c.b16 %v4060, %v4060
    %v4093 = vpack.c.b16 %v4061, %v4061
    %v4094 = vpack.c.b16 %v4062, %v4062
    %v4095 = vpack.c.b16 %v4063, %v4063
    %4128 = vst [vmem:[#allocation8] sm:$0xf] %v4064
    %4129 = vst [vmem:[#allocation8 + $0x4] sm:$0xf] %v4065
    %4130 = vst [vmem:[#allocation8 + $0x8] sm:$0xf] %v4066
    %4131 = vst [vmem:[#allocation8 + $0xc] sm:$0xf] %v4067
    %4132 = vst [vmem:[#allocation8 + $0x10] sm:$0xf] %v4068
    %4133 = vst [vmem:[#allocation8 + $0x14] sm:$0xf] %v4069
    %4134 = vst [vmem:[#allocation8 + $0x18] sm:$0xf] %v4070
    %4135 = vst [vmem:[#allocation8 + $0x1c] sm:$0xf] %v4071
    %4136 = vst [vmem:[#allocation8 + $0x20] sm:$0xf] %v4072
    %4137 = vst [vmem:[#allocation8 + $0x24] sm:$0xf] %v4073
    %4138 = vst [vmem:[#allocation8 + $0x28] sm:$0xf] %v4074
    %4139 = vst [vmem:[#allocation8 + $0x2c] sm:$0xf] %v4075
    %4140 = vst [vmem:[#allocation8 + $0x30] sm:$0xf] %v4076
    %4141 = vst [vmem:[#allocation8 + $0x34] sm:$0xf] %v4077
    %4142 = vst [vmem:[#allocation8 + $0x38] sm:$0xf] %v4078
    %4143 = vst [vmem:[#allocation8 + $0x3c] sm:$0xf] %v4079
    %4144 = vst [vmem:[#allocation8 + $0x40] sm:$0xf] %v4080
    %4145 = vst [vmem:[#allocation8 + $0x44] sm:$0xf] %v4081
    %4146 = vst [vmem:[#allocation8 + $0x48] sm:$0xf] %v4082
    %4147 = vst [vmem:[#allocation8 + $0x4c] sm:$0xf] %v4083
    %4148 = vst [vmem:[#allocation8 + $0x50] sm:$0xf] %v4084
    %4149 = vst [vmem:[#allocation8 + $0x54] sm:$0xf] %v4085
    %4150 = vst [vmem:[#allocation8 + $0x58] sm:$0xf] %v4086
    %4151 = vst [vmem:[#allocation8 + $0x5c] sm:$0xf] %v4087
    %4152 = vst [vmem:[#allocation8 + $0x60] sm:$0xf] %v4088
    %4153 = vst [vmem:[#allocation8 + $0x64] sm:$0xf] %v4089
    %4154 = vst [vmem:[#allocation8 + $0x68] sm:$0xf] %v4090
    %4155 = vst [vmem:[#allocation8 + $0x6c] sm:$0xf] %v4091
    %4156 = vst [vmem:[#allocation8 + $0x70] sm:$0xf] %v4092
    %4157 = vst [vmem:[#allocation8 + $0x74] sm:$0xf] %v4093
    %4158 = vst [vmem:[#allocation8 + $0x78] sm:$0xf] %v4094
    %4159 = vst [vmem:[#allocation8 + $0x7c] sm:$0xf] %v4095
    // Predicated region
    $region50: #{tpu_custom_call.1} parent=1 // pred_check
      _
    $region51: #{tpu_custom_call.1} parent=1 // pred_check_branch
      %4161 = sbr.rel (0) target = $region53
    $region52: #{tpu_custom_call.1} parent=1 // pred_region
      %s4163 = ssub.s32 2048, 2048
      %4164 = vsyncadd [#allocation4], %s4163
      %s4165 = sshll.u32 [#allocation8], 4
      %s4166 = int_to_ptr.vmem [resolvable:$true] %s4165
      %4171 = dma.vmem_to_hbm [thread:$0]  %s4166, 2048, %s9, [#allocation4], 64, 64, 4
    $region53: #{tpu_custom_call.1} parent=1 // pred_fallthru
      _
    // Predicated region
    $region54: #{tpu_custom_call.1} parent=1 // pred_check
      _
    $region55: #{tpu_custom_call.1} parent=1 // pred_check_branch
      %4173 = sbr.rel (0) target = $region57
    $region56: #{tpu_custom_call.1} parent=1 // pred_region
      %4174 = dma.done [#allocation4], 2048
    $region57: #{tpu_custom_call.1} parent=1 // pred_fallthru
      _
    %4175 = vsyncpa [#allocation3], 1
    %4176 = vsyncpa [#allocation6], 1
    %4177 = vsyncpa [#allocation4], 1

</llo_original>
